<compile_context>
chip_gen: v5e
topology: v5e:2x2
jax: 0.10.0
libtpu: 0.0.40
codegen_flags: <defaults>
</compile_context>

<pallas_src>
import functools
import math

import numpy as np
import jax
import jax.numpy as jnp
from jax import lax
from jax.experimental import pallas as pl
from jax.experimental.pallas import tpu as pltpu


def _round_up(x, m):
    return ((x + m - 1) // m) * m


# ---------------------------------------------------------------------------
# Host-side (numpy) constant builders — run once per parameter set, NOT traced.
# ---------------------------------------------------------------------------
def _build_unconv_super(w0, W, Wo, HALF):
    """8x8 / pad=1 conv folded with the 2x2 unpool, as per-tap matrices over the
    quarter-packed pooled super-rows.

    Input super-row (pooled row i) lane (2*di+dj)*w*Cin + j*Cin + ci  holds the
    unpooled value at full-res (row 2i+di, col 2j+dj, ci).
    Output super-row t' lane po*HALF + ox*Cout + co holds the conv output at
    (row 2t'+po, col ox, co)."""
    KH, KW, Cin, Cout = w0.shape
    wcol = W // 2
    L0 = _round_up(4 * wcol * Cin, 128)
    L1 = 2 * HALF
    taps = (KH - 1) // 2 + 2
    V = np.zeros((taps, L0, L1), np.float32)
    for s in range(taps):
        for di in range(2):
            for po in range(2):
                kr = 2 * s - 1 + di - po
                if not (0 <= kr < KH):
                    continue
                for dj in range(2):
                    for j in range(wcol):
                        jx = 2 * j + dj
                        row = (2 * di + dj) * wcol * Cin + j * Cin
                        for ox in range(Wo):
                            kc = jx - ox + 1                  # padding = 1
                            if not (0 <= kc < KW):
                                continue
                            col = po * HALF + ox * Cout
                            V[s, row:row + Cin, col:col + Cout] = w0[kr, kc]
    return V


def _build_conv3_super(wk, Wo, HALF):
    """3x3 / pad=1 conv as per-tap matrices over super-rows (2 rows / slab row)."""
    KH, KW, Cin, Cout = wk.shape
    L1 = 2 * HALF
    taps = (KH - 1) // 2 + 2
    V = np.zeros((taps, L1, L1), np.float32)
    for s in range(taps):
        for p in range(2):            # input-row parity within its super-row
            for po in range(2):       # output-row parity
                kr = 2 * s - 1 + p - po
                if not (0 <= kr < KH):
                    continue
                for jx in range(Wo):
                    row = p * HALF + jx * Cin
                    for ox in range(Wo):
                        kc = jx - ox + 1                      # padding = 1
                        if not (0 <= kc < KW):
                            continue
                        col = po * HALF + ox * Cout
                        V[s, row:row + Cin, col:col + Cout] = wk[kr, kc]
    return V


def _build_bias_row(b, Wo, HALF):
    C = b.shape[0]
    r = np.zeros((1, 2 * HALF), np.float32)
    for po in range(2):
        for ox in range(Wo):
            r[0, po * HALF + ox * C: po * HALF + ox * C + C] = b
    return r


def _build_channel_select(C, Wo, HALF, Cp):
    """(L1, Cp) 0/1 matrix: valid lane -> its channel (for BN statistics)."""
    sel = np.zeros((2 * HALF, Cp), np.float32)
    for po in range(2):
        for ox in range(Wo):
            for c in range(C):
                sel[po * HALF + ox * C + c, c] = 1.0
    return sel


def _build_stage_mask(n_rows, stride, N, Ho_sup, Ho, WoC, HALF):
    """1.0 at valid output positions of the stacked Toeplitz result, else 0
    (zeros cross-image garbage rows, the odd junk row and the lane padding)."""
    m = np.zeros((n_rows, 2 * HALF), np.float32)
    for n in range(N):
        for t in range(Ho_sup):
            r = n * stride + t
            if r >= n_rows:
                continue
            if 2 * t < Ho:
                m[r, 0:WoC] = 1.0
            if 2 * t + 1 < Ho:
                m[r, HALF:HALF + WoC] = 1.0
    return m


def _build_unpool_targets(N, h, w, C, W):
    """Per-quarter flat output indices as produced by MaxPool2d(2,2)."""
    i = np.arange(h).reshape(h, 1, 1)
    j = np.arange(w).reshape(1, w, 1)
    c = np.zeros((1, 1, C), np.int64)
    tg = np.zeros((4, h, w, C), np.int64)
    for di in range(2):
        for dj in range(2):
            tg[2 * di + dj] = (2 * i + di) * W + (2 * j + dj) + c
    tg = np.broadcast_to(tg.reshape(4, 1, h, w * C), (4, N, h, w * C))
    return np.ascontiguousarray(tg.reshape(4, N * h, w * C)).astype(np.int32)


# ---------------------------------------------------------------------------
# One-time preparation: repack weights / build layout constants (host numpy).
# ---------------------------------------------------------------------------
def prepare_up_block(params, x_shape, out_size, mxu_dtype=jnp.bfloat16, eps=1e-5):
    N, h, w, C = x_shape
    H, W = out_size
    assert H == 2 * h and W == 2 * w, "output_size must be 2x the pooled size"
    w0 = np.asarray(params["unconv_w"], np.float32)
    w1 = np.asarray(params["conv1_w"], np.float32)
    w2 = np.asarray(params["conv2_w"], np.float32)
    KH0, KW0, Cin0, Cout = w0.shape
    assert Cin0 == C and Cout == C     # module only type-checks when channels match

    Ho = H + 2 - KH0 + 1               # spatial size after the 8x8 / pad=1 unconv
    Wo = W + 2 - KW0 + 1
    Ho_sup = (Ho + 1) // 2             # super-rows (2 output rows per slab row)
    HALF = _round_up(Wo * C, 128)      # one output row, zero-padded to 128 lanes
    L1 = 2 * HALF                      # lane width of all conv-stage slabs
    L0 = _round_up(4 * w * C, 128)     # lane width of the quarter-packed unpool slab
    Cp = _round_up(C, 128)
    R0 = h + 2                         # rows per image in the unpool slab (pad+h+pad)
    R1 = Ho_sup + 2                    # rows per image in the conv-stage slabs
    taps0 = (KH0 - 1) // 2 + 2         # pooled-row taps of the unpool-fused unconv
    M0 = N * R0 - taps0 + 1
    M1 = N * R1 - 3 + 1

    gamma = np.zeros((1, Cp), np.float32)
    beta = np.zeros((1, Cp), np.float32)
    gamma[0, :C] = np.asarray(params["bn_gamma"], np.float32)
    beta[0, :C] = np.asarray(params["bn_beta"], np.float32)
    sel = _build_channel_select(C, Wo, HALF, Cp)

    consts = dict(
        tgt=jnp.asarray(_build_unpool_targets(N, h, w, C, W)),
        v0=jnp.asarray(_build_unconv_super(w0, W, Wo, HALF), mxu_dtype),
        v1=jnp.asarray(_build_conv3_super(w1, Wo, HALF), mxu_dtype),
        v2=jnp.asarray(_build_conv3_super(w2, Wo, HALF), mxu_dtype),
        b0=jnp.asarray(_build_bias_row(np.asarray(params["unconv_b"], np.float32), Wo, HALF)),
        b1=jnp.asarray(_build_bias_row(np.asarray(params["conv1_b"], np.float32), Wo, HALF)),
        b2=jnp.asarray(_build_bias_row(np.asarray(params["conv2_b"], np.float32), Wo, HALF)),
        sel=jnp.asarray(sel),
        selt=jnp.asarray(np.ascontiguousarray(sel.T)),
        mask0=jnp.asarray(_build_stage_mask(M0, R0, N, Ho_sup, Ho, Wo * C, HALF)),
        mask1=jnp.asarray(_build_stage_mask(M1, R1, N, Ho_sup, Ho, Wo * C, HALF)),
        gamma=jnp.asarray(gamma),
        beta=jnp.asarray(beta),
    )
    meta = dict(N=N, h=h, w=w, C=C, W=W, Ho=Ho, Wo=Wo, Ho_sup=Ho_sup,
                HALF=HALF, L0=L0, L1=L1, R0=R0, R1=R1, taps0=taps0,
                M0=M0, M1=M1, eps=eps, mxu_dtype=mxu_dtype)
    return consts, meta


# ---------------------------------------------------------------------------
# The fused kernel: unpool -> unconv -> conv1+BN+ReLU -> conv2+BN+ReLU.
# ---------------------------------------------------------------------------
def _up_block_kernel(x_ref, idx_ref, tgt_ref, v0_ref, v1_ref, v2_ref,
                     b0_ref, b1_ref, b2_ref, sel_ref, selt_ref,
                     mask0_ref, mask1_ref, gamma_ref, beta_ref,
                     out_ref, s0_ref, s1_ref, s2_ref, *, meta):
    f32 = jnp.float32
    N, h, w, C = meta["N"], meta["h"], meta["w"], meta["C"]
    L0, L1 = meta["L0"], meta["L1"]
    R0, R1 = meta["R0"], meta["R1"]
    Ho_sup = meta["Ho_sup"]
    mxu = meta["mxu_dtype"]
    inv_count = 1.0 / float(N * meta["Ho"] * meta["Wo"])

    # ---- MaxUnpool2d(2,2): quarter-packed pooled super-rows -> S0 ----------
    # (assumes MaxPool2d(2,2)-consistent indices: each value stays in its cell)
    x = x_ref[...]
    idx = idx_ref[...]
    quarters = [jnp.where(idx == tgt_ref[k], x, 0.0) for k in range(4)]
    q = jnp.concatenate(quarters, axis=1)                 # (N*h, 4*w*C) lane-dense
    if L0 > 4 * w * C:
        q = jnp.concatenate(
            [q, jnp.zeros((N * h, L0 - 4 * w * C), q.dtype)], axis=1)
    zrow0 = jnp.zeros((1, L0), f32)
    for n in range(N):          # only the 2 pad rows + one contiguous block/image
        base = n * R0
        s0_ref[pl.ds(base, 1), :] = zrow0
        s0_ref[pl.ds(base + 1 + h, 1), :] = zrow0
        s0_ref[pl.ds(base + 1, h), :] = q[n * h:(n + 1) * h, :]

    # ---- one batched row-Toeplitz bf16 matmul per kernel-row tap -----------
    def toeplitz(src_ref, v_ref, taps, m_rows):
        acc = jnp.zeros((m_rows, L1), f32)
        for s in range(taps):
            acc = acc + jnp.dot(src_ref[pl.ds(s, m_rows), :].astype(mxu),
                                v_ref[s], preferred_element_type=f32)
        return acc

    # ---- training-mode BatchNorm (centered variance) + ReLU epilogue -------
    def bn_relu(y, mask):
        row_sum = jnp.sum(y, axis=0, keepdims=True)                    # (1, L1)
        mean_c = jnp.dot(row_sum, sel_ref[...],
                         preferred_element_type=f32) * inv_count       # (1, Cp)
        mean_l = jnp.dot(mean_c, selt_ref[...], preferred_element_type=f32)
        d = y - mean_l
        ssq = jnp.sum(d * d * mask, axis=0, keepdims=True)
        var_c = jnp.dot(ssq, sel_ref[...],
                        preferred_element_type=f32) * inv_count
        scale_c = gamma_ref[...] * lax.rsqrt(var_c + meta["eps"])
        shift_c = beta_ref[...] - mean_c * scale_c
        scale_l = jnp.dot(scale_c, selt_ref[...], preferred_element_type=f32)
        shift_l = jnp.dot(shift_c, selt_ref[...], preferred_element_type=f32)
        return jnp.maximum(y * scale_l + shift_l, 0.0)

    # ---- copy valid super-rows of a stacked result into the next padded slab
    def to_slab(dst_ref, y, src_stride):
        zrow = jnp.zeros((1, L1), f32)
        for n in range(N):
            dst_ref[pl.ds(n * R1, 1), :] = zrow
            dst_ref[pl.ds(n * R1 + 1 + Ho_sup, 1), :] = zrow
            dst_ref[pl.ds(n * R1 + 1, Ho_sup), :] = \
                y[n * src_stride:n * src_stride + Ho_sup, :]

    mask1 = mask1_ref[...]

    # unconv (8x8, pad=1) fused with the unpool, + bias.
    y0 = toeplitz(s0_ref, v0_ref, meta["taps0"], meta["M0"])
    y0 = (y0 + b0_ref[...]) * mask0_ref[...]
    to_slab(s1_ref, y0, R0)

    # conv1 (3x3, pad=1) + bias + BN + ReLU.
    y1 = toeplitz(s1_ref, v1_ref, 3, meta["M1"])
    y1 = (y1 + b1_ref[...]) * mask1
    y1 = bn_relu(y1, mask1) * mask1
    to_slab(s2_ref, y1, R1)

    # conv2 (3x3, pad=1) + bias + BN + ReLU -> output (padding sliced outside).
    y2 = toeplitz(s2_ref, v2_ref, 3, meta["M1"])
    y2 = (y2 + b2_ref[...]) * mask1
    y2 = bn_relu(y2, mask1)
    for n in range(N):
        out_ref[pl.ds(n * Ho_sup, Ho_sup), :] = \
            y2[n * R1:n * R1 + Ho_sup, :].astype(out_ref.dtype)


# ---------------------------------------------------------------------------
# JIT-able forward.  `meta` must be a Python-level (static / closed-over) dict.
# ---------------------------------------------------------------------------
def up_block_forward(meta, consts, x, indices):
    N, h, w, C = x.shape
    x2 = x.reshape(N * h, w * C).astype(jnp.float32)        # free row-major reshape
    idx2 = indices.reshape(N * h, w * C).astype(jnp.int32)
    kernel = functools.partial(_up_block_kernel, meta=meta)
    out = pl.pallas_call(
        kernel,
        out_shape=jax.ShapeDtypeStruct((N * meta["Ho_sup"], meta["L1"]),
                                       jnp.float32),
        scratch_shapes=[
            pltpu.VMEM((N * meta["R0"], meta["L0"]), jnp.float32),   # unpool slab
            pltpu.VMEM((N * meta["R1"], meta["L1"]), jnp.float32),   # unconv slab
            pltpu.VMEM((N * meta["R1"], meta["L1"]), jnp.float32),   # conv1 slab
        ],
    )(x2, idx2, consts["tgt"], consts["v0"], consts["v1"], consts["v2"],
      consts["b0"], consts["b1"], consts["b2"], consts["sel"], consts["selt"],
      consts["mask0"], consts["mask1"], consts["gamma"], consts["beta"])
    # (N*Ho_sup, 2*HALF) -> (N, 2*Ho_sup, HALF) is a pure row-major reshape;
    # slice off the lane / row padding and restore NHWC.
    full = out.reshape(N, 2 * meta["Ho_sup"], meta["HALF"])
    y = full[:, :meta["Ho"], :meta["Wo"] * C]
    return y.reshape(N, meta["Ho"], meta["Wo"], C)


# ---------------------------------------------------------------------------
# Pure-JAX reference (for the correctness check).
# ---------------------------------------------------------------------------
def ref_forward(params, x, indices, out_size, eps=1e-5):
    N, h, w, C = x.shape
    H, W = out_size
    flat = jnp.zeros((N, C, H * W), x.dtype)
    n_idx = jnp.arange(N)[:, None, None]
    c_idx = jnp.arange(C)[None, :, None]
    xi = jnp.transpose(x, (0, 3, 1, 2)).reshape(N, C, h * w)
    ii = jnp.transpose(indices, (0, 3, 1, 2)).reshape(N, C, h * w)
    up = flat.at[n_idx, c_idx, ii].set(xi).reshape(N, C, H, W).transpose(0, 2, 3, 1)

    def conv(xx, ww, bb, pad):
        return lax.conv_general_dilated(
            xx, ww, window_strides=(1, 1),
            padding=((pad, pad), (pad, pad)),
            dimension_numbers=("NHWC", "HWIO", "NHWC"),
            preferred_element_type=jnp.float32) + bb

    def bn_relu(xx, g, b):
        m = jnp.mean(xx, axis=(0, 1, 2), keepdims=True)
        v = jnp.mean((xx - m) ** 2, axis=(0, 1, 2), keepdims=True)
        return jnp.maximum((xx - m) * lax.rsqrt(v + eps) * g + b, 0.0)

    y = conv(up, params["unconv_w"], params["unconv_b"], 1)
    y = conv(y, params["conv1_w"], params["conv1_b"], 1)
    y = bn_relu(y, params["bn_gamma"], params["bn_beta"])
    y = conv(y, params["conv2_w"], params["conv2_b"], 1)
    y = bn_relu(y, params["bn_gamma"], params["bn_beta"])
    return y


if __name__ == "__main__":
    # channels = (4, 4) — the original module requires channels[0] == channels[1]
    N, C = 2, 4
    h, w = 8, 8            # pooled input spatial size
    H, W = 16, 16          # output_size of the MaxUnpool

    key = jax.random.PRNGKey(0)
    (kx, kdi, kdj, kw0, kb0, kw1, kb1, kw2, kb2, kg, kb) = jax.random.split(key, 11)

    x = jax.random.normal(kx, (N, h, w, C), jnp.float32)
    # indices consistent with MaxPool2d(2,2): one position per 2x2 cell.
    di = jax.random.randint(kdi, (N, h, w, C), 0, 2)
    dj = jax.random.randint(kdj, (N, h, w, C), 0, 2)
    i_grid = jnp.arange(h).reshape(1, h, 1, 1)
    j_grid = jnp.arange(w).reshape(1, 1, w, 1)
    indices = ((2 * i_grid + di) * W + (2 * j_grid + dj)).astype(jnp.int32)

    # deterministic parameter init (module re-inits conv weights ~ N(0, sqrt(2/n)))
    def conv_params(kw_key, kb_key, kh, kwid, cin, cout):
        std = math.sqrt(2.0 / (kh * kwid * cout))
        wgt = std * jax.random.normal(kw_key, (kh, kwid, cin, cout), jnp.float32)
        bound = 1.0 / math.sqrt(kh * kwid * cin)
        bias = jax.random.uniform(kb_key, (cout,), jnp.float32, -bound, bound)
        return wgt, bias

    unconv_w, unconv_b = conv_params(kw0, kb0, 8, 8, C, C)
    conv1_w, conv1_b = conv_params(kw1, kb1, 3, 3, C, C)
    conv2_w, conv2_b = conv_params(kw2, kb2, 3, 3, C, C)
    params = dict(
        unconv_w=unconv_w, unconv_b=unconv_b,
        conv1_w=conv1_w, conv1_b=conv1_b,
        conv2_w=conv2_w, conv2_b=conv2_b,
        bn_gamma=1.0 + 0.1 * jax.random.normal(kg, (C,), jnp.float32),
        bn_beta=0.1 * jax.random.normal(kb, (C,), jnp.float32),
    )

    consts, meta = prepare_up_block(params, x.shape, (H, W))
    fwd = jax.jit(lambda c, xx, ii: up_block_forward(meta, c, xx, ii))
    out = jax.block_until_ready(fwd(consts, x, indices))
    ref = jax.block_until_ready(ref_forward(params, x, indices, (H, W)))

    assert out.shape == ref.shape == (N, meta["Ho"], meta["Wo"], C), (out.shape, ref.shape)
    assert bool(jnp.all(jnp.isfinite(out)))
    err = float(jnp.max(jnp.abs(out - ref)))
    # bf16 MXU operands (f32 accumulate) vs. the all-f32 XLA reference.
    assert jnp.allclose(out, ref, atol=5e-2, rtol=5e-2), err
    print("KERNEL_OK")
</pallas_src>

<mosaic_0001>
module attributes {stable_mosaic.version = 11 : i64} {
  func.func @_up_block_kernel(%arg0: memref<16x32xf32, #tpu.memory_space<vmem>>, %arg1: memref<16x32xi32, #tpu.memory_space<vmem>>, %arg2: memref<4x16x32xi32, #tpu.memory_space<vmem>>, %arg3: memref<5x128x256xbf16, #tpu.memory_space<vmem>>, %arg4: memref<3x256x256xbf16, #tpu.memory_space<vmem>>, %arg5: memref<3x256x256xbf16, #tpu.memory_space<vmem>>, %arg6: memref<1x256xf32, #tpu.memory_space<vmem>>, %arg7: memref<1x256xf32, #tpu.memory_space<vmem>>, %arg8: memref<1x256xf32, #tpu.memory_space<vmem>>, %arg9: memref<256x128xf32, #tpu.memory_space<vmem>>, %arg10: memref<128x256xf32, #tpu.memory_space<vmem>>, %arg11: memref<16x256xf32, #tpu.memory_space<vmem>>, %arg12: memref<14x256xf32, #tpu.memory_space<vmem>>, %arg13: memref<1x128xf32, #tpu.memory_space<vmem>>, %arg14: memref<1x128xf32, #tpu.memory_space<vmem>>, %arg15: memref<12x256xf32, #tpu.memory_space<vmem>>, %arg16: memref<20x128xf32, #tpu.memory_space<vmem>>, %arg17: memref<16x256xf32, #tpu.memory_space<vmem>>, %arg18: memref<16x256xf32, #tpu.memory_space<vmem>>) attributes {dimension_semantics = [], scalar_prefetch = 0 : i64, scratch_operands = 3 : i64, tpu.core_type = #tpu.core_type<tc>} {
    %c0 = arith.constant 0 : index
    %c0_0 = arith.constant 0 : index
    %0 = vector.load %arg0[%c0, %c0_0] : memref<16x32xf32, #tpu.memory_space<vmem>>, vector<16x32xf32>
    %c0_1 = arith.constant 0 : index
    %c0_2 = arith.constant 0 : index
    %1 = vector.load %arg1[%c0_1, %c0_2] : memref<16x32xi32, #tpu.memory_space<vmem>>, vector<16x32xi32>
    %c0_3 = arith.constant 0 : index
    %c0_4 = arith.constant 0 : index
    %c0_5 = arith.constant 0 : index
    %2 = vector.load %arg2[%c0_3, %c0_4, %c0_5] : memref<4x16x32xi32, #tpu.memory_space<vmem>>, vector<1x16x32xi32>
    %3 = vector.shape_cast %2 : vector<1x16x32xi32> to vector<16x32xi32>
    %4 = arith.cmpi eq, %1, %3 : vector<16x32xi32>
    %cst = arith.constant 0.000000e+00 : f32
    %5 = vector.broadcast %cst : f32 to vector<16x32xf32>
    %6 = arith.select %4, %0, %5 : vector<16x32xi1>, vector<16x32xf32>
    %c1 = arith.constant 1 : index
    %c0_6 = arith.constant 0 : index
    %c0_7 = arith.constant 0 : index
    %7 = vector.load %arg2[%c1, %c0_6, %c0_7] : memref<4x16x32xi32, #tpu.memory_space<vmem>>, vector<1x16x32xi32>
    %8 = vector.shape_cast %7 : vector<1x16x32xi32> to vector<16x32xi32>
    %9 = arith.cmpi eq, %1, %8 : vector<16x32xi32>
    %cst_8 = arith.constant 0.000000e+00 : f32
    %10 = vector.broadcast %cst_8 : f32 to vector<16x32xf32>
    %11 = arith.select %9, %0, %10 : vector<16x32xi1>, vector<16x32xf32>
    %c2 = arith.constant 2 : index
    %c0_9 = arith.constant 0 : index
    %c0_10 = arith.constant 0 : index
    %12 = vector.load %arg2[%c2, %c0_9, %c0_10] : memref<4x16x32xi32, #tpu.memory_space<vmem>>, vector<1x16x32xi32>
    %13 = vector.shape_cast %12 : vector<1x16x32xi32> to vector<16x32xi32>
    %14 = arith.cmpi eq, %1, %13 : vector<16x32xi32>
    %cst_11 = arith.constant 0.000000e+00 : f32
    %15 = vector.broadcast %cst_11 : f32 to vector<16x32xf32>
    %16 = arith.select %14, %0, %15 : vector<16x32xi1>, vector<16x32xf32>
    %c3 = arith.constant 3 : index
    %c0_12 = arith.constant 0 : index
    %c0_13 = arith.constant 0 : index
    %17 = vector.load %arg2[%c3, %c0_12, %c0_13] : memref<4x16x32xi32, #tpu.memory_space<vmem>>, vector<1x16x32xi32>
    %18 = vector.shape_cast %17 : vector<1x16x32xi32> to vector<16x32xi32>
    %19 = arith.cmpi eq, %1, %18 : vector<16x32xi32>
    %cst_14 = arith.constant 0.000000e+00 : f32
    %20 = vector.broadcast %cst_14 : f32 to vector<16x32xf32>
    %21 = arith.select %19, %0, %20 : vector<16x32xi1>, vector<16x32xf32>
    %22 = tpu.concatenate %6, %11, %16, %21 in 1 : vector<16x32xf32>, vector<16x32xf32>, vector<16x32xf32>, vector<16x32xf32> -> vector<16x128xf32>
    %cst_15 = arith.constant 0.000000e+00 : f32
    %23 = vector.broadcast %cst_15 : f32 to vector<1x128xf32>
    %c0_16 = arith.constant 0 : index
    %c0_17 = arith.constant 0 : index
    %24 = vector.load %arg16[%c0_16, %c0_17] : memref<20x128xf32, #tpu.memory_space<vmem>>, vector<1x128xf32>
    tpu.vector_store %arg16[%c0_16, %c0_17], %23 {strides = array<i32>} : memref<20x128xf32, #tpu.memory_space<vmem>>, vector<1x128xf32>,
    %c9 = arith.constant 9 : index
    %c0_18 = arith.constant 0 : index
    %25 = vector.load %arg16[%c9, %c0_18] : memref<20x128xf32, #tpu.memory_space<vmem>>, vector<1x128xf32>
    tpu.vector_store %arg16[%c9, %c0_18], %23 {strides = array<i32>} : memref<20x128xf32, #tpu.memory_space<vmem>>, vector<1x128xf32>,
    %26 = vector.extract_strided_slice %22 {offsets = [0, 0], sizes = [8, 128], strides = [1, 1]} : vector<16x128xf32> to vector<8x128xf32>
    %c1_19 = arith.constant 1 : index
    %c0_20 = arith.constant 0 : index
    %27 = vector.load %arg16[%c1_19, %c0_20] : memref<20x128xf32, #tpu.memory_space<vmem>>, vector<8x128xf32>
    tpu.vector_store %arg16[%c1_19, %c0_20], %26 {strides = array<i32>} : memref<20x128xf32, #tpu.memory_space<vmem>>, vector<8x128xf32>,
    %c10 = arith.constant 10 : index
    %c0_21 = arith.constant 0 : index
    %28 = vector.load %arg16[%c10, %c0_21] : memref<20x128xf32, #tpu.memory_space<vmem>>, vector<1x128xf32>
    tpu.vector_store %arg16[%c10, %c0_21], %23 {strides = array<i32>} : memref<20x128xf32, #tpu.memory_space<vmem>>, vector<1x128xf32>,
    %c19 = arith.constant 19 : index
    %c0_22 = arith.constant 0 : index
    %29 = vector.load %arg16[%c19, %c0_22] : memref<20x128xf32, #tpu.memory_space<vmem>>, vector<1x128xf32>
    tpu.vector_store %arg16[%c19, %c0_22], %23 {strides = array<i32>} : memref<20x128xf32, #tpu.memory_space<vmem>>, vector<1x128xf32>,
    %30 = vector.extract_strided_slice %22 {offsets = [8, 0], sizes = [8, 128], strides = [1, 1]} : vector<16x128xf32> to vector<8x128xf32>
    %c11 = arith.constant 11 : index
    %c0_23 = arith.constant 0 : index
    %31 = vector.load %arg16[%c11, %c0_23] : memref<20x128xf32, #tpu.memory_space<vmem>>, vector<8x128xf32>
    tpu.vector_store %arg16[%c11, %c0_23], %30 {strides = array<i32>} : memref<20x128xf32, #tpu.memory_space<vmem>>, vector<8x128xf32>,
    %c0_24 = arith.constant 0 : index
    %c0_25 = arith.constant 0 : index
    %32 = vector.load %arg12[%c0_24, %c0_25] : memref<14x256xf32, #tpu.memory_space<vmem>>, vector<14x256xf32>
    %cst_26 = arith.constant 0.000000e+00 : f32
    %33 = vector.broadcast %cst_26 : f32 to vector<16x256xf32>
    %c0_27 = arith.constant 0 : index
    %c0_28 = arith.constant 0 : index
    %34 = vector.load %arg16[%c0_27, %c0_28] : memref<20x128xf32, #tpu.memory_space<vmem>>, vector<16x128xf32>
    %35 = arith.truncf %34 : vector<16x128xf32> to vector<16x128xbf16>
    %c0_29 = arith.constant 0 : index
    %c0_30 = arith.constant 0 : index
    %c0_31 = arith.constant 0 : index
    %36 = vector.load %arg3[%c0_29, %c0_30, %c0_31] : memref<5x128x256xbf16, #tpu.memory_space<vmem>>, vector<1x128x256xbf16>
    %37 = vector.shape_cast %36 : vector<1x128x256xbf16> to vector<128x256xbf16>
    %cst_32 = arith.constant dense<0.000000e+00> : vector<16x256xf32>
    %38 = tpu.matmul %35, %37, %cst_32 {dimension_numbers = #tpu.dot_dimension_numbers<[1], [0], [0], [1], [0, 0, 1, 1], [], []>} : vector<16x128xbf16>, vector<128x256xbf16>, vector<16x256xf32> -> vector<16x256xf32>
    %39 = arith.addf %33, %38 : vector<16x256xf32>
    %c1_33 = arith.constant 1 : index
    %c0_34 = arith.constant 0 : index
    %40 = vector.load %arg16[%c1_33, %c0_34] : memref<20x128xf32, #tpu.memory_space<vmem>>, vector<16x128xf32>
    %41 = arith.truncf %40 : vector<16x128xf32> to vector<16x128xbf16>
    %c1_35 = arith.constant 1 : index
    %c0_36 = arith.constant 0 : index
    %c0_37 = arith.constant 0 : index
    %42 = vector.load %arg3[%c1_35, %c0_36, %c0_37] : memref<5x128x256xbf16, #tpu.memory_space<vmem>>, vector<1x128x256xbf16>
    %43 = vector.shape_cast %42 : vector<1x128x256xbf16> to vector<128x256xbf16>
    %cst_38 = arith.constant dense<0.000000e+00> : vector<16x256xf32>
    %44 = tpu.matmul %41, %43, %cst_38 {dimension_numbers = #tpu.dot_dimension_numbers<[1], [0], [0], [1], [0, 0, 1, 1], [], []>} : vector<16x128xbf16>, vector<128x256xbf16>, vector<16x256xf32> -> vector<16x256xf32>
    %45 = arith.addf %39, %44 : vector<16x256xf32>
    %c2_39 = arith.constant 2 : index
    %c0_40 = arith.constant 0 : index
    %46 = vector.load %arg16[%c2_39, %c0_40] : memref<20x128xf32, #tpu.memory_space<vmem>>, vector<16x128xf32>
    %47 = arith.truncf %46 : vector<16x128xf32> to vector<16x128xbf16>
    %c2_41 = arith.constant 2 : index
    %c0_42 = arith.constant 0 : index
    %c0_43 = arith.constant 0 : index
    %48 = vector.load %arg3[%c2_41, %c0_42, %c0_43] : memref<5x128x256xbf16, #tpu.memory_space<vmem>>, vector<1x128x256xbf16>
    %49 = vector.shape_cast %48 : vector<1x128x256xbf16> to vector<128x256xbf16>
    %cst_44 = arith.constant dense<0.000000e+00> : vector<16x256xf32>
    %50 = tpu.matmul %47, %49, %cst_44 {dimension_numbers = #tpu.dot_dimension_numbers<[1], [0], [0], [1], [0, 0, 1, 1], [], []>} : vector<16x128xbf16>, vector<128x256xbf16>, vector<16x256xf32> -> vector<16x256xf32>
    %51 = arith.addf %45, %50 : vector<16x256xf32>
    %c3_45 = arith.constant 3 : index
    %c0_46 = arith.constant 0 : index
    %52 = vector.load %arg16[%c3_45, %c0_46] : memref<20x128xf32, #tpu.memory_space<vmem>>, vector<16x128xf32>
    %53 = arith.truncf %52 : vector<16x128xf32> to vector<16x128xbf16>
    %c3_47 = arith.constant 3 : index
    %c0_48 = arith.constant 0 : index
    %c0_49 = arith.constant 0 : index
    %54 = vector.load %arg3[%c3_47, %c0_48, %c0_49] : memref<5x128x256xbf16, #tpu.memory_space<vmem>>, vector<1x128x256xbf16>
    %55 = vector.shape_cast %54 : vector<1x128x256xbf16> to vector<128x256xbf16>
    %cst_50 = arith.constant dense<0.000000e+00> : vector<16x256xf32>
    %56 = tpu.matmul %53, %55, %cst_50 {dimension_numbers = #tpu.dot_dimension_numbers<[1], [0], [0], [1], [0, 0, 1, 1], [], []>} : vector<16x128xbf16>, vector<128x256xbf16>, vector<16x256xf32> -> vector<16x256xf32>
    %57 = arith.addf %51, %56 : vector<16x256xf32>
    %c4 = arith.constant 4 : index
    %c0_51 = arith.constant 0 : index
    %58 = vector.load %arg16[%c4, %c0_51] : memref<20x128xf32, #tpu.memory_space<vmem>>, vector<16x128xf32>
    %59 = arith.truncf %58 : vector<16x128xf32> to vector<16x128xbf16>
    %c4_52 = arith.constant 4 : index
    %c0_53 = arith.constant 0 : index
    %c0_54 = arith.constant 0 : index
    %60 = vector.load %arg3[%c4_52, %c0_53, %c0_54] : memref<5x128x256xbf16, #tpu.memory_space<vmem>>, vector<1x128x256xbf16>
    %61 = vector.shape_cast %60 : vector<1x128x256xbf16> to vector<128x256xbf16>
    %cst_55 = arith.constant dense<0.000000e+00> : vector<16x256xf32>
    %62 = tpu.matmul %59, %61, %cst_55 {dimension_numbers = #tpu.dot_dimension_numbers<[1], [0], [0], [1], [0, 0, 1, 1], [], []>} : vector<16x128xbf16>, vector<128x256xbf16>, vector<16x256xf32> -> vector<16x256xf32>
    %63 = arith.addf %57, %62 : vector<16x256xf32>
    %c0_56 = arith.constant 0 : index
    %c0_57 = arith.constant 0 : index
    %64 = vector.load %arg6[%c0_56, %c0_57] : memref<1x256xf32, #tpu.memory_space<vmem>>, vector<1x256xf32>
    %65 = vector.broadcast %64 : vector<1x256xf32> to vector<16x256xf32>
    %66 = arith.addf %63, %65 : vector<16x256xf32>
    %c0_58 = arith.constant 0 : index
    %c0_59 = arith.constant 0 : index
    %67 = vector.load %arg11[%c0_58, %c0_59] : memref<16x256xf32, #tpu.memory_space<vmem>>, vector<16x256xf32>
    %68 = arith.mulf %66, %67 : vector<16x256xf32>
    %cst_60 = arith.constant 0.000000e+00 : f32
    %69 = vector.broadcast %cst_60 : f32 to vector<1x256xf32>
    %c0_61 = arith.constant 0 : index
    %c0_62 = arith.constant 0 : index
    %70 = vector.load %arg17[%c0_61, %c0_62] : memref<16x256xf32, #tpu.memory_space<vmem>>, vector<1x256xf32>
    tpu.vector_store %arg17[%c0_61, %c0_62], %69 {strides = array<i32>} : memref<16x256xf32, #tpu.memory_space<vmem>>, vector<1x256xf32>,
    %c7 = arith.constant 7 : index
    %c0_63 = arith.constant 0 : index
    %71 = vector.load %arg17[%c7, %c0_63] : memref<16x256xf32, #tpu.memory_space<vmem>>, vector<1x256xf32>
    tpu.vector_store %arg17[%c7, %c0_63], %69 {strides = array<i32>} : memref<16x256xf32, #tpu.memory_space<vmem>>, vector<1x256xf32>,
    %72 = vector.extract_strided_slice %68 {offsets = [0, 0], sizes = [6, 256], strides = [1, 1]} : vector<16x256xf32> to vector<6x256xf32>
    %c1_64 = arith.constant 1 : index
    %c0_65 = arith.constant 0 : index
    %73 = vector.load %arg17[%c1_64, %c0_65] : memref<16x256xf32, #tpu.memory_space<vmem>>, vector<6x256xf32>
    tpu.vector_store %arg17[%c1_64, %c0_65], %72 {strides = array<i32>} : memref<16x256xf32, #tpu.memory_space<vmem>>, vector<6x256xf32>,
    %c8 = arith.constant 8 : index
    %c0_66 = arith.constant 0 : index
    %74 = vector.load %arg17[%c8, %c0_66] : memref<16x256xf32, #tpu.memory_space<vmem>>, vector<1x256xf32>
    tpu.vector_store %arg17[%c8, %c0_66], %69 {strides = array<i32>} : memref<16x256xf32, #tpu.memory_space<vmem>>, vector<1x256xf32>,
    %c15 = arith.constant 15 : index
    %c0_67 = arith.constant 0 : index
    %75 = vector.load %arg17[%c15, %c0_67] : memref<16x256xf32, #tpu.memory_space<vmem>>, vector<1x256xf32>
    tpu.vector_store %arg17[%c15, %c0_67], %69 {strides = array<i32>} : memref<16x256xf32, #tpu.memory_space<vmem>>, vector<1x256xf32>,
    %76 = vector.extract_strided_slice %68 {offsets = [10, 0], sizes = [6, 256], strides = [1, 1]} : vector<16x256xf32> to vector<6x256xf32>
    %c9_68 = arith.constant 9 : index
    %c0_69 = arith.constant 0 : index
    %77 = vector.load %arg17[%c9_68, %c0_69] : memref<16x256xf32, #tpu.memory_space<vmem>>, vector<6x256xf32>
    tpu.vector_store %arg17[%c9_68, %c0_69], %76 {strides = array<i32>} : memref<16x256xf32, #tpu.memory_space<vmem>>, vector<6x256xf32>,
    %cst_70 = arith.constant 0.000000e+00 : f32
    %78 = vector.broadcast %cst_70 : f32 to vector<14x256xf32>
    %c0_71 = arith.constant 0 : index
    %c0_72 = arith.constant 0 : index
    %79 = vector.load %arg17[%c0_71, %c0_72] : memref<16x256xf32, #tpu.memory_space<vmem>>, vector<14x256xf32>
    %80 = arith.truncf %79 : vector<14x256xf32> to vector<14x256xbf16>
    %c0_73 = arith.constant 0 : index
    %c0_74 = arith.constant 0 : index
    %c0_75 = arith.constant 0 : index
    %81 = vector.load %arg4[%c0_73, %c0_74, %c0_75] : memref<3x256x256xbf16, #tpu.memory_space<vmem>>, vector<1x256x256xbf16>
    %82 = vector.shape_cast %81 : vector<1x256x256xbf16> to vector<256x256xbf16>
    %cst_76 = arith.constant dense<0.000000e+00> : vector<14x256xf32>
    %83 = tpu.matmul %80, %82, %cst_76 {dimension_numbers = #tpu.dot_dimension_numbers<[1], [0], [0], [1], [0, 0, 1, 1], [], []>} : vector<14x256xbf16>, vector<256x256xbf16>, vector<14x256xf32> -> vector<14x256xf32>
    %84 = arith.addf %78, %83 : vector<14x256xf32>
    %c1_77 = arith.constant 1 : index
    %c0_78 = arith.constant 0 : index
    %85 = vector.load %arg17[%c1_77, %c0_78] : memref<16x256xf32, #tpu.memory_space<vmem>>, vector<14x256xf32>
    %86 = arith.truncf %85 : vector<14x256xf32> to vector<14x256xbf16>
    %c1_79 = arith.constant 1 : index
    %c0_80 = arith.constant 0 : index
    %c0_81 = arith.constant 0 : index
    %87 = vector.load %arg4[%c1_79, %c0_80, %c0_81] : memref<3x256x256xbf16, #tpu.memory_space<vmem>>, vector<1x256x256xbf16>
    %88 = vector.shape_cast %87 : vector<1x256x256xbf16> to vector<256x256xbf16>
    %cst_82 = arith.constant dense<0.000000e+00> : vector<14x256xf32>
    %89 = tpu.matmul %86, %88, %cst_82 {dimension_numbers = #tpu.dot_dimension_numbers<[1], [0], [0], [1], [0, 0, 1, 1], [], []>} : vector<14x256xbf16>, vector<256x256xbf16>, vector<14x256xf32> -> vector<14x256xf32>
    %90 = arith.addf %84, %89 : vector<14x256xf32>
    %c2_83 = arith.constant 2 : index
    %c0_84 = arith.constant 0 : index
    %91 = vector.load %arg17[%c2_83, %c0_84] : memref<16x256xf32, #tpu.memory_space<vmem>>, vector<14x256xf32>
    %92 = arith.truncf %91 : vector<14x256xf32> to vector<14x256xbf16>
    %c2_85 = arith.constant 2 : index
    %c0_86 = arith.constant 0 : index
    %c0_87 = arith.constant 0 : index
    %93 = vector.load %arg4[%c2_85, %c0_86, %c0_87] : memref<3x256x256xbf16, #tpu.memory_space<vmem>>, vector<1x256x256xbf16>
    %94 = vector.shape_cast %93 : vector<1x256x256xbf16> to vector<256x256xbf16>
    %cst_88 = arith.constant dense<0.000000e+00> : vector<14x256xf32>
    %95 = tpu.matmul %92, %94, %cst_88 {dimension_numbers = #tpu.dot_dimension_numbers<[1], [0], [0], [1], [0, 0, 1, 1], [], []>} : vector<14x256xbf16>, vector<256x256xbf16>, vector<14x256xf32> -> vector<14x256xf32>
    %96 = arith.addf %90, %95 : vector<14x256xf32>
    %c0_89 = arith.constant 0 : index
    %c0_90 = arith.constant 0 : index
    %97 = vector.load %arg7[%c0_89, %c0_90] : memref<1x256xf32, #tpu.memory_space<vmem>>, vector<1x256xf32>
    %98 = vector.broadcast %97 : vector<1x256xf32> to vector<14x256xf32>
    %99 = arith.addf %96, %98 : vector<14x256xf32>
    %100 = arith.mulf %99, %32 : vector<14x256xf32>
    %cst_91 = arith.constant dense<0.000000e+00> : vector<256xf32>
    %101 = vector.multi_reduction <add>, %100, %cst_91 [0] : vector<14x256xf32> to vector<256xf32>
    %102 = vector.shape_cast %101 : vector<256xf32> to vector<1x256xf32>
    %c0_92 = arith.constant 0 : index
    %c0_93 = arith.constant 0 : index
    %103 = vector.load %arg9[%c0_92, %c0_93] : memref<256x128xf32, #tpu.memory_space<vmem>>, vector<256x128xf32>
    %cst_94 = arith.constant dense<0.000000e+00> : vector<1x128xf32>
    %104 = tpu.matmul %102, %103, %cst_94 {dimension_numbers = #tpu.dot_dimension_numbers<[1], [0], [0], [1], [0, 0, 1, 1], [], []>} : vector<1x256xf32>, vector<256x128xf32>, vector<1x128xf32> -> vector<1x128xf32>
    %cst_95 = arith.constant 0.00413223123 : f32
    %105 = vector.broadcast %cst_95 : f32 to vector<1x128xf32>
    %106 = arith.mulf %104, %105 : vector<1x128xf32>
    %c0_96 = arith.constant 0 : index
    %c0_97 = arith.constant 0 : index
    %107 = vector.load %arg10[%c0_96, %c0_97] : memref<128x256xf32, #tpu.memory_space<vmem>>, vector<128x256xf32>
    %cst_98 = arith.constant dense<0.000000e+00> : vector<1x256xf32>
    %108 = tpu.matmul %106, %107, %cst_98 {dimension_numbers = #tpu.dot_dimension_numbers<[1], [0], [0], [1], [0, 0, 1, 1], [], []>} : vector<1x128xf32>, vector<128x256xf32>, vector<1x256xf32> -> vector<1x256xf32>
    %109 = vector.broadcast %108 : vector<1x256xf32> to vector<14x256xf32>
    %110 = arith.subf %100, %109 : vector<14x256xf32>
    %111 = arith.mulf %110, %110 : vector<14x256xf32>
    %112 = arith.mulf %111, %32 : vector<14x256xf32>
    %cst_99 = arith.constant dense<0.000000e+00> : vector<256xf32>
    %113 = vector.multi_reduction <add>, %112, %cst_99 [0] : vector<14x256xf32> to vector<256xf32>
    %114 = vector.shape_cast %113 : vector<256xf32> to vector<1x256xf32>
    %c0_100 = arith.constant 0 : index
    %c0_101 = arith.constant 0 : index
    %115 = vector.load %arg9[%c0_100, %c0_101] : memref<256x128xf32, #tpu.memory_space<vmem>>, vector<256x128xf32>
    %cst_102 = arith.constant dense<0.000000e+00> : vector<1x128xf32>
    %116 = tpu.matmul %114, %115, %cst_102 {dimension_numbers = #tpu.dot_dimension_numbers<[1], [0], [0], [1], [0, 0, 1, 1], [], []>} : vector<1x256xf32>, vector<256x128xf32>, vector<1x128xf32> -> vector<1x128xf32>
    %cst_103 = arith.constant 0.00413223123 : f32
    %117 = vector.broadcast %cst_103 : f32 to vector<1x128xf32>
    %118 = arith.mulf %116, %117 : vector<1x128xf32>
    %c0_104 = arith.constant 0 : index
    %c0_105 = arith.constant 0 : index
    %119 = vector.load %arg13[%c0_104, %c0_105] : memref<1x128xf32, #tpu.memory_space<vmem>>, vector<1x128xf32>
    %cst_106 = arith.constant 9.99999974E-6 : f32
    %120 = vector.broadcast %cst_106 : f32 to vector<1x128xf32>
    %121 = arith.addf %118, %120 : vector<1x128xf32>
    %122 = math.rsqrt %121 : vector<1x128xf32>
    %123 = arith.mulf %119, %122 : vector<1x128xf32>
    %c0_107 = arith.constant 0 : index
    %c0_108 = arith.constant 0 : index
    %124 = vector.load %arg14[%c0_107, %c0_108] : memref<1x128xf32, #tpu.memory_space<vmem>>, vector<1x128xf32>
    %125 = arith.mulf %106, %123 : vector<1x128xf32>
    %126 = arith.subf %124, %125 : vector<1x128xf32>
    %c0_109 = arith.constant 0 : index
    %c0_110 = arith.constant 0 : index
    %127 = vector.load %arg10[%c0_109, %c0_110] : memref<128x256xf32, #tpu.memory_space<vmem>>, vector<128x256xf32>
    %cst_111 = arith.constant dense<0.000000e+00> : vector<1x256xf32>
    %128 = tpu.matmul %123, %127, %cst_111 {dimension_numbers = #tpu.dot_dimension_numbers<[1], [0], [0], [1], [0, 0, 1, 1], [], []>} : vector<1x128xf32>, vector<128x256xf32>, vector<1x256xf32> -> vector<1x256xf32>
    %c0_112 = arith.constant 0 : index
    %c0_113 = arith.constant 0 : index
    %129 = vector.load %arg10[%c0_112, %c0_113] : memref<128x256xf32, #tpu.memory_space<vmem>>, vector<128x256xf32>
    %cst_114 = arith.constant dense<0.000000e+00> : vector<1x256xf32>
    %130 = tpu.matmul %126, %129, %cst_114 {dimension_numbers = #tpu.dot_dimension_numbers<[1], [0], [0], [1], [0, 0, 1, 1], [], []>} : vector<1x128xf32>, vector<128x256xf32>, vector<1x256xf32> -> vector<1x256xf32>
    %131 = vector.broadcast %128 : vector<1x256xf32> to vector<14x256xf32>
    %132 = arith.mulf %100, %131 : vector<14x256xf32>
    %133 = vector.broadcast %130 : vector<1x256xf32> to vector<14x256xf32>
    %134 = arith.addf %132, %133 : vector<14x256xf32>
    %cst_115 = arith.constant 0.000000e+00 : f32
    %135 = vector.broadcast %cst_115 : f32 to vector<14x256xf32>
    %136 = arith.maximumf %134, %135 : vector<14x256xf32>
    %137 = arith.mulf %136, %32 : vector<14x256xf32>
    %cst_116 = arith.constant 0.000000e+00 : f32
    %138 = vector.broadcast %cst_116 : f32 to vector<1x256xf32>
    %c0_117 = arith.constant 0 : index
    %c0_118 = arith.constant 0 : index
    %139 = vector.load %arg18[%c0_117, %c0_118] : memref<16x256xf32, #tpu.memory_space<vmem>>, vector<1x256xf32>
    tpu.vector_store %arg18[%c0_117, %c0_118], %138 {strides = array<i32>} : memref<16x256xf32, #tpu.memory_space<vmem>>, vector<1x256xf32>,
    %c7_119 = arith.constant 7 : index
    %c0_120 = arith.constant 0 : index
    %140 = vector.load %arg18[%c7_119, %c0_120] : memref<16x256xf32, #tpu.memory_space<vmem>>, vector<1x256xf32>
    tpu.vector_store %arg18[%c7_119, %c0_120], %138 {strides = array<i32>} : memref<16x256xf32, #tpu.memory_space<vmem>>, vector<1x256xf32>,
    %141 = vector.extract_strided_slice %137 {offsets = [0, 0], sizes = [6, 256], strides = [1, 1]} : vector<14x256xf32> to vector<6x256xf32>
    %c1_121 = arith.constant 1 : index
    %c0_122 = arith.constant 0 : index
    %142 = vector.load %arg18[%c1_121, %c0_122] : memref<16x256xf32, #tpu.memory_space<vmem>>, vector<6x256xf32>
    tpu.vector_store %arg18[%c1_121, %c0_122], %141 {strides = array<i32>} : memref<16x256xf32, #tpu.memory_space<vmem>>, vector<6x256xf32>,
    %c8_123 = arith.constant 8 : index
    %c0_124 = arith.constant 0 : index
    %143 = vector.load %arg18[%c8_123, %c0_124] : memref<16x256xf32, #tpu.memory_space<vmem>>, vector<1x256xf32>
    tpu.vector_store %arg18[%c8_123, %c0_124], %138 {strides = array<i32>} : memref<16x256xf32, #tpu.memory_space<vmem>>, vector<1x256xf32>,
    %c15_125 = arith.constant 15 : index
    %c0_126 = arith.constant 0 : index
    %144 = vector.load %arg18[%c15_125, %c0_126] : memref<16x256xf32, #tpu.memory_space<vmem>>, vector<1x256xf32>
    tpu.vector_store %arg18[%c15_125, %c0_126], %138 {strides = array<i32>} : memref<16x256xf32, #tpu.memory_space<vmem>>, vector<1x256xf32>,
    %145 = vector.extract_strided_slice %137 {offsets = [8, 0], sizes = [6, 256], strides = [1, 1]} : vector<14x256xf32> to vector<6x256xf32>
    %c9_127 = arith.constant 9 : index
    %c0_128 = arith.constant 0 : index
    %146 = vector.load %arg18[%c9_127, %c0_128] : memref<16x256xf32, #tpu.memory_space<vmem>>, vector<6x256xf32>
    tpu.vector_store %arg18[%c9_127, %c0_128], %145 {strides = array<i32>} : memref<16x256xf32, #tpu.memory_space<vmem>>, vector<6x256xf32>,
    %cst_129 = arith.constant 0.000000e+00 : f32
    %147 = vector.broadcast %cst_129 : f32 to vector<14x256xf32>
    %c0_130 = arith.constant 0 : index
    %c0_131 = arith.constant 0 : index
    %148 = vector.load %arg18[%c0_130, %c0_131] : memref<16x256xf32, #tpu.memory_space<vmem>>, vector<14x256xf32>
    %149 = arith.truncf %148 : vector<14x256xf32> to vector<14x256xbf16>
    %c0_132 = arith.constant 0 : index
    %c0_133 = arith.constant 0 : index
    %c0_134 = arith.constant 0 : index
    %150 = vector.load %arg5[%c0_132, %c0_133, %c0_134] : memref<3x256x256xbf16, #tpu.memory_space<vmem>>, vector<1x256x256xbf16>
    %151 = vector.shape_cast %150 : vector<1x256x256xbf16> to vector<256x256xbf16>
    %cst_135 = arith.constant dense<0.000000e+00> : vector<14x256xf32>
    %152 = tpu.matmul %149, %151, %cst_135 {dimension_numbers = #tpu.dot_dimension_numbers<[1], [0], [0], [1], [0, 0, 1, 1], [], []>} : vector<14x256xbf16>, vector<256x256xbf16>, vector<14x256xf32> -> vector<14x256xf32>
    %153 = arith.addf %147, %152 : vector<14x256xf32>
    %c1_136 = arith.constant 1 : index
    %c0_137 = arith.constant 0 : index
    %154 = vector.load %arg18[%c1_136, %c0_137] : memref<16x256xf32, #tpu.memory_space<vmem>>, vector<14x256xf32>
    %155 = arith.truncf %154 : vector<14x256xf32> to vector<14x256xbf16>
    %c1_138 = arith.constant 1 : index
    %c0_139 = arith.constant 0 : index
    %c0_140 = arith.constant 0 : index
    %156 = vector.load %arg5[%c1_138, %c0_139, %c0_140] : memref<3x256x256xbf16, #tpu.memory_space<vmem>>, vector<1x256x256xbf16>
    %157 = vector.shape_cast %156 : vector<1x256x256xbf16> to vector<256x256xbf16>
    %cst_141 = arith.constant dense<0.000000e+00> : vector<14x256xf32>
    %158 = tpu.matmul %155, %157, %cst_141 {dimension_numbers = #tpu.dot_dimension_numbers<[1], [0], [0], [1], [0, 0, 1, 1], [], []>} : vector<14x256xbf16>, vector<256x256xbf16>, vector<14x256xf32> -> vector<14x256xf32>
    %159 = arith.addf %153, %158 : vector<14x256xf32>
    %c2_142 = arith.constant 2 : index
    %c0_143 = arith.constant 0 : index
    %160 = vector.load %arg18[%c2_142, %c0_143] : memref<16x256xf32, #tpu.memory_space<vmem>>, vector<14x256xf32>
    %161 = arith.truncf %160 : vector<14x256xf32> to vector<14x256xbf16>
    %c2_144 = arith.constant 2 : index
    %c0_145 = arith.constant 0 : index
    %c0_146 = arith.constant 0 : index
    %162 = vector.load %arg5[%c2_144, %c0_145, %c0_146] : memref<3x256x256xbf16, #tpu.memory_space<vmem>>, vector<1x256x256xbf16>
    %163 = vector.shape_cast %162 : vector<1x256x256xbf16> to vector<256x256xbf16>
    %cst_147 = arith.constant dense<0.000000e+00> : vector<14x256xf32>
    %164 = tpu.matmul %161, %163, %cst_147 {dimension_numbers = #tpu.dot_dimension_numbers<[1], [0], [0], [1], [0, 0, 1, 1], [], []>} : vector<14x256xbf16>, vector<256x256xbf16>, vector<14x256xf32> -> vector<14x256xf32>
    %165 = arith.addf %159, %164 : vector<14x256xf32>
    %c0_148 = arith.constant 0 : index
    %c0_149 = arith.constant 0 : index
    %166 = vector.load %arg8[%c0_148, %c0_149] : memref<1x256xf32, #tpu.memory_space<vmem>>, vector<1x256xf32>
    %167 = vector.broadcast %166 : vector<1x256xf32> to vector<14x256xf32>
    %168 = arith.addf %165, %167 : vector<14x256xf32>
    %169 = arith.mulf %168, %32 : vector<14x256xf32>
    %cst_150 = arith.constant dense<0.000000e+00> : vector<256xf32>
    %170 = vector.multi_reduction <add>, %169, %cst_150 [0] : vector<14x256xf32> to vector<256xf32>
    %171 = vector.shape_cast %170 : vector<256xf32> to vector<1x256xf32>
    %c0_151 = arith.constant 0 : index
    %c0_152 = arith.constant 0 : index
    %172 = vector.load %arg9[%c0_151, %c0_152] : memref<256x128xf32, #tpu.memory_space<vmem>>, vector<256x128xf32>
    %cst_153 = arith.constant dense<0.000000e+00> : vector<1x128xf32>
    %173 = tpu.matmul %171, %172, %cst_153 {dimension_numbers = #tpu.dot_dimension_numbers<[1], [0], [0], [1], [0, 0, 1, 1], [], []>} : vector<1x256xf32>, vector<256x128xf32>, vector<1x128xf32> -> vector<1x128xf32>
    %cst_154 = arith.constant 0.00413223123 : f32
    %174 = vector.broadcast %cst_154 : f32 to vector<1x128xf32>
    %175 = arith.mulf %173, %174 : vector<1x128xf32>
    %c0_155 = arith.constant 0 : index
    %c0_156 = arith.constant 0 : index
    %176 = vector.load %arg10[%c0_155, %c0_156] : memref<128x256xf32, #tpu.memory_space<vmem>>, vector<128x256xf32>
    %cst_157 = arith.constant dense<0.000000e+00> : vector<1x256xf32>
    %177 = tpu.matmul %175, %176, %cst_157 {dimension_numbers = #tpu.dot_dimension_numbers<[1], [0], [0], [1], [0, 0, 1, 1], [], []>} : vector<1x128xf32>, vector<128x256xf32>, vector<1x256xf32> -> vector<1x256xf32>
    %178 = vector.broadcast %177 : vector<1x256xf32> to vector<14x256xf32>
    %179 = arith.subf %169, %178 : vector<14x256xf32>
    %180 = arith.mulf %179, %179 : vector<14x256xf32>
    %181 = arith.mulf %180, %32 : vector<14x256xf32>
    %cst_158 = arith.constant dense<0.000000e+00> : vector<256xf32>
    %182 = vector.multi_reduction <add>, %181, %cst_158 [0] : vector<14x256xf32> to vector<256xf32>
    %183 = vector.shape_cast %182 : vector<256xf32> to vector<1x256xf32>
    %c0_159 = arith.constant 0 : index
    %c0_160 = arith.constant 0 : index
    %184 = vector.load %arg9[%c0_159, %c0_160] : memref<256x128xf32, #tpu.memory_space<vmem>>, vector<256x128xf32>
    %cst_161 = arith.constant dense<0.000000e+00> : vector<1x128xf32>
    %185 = tpu.matmul %183, %184, %cst_161 {dimension_numbers = #tpu.dot_dimension_numbers<[1], [0], [0], [1], [0, 0, 1, 1], [], []>} : vector<1x256xf32>, vector<256x128xf32>, vector<1x128xf32> -> vector<1x128xf32>
    %cst_162 = arith.constant 0.00413223123 : f32
    %186 = vector.broadcast %cst_162 : f32 to vector<1x128xf32>
    %187 = arith.mulf %185, %186 : vector<1x128xf32>
    %c0_163 = arith.constant 0 : index
    %c0_164 = arith.constant 0 : index
    %188 = vector.load %arg13[%c0_163, %c0_164] : memref<1x128xf32, #tpu.memory_space<vmem>>, vector<1x128xf32>
    %cst_165 = arith.constant 9.99999974E-6 : f32
    %189 = vector.broadcast %cst_165 : f32 to vector<1x128xf32>
    %190 = arith.addf %187, %189 : vector<1x128xf32>
    %191 = math.rsqrt %190 : vector<1x128xf32>
    %192 = arith.mulf %188, %191 : vector<1x128xf32>
    %c0_166 = arith.constant 0 : index
    %c0_167 = arith.constant 0 : index
    %193 = vector.load %arg14[%c0_166, %c0_167] : memref<1x128xf32, #tpu.memory_space<vmem>>, vector<1x128xf32>
    %194 = arith.mulf %175, %192 : vector<1x128xf32>
    %195 = arith.subf %193, %194 : vector<1x128xf32>
    %c0_168 = arith.constant 0 : index
    %c0_169 = arith.constant 0 : index
    %196 = vector.load %arg10[%c0_168, %c0_169] : memref<128x256xf32, #tpu.memory_space<vmem>>, vector<128x256xf32>
    %cst_170 = arith.constant dense<0.000000e+00> : vector<1x256xf32>
    %197 = tpu.matmul %192, %196, %cst_170 {dimension_numbers = #tpu.dot_dimension_numbers<[1], [0], [0], [1], [0, 0, 1, 1], [], []>} : vector<1x128xf32>, vector<128x256xf32>, vector<1x256xf32> -> vector<1x256xf32>
    %c0_171 = arith.constant 0 : index
    %c0_172 = arith.constant 0 : index
    %198 = vector.load %arg10[%c0_171, %c0_172] : memref<128x256xf32, #tpu.memory_space<vmem>>, vector<128x256xf32>
    %cst_173 = arith.constant dense<0.000000e+00> : vector<1x256xf32>
    %199 = tpu.matmul %195, %198, %cst_173 {dimension_numbers = #tpu.dot_dimension_numbers<[1], [0], [0], [1], [0, 0, 1, 1], [], []>} : vector<1x128xf32>, vector<128x256xf32>, vector<1x256xf32> -> vector<1x256xf32>
    %200 = vector.broadcast %197 : vector<1x256xf32> to vector<14x256xf32>
    %201 = arith.mulf %169, %200 : vector<14x256xf32>
    %202 = vector.broadcast %199 : vector<1x256xf32> to vector<14x256xf32>
    %203 = arith.addf %201, %202 : vector<14x256xf32>
    %cst_174 = arith.constant 0.000000e+00 : f32
    %204 = vector.broadcast %cst_174 : f32 to vector<14x256xf32>
    %205 = arith.maximumf %203, %204 : vector<14x256xf32>
    %206 = vector.extract_strided_slice %205 {offsets = [0, 0], sizes = [6, 256], strides = [1, 1]} : vector<14x256xf32> to vector<6x256xf32>
    %c0_175 = arith.constant 0 : index
    %c0_176 = arith.constant 0 : index
    %207 = vector.load %arg15[%c0_175, %c0_176] : memref<12x256xf32, #tpu.memory_space<vmem>>, vector<6x256xf32>
    tpu.vector_store %arg15[%c0_175, %c0_176], %206 {strides = array<i32>} : memref<12x256xf32, #tpu.memory_space<vmem>>, vector<6x256xf32>,
    %208 = vector.extract_strided_slice %205 {offsets = [8, 0], sizes = [6, 256], strides = [1, 1]} : vector<14x256xf32> to vector<6x256xf32>
    %c6 = arith.constant 6 : index
    %c0_177 = arith.constant 0 : index
    %209 = vector.load %arg15[%c6, %c0_177] : memref<12x256xf32, #tpu.memory_space<vmem>>, vector<6x256xf32>
    tpu.vector_store %arg15[%c6, %c0_177], %208 {strides = array<i32>} : memref<12x256xf32, #tpu.memory_space<vmem>>, vector<6x256xf32>,
    return
  }
}

</mosaic_0001>

<llo_original>
// kernel: _lambda_.1
$region0: #{_lambda_.1}
  #allocation0 [shape = 'u32[]', space=smem, size = 0x4, offset = 0x4, fixed_abs, tag = 'smem constant byte address 0x4 - core index']
  #allocation1 [shape = 'u32[72,128]{1,0:T(1,128)}', space=vmem, size = 0x9000, scoped, tag = 'internal scratch']
  #allocation2 [shape = 'f32[20,128]{1,0:T(8,128)}', space=vmem, size = 0x3000, scoped, tag = 'scratch operand']
  #allocation3 [shape = 'f32[16,256]{1,0:T(8,128)}', space=vmem, size = 0x4000, scoped, tag = 'scratch operand']
  #allocation4 [shape = 'f32[16,256]{1,0:T(8,128)}', space=vmem, size = 0x4000, scoped, tag = 'scratch operand']
  %s0 = inlined_call_operand.vmem [shape: f32[16,32], index: 0, kind: input, shape index: {}]
  %s1 = inlined_call_operand.vmem [shape: s32[16,32], index: 1, kind: input, shape index: {}]
  %s2 = inlined_call_operand.vmem [shape: s32[4,16,32], index: 2, kind: input, shape index: {}]
  %s3 = inlined_call_operand.hbm [shape: bf16[5,128,256], index: 3, kind: input, shape index: {}]
  %s4 = inlined_call_operand.hbm [shape: bf16[3,256,256], index: 4, kind: input, shape index: {}]
  %s5 = inlined_call_operand.hbm [shape: bf16[3,256,256], index: 5, kind: input, shape index: {}]
  %s6 = inlined_call_operand.vmem [shape: f32[1,256], index: 6, kind: input, shape index: {}]
  %s7 = inlined_call_operand.vmem [shape: f32[1,256], index: 7, kind: input, shape index: {}]
  %s8 = inlined_call_operand.vmem [shape: f32[1,256], index: 8, kind: input, shape index: {}]
  %s9 = inlined_call_operand.vmem [shape: f32[256,128], index: 9, kind: input, shape index: {}]
  %s10 = inlined_call_operand.hbm [shape: f32[128,256], index: 10, kind: input, shape index: {}]
  %s11 = inlined_call_operand.vmem [shape: f32[16,256], index: 11, kind: input, shape index: {}]
  %s12 = inlined_call_operand.vmem [shape: f32[14,256], index: 12, kind: input, shape index: {}]
  %s13 = inlined_call_operand.vmem [shape: f32[1,128], index: 13, kind: input, shape index: {}]
  %s14 = inlined_call_operand.vmem [shape: f32[1,128], index: 14, kind: input, shape index: {}]
  %s15 = inlined_call_operand.vmem [shape: f32[12,256], index: 15, kind: output, shape index: {}]
  %s16 = sld [smem:[#allocation0]]
  $region86: #{_lambda_.1} parent=0
    _
  %s18 = ssub.s32 1, %s16
  %s19 = scalar_select 0, %s18, %s16
  $region1: #{_lambda_.1} parent=0
    #allocation5 [shape = 'u8[327680]{0}', space=vmem, size = 0x50000, scoped, tag = 'input window, operand 3, single buffered']
    #allocation6 [shape = 's32[1]{0}', space=sflag, size = 0x4, scoped, tag = 'scoped memory for _lambda_.1']
    #allocation7 [shape = 'u8[393216]{0}', space=vmem, size = 0x60000, scoped, tag = 'input window, operand 4, single buffered']
    #allocation8 [shape = 's32[1]{0}', space=sflag, size = 0x4, scoped, tag = 'scoped memory for _lambda_.1']
    #allocation9 [shape = 'u8[393216]{0}', space=vmem, size = 0x60000, scoped, tag = 'input window, operand 5, single buffered']
    #allocation10 [shape = 'u8[131072]{0}', space=vmem, size = 0x20000, scoped, tag = 'input window, operand 10, single buffered']
    #allocation11 [shape = 's32[1]{0}', space=sflag, size = 0x4, scoped, tag = 'scoped memory for _lambda_.1']
    %20 = vsyncpa [#allocation6], 0
    %21 = vsyncpa [#allocation8], 0
    %22 = vsyncpa [#allocation11], 0
    // Predicated region
    $region2: #{_lambda_.1} parent=1 // pred_check
      _
    $region3: #{_lambda_.1} parent=1 // pred_check_branch
      %24 = sbr.rel (0) target = $region5
    $region4: #{_lambda_.1} parent=1 // pred_region
      _
    $region5: #{_lambda_.1} parent=1 // pred_fallthru
      _
    // Predicated region
    $region6: #{_lambda_.1} parent=1 // pred_check
      _
    $region7: #{_lambda_.1} parent=1 // pred_check_branch
      %26 = sbr.rel (0) target = $region9
    $region8: #{_lambda_.1} parent=1 // pred_region
      _
    $region9: #{_lambda_.1} parent=1 // pred_fallthru
      _
    // Predicated region
    $region10: #{_lambda_.1} parent=1 // pred_check
      _
    $region11: #{_lambda_.1} parent=1 // pred_check_branch
      %28 = sbr.rel (0) target = $region13
    $region12: #{_lambda_.1} parent=1 // pred_region
      _
    $region13: #{_lambda_.1} parent=1 // pred_fallthru
      _
    // Predicated region
    $region14: #{_lambda_.1} parent=1 // pred_check
      _
    $region15: #{_lambda_.1} parent=1 // pred_check_branch
      %30 = sbr.rel (0) target = $region17
    $region16: #{_lambda_.1} parent=1 // pred_region
      %32 = vsyncadd [#allocation6], 0
      %s33 = sshll.u32 %s3, 4
      %s34 = int_to_ptr.hbm [resolvable:$true] %s33
      %s35 = sshll.u32 [#allocation5], 4
      %s36 = int_to_ptr.vmem [resolvable:$true] %s35
      %41 = dma.hbm_to_vmem [thread:$0]  %s34, 10240, %s36, [#allocation6], 128, 128, 8
    $region17: #{_lambda_.1} parent=1 // pred_fallthru
      _
    // Predicated region
    $region18: #{_lambda_.1} parent=1 // pred_check
      _
    $region19: #{_lambda_.1} parent=1 // pred_check_branch
      %43 = sbr.rel (0) target = $region21
    $region20: #{_lambda_.1} parent=1 // pred_region
      %45 = vsyncadd [#allocation8], 0
      %s46 = sshll.u32 %s4, 4
      %s47 = int_to_ptr.hbm [resolvable:$true] %s46
      %s48 = sshll.u32 [#allocation7], 4
      %s49 = int_to_ptr.vmem [resolvable:$true] %s48
      %54 = dma.hbm_to_vmem [thread:$0]  %s47, 12288, %s49, [#allocation8], 128, 128, 8
    $region21: #{_lambda_.1} parent=1 // pred_fallthru
      _
    // Predicated region
    $region22: #{_lambda_.1} parent=1 // pred_check
      _
    $region23: #{_lambda_.1} parent=1 // pred_check_branch
      %56 = sbr.rel (0) target = $region25
    $region24: #{_lambda_.1} parent=1 // pred_region
      %58 = vsyncadd [#allocation8], 0
      %s59 = sshll.u32 %s5, 4
      %s60 = int_to_ptr.hbm [resolvable:$true] %s59
      %s61 = sshll.u32 [#allocation9], 4
      %s62 = int_to_ptr.vmem [resolvable:$true] %s61
      %67 = dma.hbm_to_vmem [thread:$0]  %s60, 12288, %s62, [#allocation8], 128, 128, 8
    $region25: #{_lambda_.1} parent=1 // pred_fallthru
      _
    // Predicated region
    $region26: #{_lambda_.1} parent=1 // pred_check
      _
    $region27: #{_lambda_.1} parent=1 // pred_check_branch
      %69 = sbr.rel (0) target = $region29
    $region28: #{_lambda_.1} parent=1 // pred_region
      _
    $region29: #{_lambda_.1} parent=1 // pred_fallthru
      _
    // Predicated region
    $region30: #{_lambda_.1} parent=1 // pred_check
      _
    $region31: #{_lambda_.1} parent=1 // pred_check_branch
      %71 = sbr.rel (0) target = $region33
    $region32: #{_lambda_.1} parent=1 // pred_region
      _
    $region33: #{_lambda_.1} parent=1 // pred_fallthru
      _
    // Predicated region
    $region34: #{_lambda_.1} parent=1 // pred_check
      _
    $region35: #{_lambda_.1} parent=1 // pred_check_branch
      %73 = sbr.rel (0) target = $region37
    $region36: #{_lambda_.1} parent=1 // pred_region
      _
    $region37: #{_lambda_.1} parent=1 // pred_fallthru
      _
    // Predicated region
    $region38: #{_lambda_.1} parent=1 // pred_check
      _
    $region39: #{_lambda_.1} parent=1 // pred_check_branch
      %75 = sbr.rel (0) target = $region41
    $region40: #{_lambda_.1} parent=1 // pred_region
      _
    $region41: #{_lambda_.1} parent=1 // pred_fallthru
      _
    // Predicated region
    $region42: #{_lambda_.1} parent=1 // pred_check
      _
    $region43: #{_lambda_.1} parent=1 // pred_check_branch
      %77 = sbr.rel (0) target = $region45
    $region44: #{_lambda_.1} parent=1 // pred_region
      %79 = vsyncadd [#allocation11], 0
      %s80 = sshll.u32 %s10, 4
      %s81 = int_to_ptr.hbm [resolvable:$true] %s80
      %s82 = sshll.u32 [#allocation10], 4
      %s83 = int_to_ptr.vmem [resolvable:$true] %s82
      %88 = dma.hbm_to_vmem [thread:$0]  %s81, 4096, %s83, [#allocation11], 256, 256, 16
    $region45: #{_lambda_.1} parent=1 // pred_fallthru
      _
    // Predicated region
    $region46: #{_lambda_.1} parent=1 // pred_check
      _
    $region47: #{_lambda_.1} parent=1 // pred_check_branch
      %90 = sbr.rel (0) target = $region49
    $region48: #{_lambda_.1} parent=1 // pred_region
      _
    $region49: #{_lambda_.1} parent=1 // pred_fallthru
      _
    // Predicated region
    $region50: #{_lambda_.1} parent=1 // pred_check
      _
    $region51: #{_lambda_.1} parent=1 // pred_check_branch
      %92 = sbr.rel (0) target = $region53
    $region52: #{_lambda_.1} parent=1 // pred_region
      _
    $region53: #{_lambda_.1} parent=1 // pred_fallthru
      _
    // Predicated region
    $region54: #{_lambda_.1} parent=1 // pred_check
      _
    $region55: #{_lambda_.1} parent=1 // pred_check_branch
      %94 = sbr.rel (0) target = $region57
    $region56: #{_lambda_.1} parent=1 // pred_region
      _
    $region57: #{_lambda_.1} parent=1 // pred_fallthru
      _
    // Predicated region
    $region58: #{_lambda_.1} parent=1 // pred_check
      _
    $region59: #{_lambda_.1} parent=1 // pred_check_branch
      %96 = sbr.rel (0) target = $region61
    $region60: #{_lambda_.1} parent=1 // pred_region
      _
    $region61: #{_lambda_.1} parent=1 // pred_fallthru
      _
    // Predicated region
    $region62: #{_lambda_.1} parent=1 // pred_check
      _
    $region63: #{_lambda_.1} parent=1 // pred_check_branch
      %98 = sbr.rel (0) target = $region65
    $region64: #{_lambda_.1} parent=1 // pred_region
      %100 = dma.done [#allocation6], 10240
    $region65: #{_lambda_.1} parent=1 // pred_fallthru
      _
    // Predicated region
    $region66: #{_lambda_.1} parent=1 // pred_check
      _
    $region67: #{_lambda_.1} parent=1 // pred_check_branch
      %102 = sbr.rel (0) target = $region69
    $region68: #{_lambda_.1} parent=1 // pred_region
      %104 = dma.done [#allocation8], 12288
    $region69: #{_lambda_.1} parent=1 // pred_fallthru
      _
    // Predicated region
    $region70: #{_lambda_.1} parent=1 // pred_check
      _
    $region71: #{_lambda_.1} parent=1 // pred_check_branch
      %106 = sbr.rel (0) target = $region73
    $region72: #{_lambda_.1} parent=1 // pred_region
      %108 = dma.done [#allocation8], 12288
    $region73: #{_lambda_.1} parent=1 // pred_fallthru
      _
    // Predicated region
    $region74: #{_lambda_.1} parent=1 // pred_check
      _
    $region75: #{_lambda_.1} parent=1 // pred_check_branch
      %110 = sbr.rel (0) target = $region77
    $region76: #{_lambda_.1} parent=1 // pred_region
      %112 = dma.done [#allocation11], 4096
    $region77: #{_lambda_.1} parent=1 // pred_fallthru
      _
    %v113 = vld [vmem:[%s0] sm:$0xff]
    %v114 = vld [vmem:[%s0 + $0x8] sm:$0xff]
    %v115 = vld [vmem:[%s1] sm:$0xff]
    %v116 = vld [vmem:[%s1 + $0x8] sm:$0xff]
    %v117 = vld [vmem:[%s2] sm:$0xff]
    %v118 = vld [vmem:[%s2 + $0x8] sm:$0xff]
    %vm119 = vcmp.eq.s32.totalorder %v115, %v117
    %vm120 = vcmp.eq.s32.totalorder %v116, %v118
    %v121 = vsel %vm119, %v113, 0.0
    %v122 = vsel %vm120, %v114, 0.0
    %s123 = scalar_lea.vmem %s2, 16
    %v124 = vld [vmem:[%s123] sm:$0xff]
    %v125 = vld [vmem:[%s123 + $0x8] sm:$0xff]
    %vm126 = vcmp.eq.s32.totalorder %v115, %v124
    %vm127 = vcmp.eq.s32.totalorder %v116, %v125
    %v128 = vsel %vm126, %v113, 0.0
    %v129 = vsel %vm127, %v114, 0.0
    %s130 = scalar_lea.vmem %s2, 32
    %v131 = vld [vmem:[%s130] sm:$0xff]
    %v132 = vld [vmem:[%s130 + $0x8] sm:$0xff]
    %vm133 = vcmp.eq.s32.totalorder %v115, %v131
    %vm134 = vcmp.eq.s32.totalorder %v116, %v132
    %v135 = vsel %vm133, %v113, 0.0
    %v136 = vsel %vm134, %v114, 0.0
    %s137 = scalar_lea.vmem %s2, 48
    %v138 = vld [vmem:[%s137] sm:$0xff]
    %v139 = vld [vmem:[%s137 + $0x8] sm:$0xff]
    %vm140 = vcmp.eq.s32.totalorder %v115, %v138
    %vm141 = vcmp.eq.s32.totalorder %v116, %v139
    %v142 = vsel %vm140, %v113, 0.0
    %v143 = vsel %vm141, %v114, 0.0
    %146 = vrot.lane.b32.xlu0 %v128, 32
    %v147 = vpop.permute.xlu0 %146
    %148 = vrot.lane.b32.xlu0 %v129, 32
    %v149 = vpop.permute.xlu0 %148
    %154 = vrot.lane.b32.xlu0 %v135, 64
    %v155 = vpop.permute.xlu0 %154
    %156 = vrot.lane.b32.xlu0 %v136, 64
    %v157 = vpop.permute.xlu0 %156
    %162 = vrot.lane.b32.xlu0 %v142, 96
    %v163 = vpop.permute.xlu0 %162
    %164 = vrot.lane.b32.xlu0 %v143, 96
    %v165 = vpop.permute.xlu0 %164
    %vm168 = vcmask 261120
    %v169 = vsel %vm168, %v121, %v147
    %v170 = vsel %vm168, %v122, %v149
    %vm171 = vcmask 523264
    %v172 = vsel %vm171, %v169, %v155
    %v173 = vsel %vm171, %v170, %v157
    %vm174 = vcmask 785408
    %v175 = vsel %vm174, %v172, %v163
    %v176 = vsel %vm174, %v173, %v165
    %177 = vst [vmem:[#allocation2] sm:$0x1] 0.0
    %178 = vst [vmem:[#allocation2 + $0x9] sm:$0x1] 0.0
    %179 = vst [vmem:[#allocation2 + $0x1] sm:$0xff] %v175
    %180 = vst [vmem:[#allocation2 + $0xa] sm:$0x1] 0.0
    %181 = vst [vmem:[#allocation2 + $0x13] sm:$0x1] 0.0
    %182 = vst [vmem:[#allocation2 + $0xb] sm:$0xff] %v176
    %v183 = vld [vmem:[%s12] sm:$0xff]
    %v184 = vld [vmem:[%s12 + $0x8] sm:$0xff]
    %v185 = vld [vmem:[%s12 + $0x10] sm:$0x3f]
    %v186 = vld [vmem:[%s12 + $0x18] sm:$0x3f]
    %v187 = vld [vmem:[#allocation2] sm:$0xff]
    %v188 = vld [vmem:[#allocation2 + $0x8] sm:$0xff]
    %v189 = vpack.c.bf16 %v188, %v187
    %v190 = vld [vmem:[#allocation5] sm:$0xff]
    %v191 = vld [vmem:[#allocation5 + $0x8] sm:$0xff]
    %v192 = vld [vmem:[#allocation5 + $0x10] sm:$0xff]
    %v193 = vld [vmem:[#allocation5 + $0x18] sm:$0xff]
    %v194 = vld [vmem:[#allocation5 + $0x20] sm:$0xff]
    %v195 = vld [vmem:[#allocation5 + $0x28] sm:$0xff]
    %v196 = vld [vmem:[#allocation5 + $0x30] sm:$0xff]
    %v197 = vld [vmem:[#allocation5 + $0x38] sm:$0xff]
    %v198 = vld [vmem:[#allocation5 + $0x40] sm:$0xff]
    %v199 = vld [vmem:[#allocation5 + $0x48] sm:$0xff]
    %v200 = vld [vmem:[#allocation5 + $0x50] sm:$0xff]
    %v201 = vld [vmem:[#allocation5 + $0x58] sm:$0xff]
    %v202 = vld [vmem:[#allocation5 + $0x60] sm:$0xff]
    %v203 = vld [vmem:[#allocation5 + $0x68] sm:$0xff]
    %v204 = vld [vmem:[#allocation5 + $0x70] sm:$0xff]
    %v205 = vld [vmem:[#allocation5 + $0x78] sm:$0xff]
    %v206 = vld [vmem:[#allocation2 + $0x1] sm:$0xff]
    %v207 = vld [vmem:[#allocation2 + $0x9] sm:$0xff]
    %v208 = vpack.c.bf16 %v207, %v206
    %s209 = scalar_lea.vmem [#allocation5], 128
    %v210 = vld [vmem:[%s209] sm:$0xff]
    %v211 = vld [vmem:[%s209 + $0x8] sm:$0xff]
    %v212 = vld [vmem:[%s209 + $0x10] sm:$0xff]
    %v213 = vld [vmem:[%s209 + $0x18] sm:$0xff]
    %v214 = vld [vmem:[%s209 + $0x20] sm:$0xff]
    %v215 = vld [vmem:[%s209 + $0x28] sm:$0xff]
    %v216 = vld [vmem:[%s209 + $0x30] sm:$0xff]
    %v217 = vld [vmem:[%s209 + $0x38] sm:$0xff]
    %v218 = vld [vmem:[%s209 + $0x40] sm:$0xff]
    %v219 = vld [vmem:[%s209 + $0x48] sm:$0xff]
    %v220 = vld [vmem:[%s209 + $0x50] sm:$0xff]
    %v221 = vld [vmem:[%s209 + $0x58] sm:$0xff]
    %v222 = vld [vmem:[%s209 + $0x60] sm:$0xff]
    %v223 = vld [vmem:[%s209 + $0x68] sm:$0xff]
    %v224 = vld [vmem:[%s209 + $0x70] sm:$0xff]
    %v225 = vld [vmem:[%s209 + $0x78] sm:$0xff]
    %v242 = vunpack.c.l.b16 %v210
    %v243 = vunpack.c.h.b16 %v210
    %v244 = vunpack.c.l.b16 %v211
    %v245 = vunpack.c.h.b16 %v211
    %v246 = vunpack.c.l.b16 %v212
    %v247 = vunpack.c.h.b16 %v212
    %v248 = vunpack.c.l.b16 %v213
    %v249 = vunpack.c.h.b16 %v213
    %v250 = vunpack.c.l.b16 %v214
    %v251 = vunpack.c.h.b16 %v214
    %v252 = vunpack.c.l.b16 %v215
    %v253 = vunpack.c.h.b16 %v215
    %v254 = vunpack.c.l.b16 %v216
    %v255 = vunpack.c.h.b16 %v216
    %v256 = vunpack.c.l.b16 %v217
    %v257 = vunpack.c.h.b16 %v217
    %v258 = vunpack.c.l.b16 %v218
    %v259 = vunpack.c.h.b16 %v218
    %v260 = vunpack.c.l.b16 %v219
    %v261 = vunpack.c.h.b16 %v219
    %v262 = vunpack.c.l.b16 %v220
    %v263 = vunpack.c.h.b16 %v220
    %v264 = vunpack.c.l.b16 %v221
    %v265 = vunpack.c.h.b16 %v221
    %v266 = vunpack.c.l.b16 %v222
    %v267 = vunpack.c.h.b16 %v222
    %v268 = vunpack.c.l.b16 %v223
    %v269 = vunpack.c.h.b16 %v223
    %v270 = vunpack.c.l.b16 %v224
    %v271 = vunpack.c.h.b16 %v224
    %v272 = vunpack.c.l.b16 %v225
    %v273 = vunpack.c.h.b16 %v225
    %v274 = vpack.c.b16 %v244, %v242
    %v275 = vpack.c.b16 %v245, %v243
    %v276 = vpack.c.b16 %v248, %v246
    %v277 = vpack.c.b16 %v249, %v247
    %v278 = vpack.c.b16 %v252, %v250
    %v279 = vpack.c.b16 %v253, %v251
    %v280 = vpack.c.b16 %v256, %v254
    %v281 = vpack.c.b16 %v257, %v255
    %v282 = vpack.c.b16 %v260, %v258
    %v283 = vpack.c.b16 %v261, %v259
    %v284 = vpack.c.b16 %v264, %v262
    %v285 = vpack.c.b16 %v265, %v263
    %v286 = vpack.c.b16 %v268, %v266
    %v287 = vpack.c.b16 %v269, %v267
    %v288 = vpack.c.b16 %v272, %v270
    %v289 = vpack.c.b16 %v273, %v271
    %306 = vmatpush.bf16.msra.mxu0 %v288
    %307 = vmatpush.bf16.msra.mxu0 %v286
    %308 = vmatpush.bf16.msra.mxu0 %v284
    %309 = vmatpush.bf16.msra.mxu0 %v282
    %310 = vmatpush.bf16.msra.mxu0 %v280
    %311 = vmatpush.bf16.msra.mxu0 %v278
    %312 = vmatpush.bf16.msra.mxu0 %v276
    %313 = vmatpush.bf16.msra.mxu0 %v274
    %314 = vmatmul.bf16.gmra.mxu0 %v208
    %v315 = vpop.f32.mrf.mxu0
    %v316 = vadd.f32 0.0, %v315
    %v317 = vpop.f32.mrf.mxu0
    %v318 = vadd.f32 0.0, %v317
    %319 = vdwg.mxu0
    %320 = vmatpush.bf16.msra.mxu0 %v289
    %321 = vmatpush.bf16.msra.mxu0 %v287
    %322 = vmatpush.bf16.msra.mxu0 %v285
    %323 = vmatpush.bf16.msra.mxu0 %v283
    %324 = vmatpush.bf16.msra.mxu0 %v281
    %325 = vmatpush.bf16.msra.mxu0 %v279
    %326 = vmatpush.bf16.msra.mxu0 %v277
    %327 = vmatpush.bf16.msra.mxu0 %v275
    %328 = vmatmul.bf16.gmra.mxu0 %v208
    %v329 = vpop.f32.mrf.mxu0
    %v330 = vadd.f32 0.0, %v329
    %v331 = vpop.f32.mrf.mxu0
    %v332 = vadd.f32 0.0, %v331
    %333 = vdwg.mxu0
    %v350 = vunpack.c.l.b16 %v190
    %v351 = vunpack.c.h.b16 %v190
    %v352 = vunpack.c.l.b16 %v191
    %v353 = vunpack.c.h.b16 %v191
    %v354 = vunpack.c.l.b16 %v192
    %v355 = vunpack.c.h.b16 %v192
    %v356 = vunpack.c.l.b16 %v193
    %v357 = vunpack.c.h.b16 %v193
    %v358 = vunpack.c.l.b16 %v194
    %v359 = vunpack.c.h.b16 %v194
    %v360 = vunpack.c.l.b16 %v195
    %v361 = vunpack.c.h.b16 %v195
    %v362 = vunpack.c.l.b16 %v196
    %v363 = vunpack.c.h.b16 %v196
    %v364 = vunpack.c.l.b16 %v197
    %v365 = vunpack.c.h.b16 %v197
    %v366 = vunpack.c.l.b16 %v198
    %v367 = vunpack.c.h.b16 %v198
    %v368 = vunpack.c.l.b16 %v199
    %v369 = vunpack.c.h.b16 %v199
    %v370 = vunpack.c.l.b16 %v200
    %v371 = vunpack.c.h.b16 %v200
    %v372 = vunpack.c.l.b16 %v201
    %v373 = vunpack.c.h.b16 %v201
    %v374 = vunpack.c.l.b16 %v202
    %v375 = vunpack.c.h.b16 %v202
    %v376 = vunpack.c.l.b16 %v203
    %v377 = vunpack.c.h.b16 %v203
    %v378 = vunpack.c.l.b16 %v204
    %v379 = vunpack.c.h.b16 %v204
    %v380 = vunpack.c.l.b16 %v205
    %v381 = vunpack.c.h.b16 %v205
    %v382 = vpack.c.b16 %v352, %v350
    %v383 = vpack.c.b16 %v353, %v351
    %v384 = vpack.c.b16 %v356, %v354
    %v385 = vpack.c.b16 %v357, %v355
    %v386 = vpack.c.b16 %v360, %v358
    %v387 = vpack.c.b16 %v361, %v359
    %v388 = vpack.c.b16 %v364, %v362
    %v389 = vpack.c.b16 %v365, %v363
    %v390 = vpack.c.b16 %v368, %v366
    %v391 = vpack.c.b16 %v369, %v367
    %v392 = vpack.c.b16 %v372, %v370
    %v393 = vpack.c.b16 %v373, %v371
    %v394 = vpack.c.b16 %v376, %v374
    %v395 = vpack.c.b16 %v377, %v375
    %v396 = vpack.c.b16 %v380, %v378
    %v397 = vpack.c.b16 %v381, %v379
    %414 = vmatpush.bf16.msra.mxu0 %v396
    %415 = vmatpush.bf16.msra.mxu0 %v394
    %416 = vmatpush.bf16.msra.mxu0 %v392
    %417 = vmatpush.bf16.msra.mxu0 %v390
    %418 = vmatpush.bf16.msra.mxu0 %v388
    %419 = vmatpush.bf16.msra.mxu0 %v386
    %420 = vmatpush.bf16.msra.mxu0 %v384
    %421 = vmatpush.bf16.msra.mxu0 %v382
    %422 = vmatmul.bf16.gmra.mxu0 %v189
    %v423 = vpop.f32.mrf.mxu0
    %v424 = vadd.f32 %v316, %v423
    %v425 = vpop.f32.mrf.mxu0
    %v426 = vadd.f32 %v318, %v425
    %427 = vdwg.mxu0
    %428 = vmatpush.bf16.msra.mxu0 %v397
    %429 = vmatpush.bf16.msra.mxu0 %v395
    %430 = vmatpush.bf16.msra.mxu0 %v393
    %431 = vmatpush.bf16.msra.mxu0 %v391
    %432 = vmatpush.bf16.msra.mxu0 %v389
    %433 = vmatpush.bf16.msra.mxu0 %v387
    %434 = vmatpush.bf16.msra.mxu0 %v385
    %435 = vmatpush.bf16.msra.mxu0 %v383
    %436 = vmatmul.bf16.gmra.mxu0 %v189
    %v437 = vpop.f32.mrf.mxu0
    %v438 = vadd.f32 %v330, %v437
    %v439 = vpop.f32.mrf.mxu0
    %v440 = vadd.f32 %v332, %v439
    %441 = vdwg.mxu0
    %v442 = vld [vmem:[#allocation2 + $0x2] sm:$0xff]
    %v443 = vld [vmem:[#allocation2 + $0xa] sm:$0xff]
    %v444 = vpack.c.bf16 %v443, %v442
    %s445 = scalar_lea.vmem [#allocation5], 256
    %v446 = vld [vmem:[%s445] sm:$0xff]
    %v447 = vld [vmem:[%s445 + $0x8] sm:$0xff]
    %v448 = vld [vmem:[%s445 + $0x10] sm:$0xff]
    %v449 = vld [vmem:[%s445 + $0x18] sm:$0xff]
    %v450 = vld [vmem:[%s445 + $0x20] sm:$0xff]
    %v451 = vld [vmem:[%s445 + $0x28] sm:$0xff]
    %v452 = vld [vmem:[%s445 + $0x30] sm:$0xff]
    %v453 = vld [vmem:[%s445 + $0x38] sm:$0xff]
    %v454 = vld [vmem:[%s445 + $0x40] sm:$0xff]
    %v455 = vld [vmem:[%s445 + $0x48] sm:$0xff]
    %v456 = vld [vmem:[%s445 + $0x50] sm:$0xff]
    %v457 = vld [vmem:[%s445 + $0x58] sm:$0xff]
    %v458 = vld [vmem:[%s445 + $0x60] sm:$0xff]
    %v459 = vld [vmem:[%s445 + $0x68] sm:$0xff]
    %v460 = vld [vmem:[%s445 + $0x70] sm:$0xff]
    %v461 = vld [vmem:[%s445 + $0x78] sm:$0xff]
    %v478 = vunpack.c.l.b16 %v446
    %v479 = vunpack.c.h.b16 %v446
    %v480 = vunpack.c.l.b16 %v447
    %v481 = vunpack.c.h.b16 %v447
    %v482 = vunpack.c.l.b16 %v448
    %v483 = vunpack.c.h.b16 %v448
    %v484 = vunpack.c.l.b16 %v449
    %v485 = vunpack.c.h.b16 %v449
    %v486 = vunpack.c.l.b16 %v450
    %v487 = vunpack.c.h.b16 %v450
    %v488 = vunpack.c.l.b16 %v451
    %v489 = vunpack.c.h.b16 %v451
    %v490 = vunpack.c.l.b16 %v452
    %v491 = vunpack.c.h.b16 %v452
    %v492 = vunpack.c.l.b16 %v453
    %v493 = vunpack.c.h.b16 %v453
    %v494 = vunpack.c.l.b16 %v454
    %v495 = vunpack.c.h.b16 %v454
    %v496 = vunpack.c.l.b16 %v455
    %v497 = vunpack.c.h.b16 %v455
    %v498 = vunpack.c.l.b16 %v456
    %v499 = vunpack.c.h.b16 %v456
    %v500 = vunpack.c.l.b16 %v457
    %v501 = vunpack.c.h.b16 %v457
    %v502 = vunpack.c.l.b16 %v458
    %v503 = vunpack.c.h.b16 %v458
    %v504 = vunpack.c.l.b16 %v459
    %v505 = vunpack.c.h.b16 %v459
    %v506 = vunpack.c.l.b16 %v460
    %v507 = vunpack.c.h.b16 %v460
    %v508 = vunpack.c.l.b16 %v461
    %v509 = vunpack.c.h.b16 %v461
    %v510 = vpack.c.b16 %v480, %v478
    %v511 = vpack.c.b16 %v481, %v479
    %v512 = vpack.c.b16 %v484, %v482
    %v513 = vpack.c.b16 %v485, %v483
    %v514 = vpack.c.b16 %v488, %v486
    %v515 = vpack.c.b16 %v489, %v487
    %v516 = vpack.c.b16 %v492, %v490
    %v517 = vpack.c.b16 %v493, %v491
    %v518 = vpack.c.b16 %v496, %v494
    %v519 = vpack.c.b16 %v497, %v495
    %v520 = vpack.c.b16 %v500, %v498
    %v521 = vpack.c.b16 %v501, %v499
    %v522 = vpack.c.b16 %v504, %v502
    %v523 = vpack.c.b16 %v505, %v503
    %v524 = vpack.c.b16 %v508, %v506
    %v525 = vpack.c.b16 %v509, %v507
    %542 = vmatpush.bf16.msra.mxu0 %v524
    %543 = vmatpush.bf16.msra.mxu0 %v522
    %544 = vmatpush.bf16.msra.mxu0 %v520
    %545 = vmatpush.bf16.msra.mxu0 %v518
    %546 = vmatpush.bf16.msra.mxu0 %v516
    %547 = vmatpush.bf16.msra.mxu0 %v514
    %548 = vmatpush.bf16.msra.mxu0 %v512
    %549 = vmatpush.bf16.msra.mxu0 %v510
    %550 = vmatmul.bf16.gmra.mxu0 %v444
    %v551 = vpop.f32.mrf.mxu0
    %v552 = vadd.f32 0.0, %v551
    %v553 = vpop.f32.mrf.mxu0
    %v554 = vadd.f32 0.0, %v553
    %555 = vdwg.mxu0
    %556 = vmatpush.bf16.msra.mxu0 %v525
    %557 = vmatpush.bf16.msra.mxu0 %v523
    %558 = vmatpush.bf16.msra.mxu0 %v521
    %559 = vmatpush.bf16.msra.mxu0 %v519
    %560 = vmatpush.bf16.msra.mxu0 %v517
    %561 = vmatpush.bf16.msra.mxu0 %v515
    %562 = vmatpush.bf16.msra.mxu0 %v513
    %563 = vmatpush.bf16.msra.mxu0 %v511
    %564 = vmatmul.bf16.gmra.mxu0 %v444
    %v565 = vpop.f32.mrf.mxu0
    %v566 = vadd.f32 0.0, %v565
    %v567 = vpop.f32.mrf.mxu0
    %v568 = vadd.f32 0.0, %v567
    %569 = vdwg.mxu0
    %v570 = vadd.f32 %v424, %v552
    %v571 = vadd.f32 %v438, %v566
    %v572 = vadd.f32 %v426, %v554
    %v573 = vadd.f32 %v440, %v568
    %v574 = vld [vmem:[#allocation2 + $0x3] sm:$0xff]
    %v575 = vld [vmem:[#allocation2 + $0xb] sm:$0xff]
    %v576 = vpack.c.bf16 %v575, %v574
    %s577 = scalar_lea.vmem [#allocation5], 384
    %v578 = vld [vmem:[%s577] sm:$0xff]
    %v579 = vld [vmem:[%s577 + $0x8] sm:$0xff]
    %v580 = vld [vmem:[%s577 + $0x10] sm:$0xff]
    %v581 = vld [vmem:[%s577 + $0x18] sm:$0xff]
    %v582 = vld [vmem:[%s577 + $0x20] sm:$0xff]
    %v583 = vld [vmem:[%s577 + $0x28] sm:$0xff]
    %v584 = vld [vmem:[%s577 + $0x30] sm:$0xff]
    %v585 = vld [vmem:[%s577 + $0x38] sm:$0xff]
    %v586 = vld [vmem:[%s577 + $0x40] sm:$0xff]
    %v587 = vld [vmem:[%s577 + $0x48] sm:$0xff]
    %v588 = vld [vmem:[%s577 + $0x50] sm:$0xff]
    %v589 = vld [vmem:[%s577 + $0x58] sm:$0xff]
    %v590 = vld [vmem:[%s577 + $0x60] sm:$0xff]
    %v591 = vld [vmem:[%s577 + $0x68] sm:$0xff]
    %v592 = vld [vmem:[%s577 + $0x70] sm:$0xff]
    %v593 = vld [vmem:[%s577 + $0x78] sm:$0xff]
    %v610 = vunpack.c.l.b16 %v578
    %v611 = vunpack.c.h.b16 %v578
    %v612 = vunpack.c.l.b16 %v579
    %v613 = vunpack.c.h.b16 %v579
    %v614 = vunpack.c.l.b16 %v580
    %v615 = vunpack.c.h.b16 %v580
    %v616 = vunpack.c.l.b16 %v581
    %v617 = vunpack.c.h.b16 %v581
    %v618 = vunpack.c.l.b16 %v582
    %v619 = vunpack.c.h.b16 %v582
    %v620 = vunpack.c.l.b16 %v583
    %v621 = vunpack.c.h.b16 %v583
    %v622 = vunpack.c.l.b16 %v584
    %v623 = vunpack.c.h.b16 %v584
    %v624 = vunpack.c.l.b16 %v585
    %v625 = vunpack.c.h.b16 %v585
    %v626 = vunpack.c.l.b16 %v586
    %v627 = vunpack.c.h.b16 %v586
    %v628 = vunpack.c.l.b16 %v587
    %v629 = vunpack.c.h.b16 %v587
    %v630 = vunpack.c.l.b16 %v588
    %v631 = vunpack.c.h.b16 %v588
    %v632 = vunpack.c.l.b16 %v589
    %v633 = vunpack.c.h.b16 %v589
    %v634 = vunpack.c.l.b16 %v590
    %v635 = vunpack.c.h.b16 %v590
    %v636 = vunpack.c.l.b16 %v591
    %v637 = vunpack.c.h.b16 %v591
    %v638 = vunpack.c.l.b16 %v592
    %v639 = vunpack.c.h.b16 %v592
    %v640 = vunpack.c.l.b16 %v593
    %v641 = vunpack.c.h.b16 %v593
    %v642 = vpack.c.b16 %v612, %v610
    %v643 = vpack.c.b16 %v613, %v611
    %v644 = vpack.c.b16 %v616, %v614
    %v645 = vpack.c.b16 %v617, %v615
    %v646 = vpack.c.b16 %v620, %v618
    %v647 = vpack.c.b16 %v621, %v619
    %v648 = vpack.c.b16 %v624, %v622
    %v649 = vpack.c.b16 %v625, %v623
    %v650 = vpack.c.b16 %v628, %v626
    %v651 = vpack.c.b16 %v629, %v627
    %v652 = vpack.c.b16 %v632, %v630
    %v653 = vpack.c.b16 %v633, %v631
    %v654 = vpack.c.b16 %v636, %v634
    %v655 = vpack.c.b16 %v637, %v635
    %v656 = vpack.c.b16 %v640, %v638
    %v657 = vpack.c.b16 %v641, %v639
    %674 = vmatpush.bf16.msra.mxu0 %v656
    %675 = vmatpush.bf16.msra.mxu0 %v654
    %676 = vmatpush.bf16.msra.mxu0 %v652
    %677 = vmatpush.bf16.msra.mxu0 %v650
    %678 = vmatpush.bf16.msra.mxu0 %v648
    %679 = vmatpush.bf16.msra.mxu0 %v646
    %680 = vmatpush.bf16.msra.mxu0 %v644
    %681 = vmatpush.bf16.msra.mxu0 %v642
    %682 = vmatmul.bf16.gmra.mxu0 %v576
    %v683 = vpop.f32.mrf.mxu0
    %v684 = vadd.f32 0.0, %v683
    %v685 = vpop.f32.mrf.mxu0
    %v686 = vadd.f32 0.0, %v685
    %687 = vdwg.mxu0
    %688 = vmatpush.bf16.msra.mxu0 %v657
    %689 = vmatpush.bf16.msra.mxu0 %v655
    %690 = vmatpush.bf16.msra.mxu0 %v653
    %691 = vmatpush.bf16.msra.mxu0 %v651
    %692 = vmatpush.bf16.msra.mxu0 %v649
    %693 = vmatpush.bf16.msra.mxu0 %v647
    %694 = vmatpush.bf16.msra.mxu0 %v645
    %695 = vmatpush.bf16.msra.mxu0 %v643
    %696 = vmatmul.bf16.gmra.mxu0 %v576
    %v697 = vpop.f32.mrf.mxu0
    %v698 = vadd.f32 0.0, %v697
    %v699 = vpop.f32.mrf.mxu0
    %v700 = vadd.f32 0.0, %v699
    %701 = vdwg.mxu0
    %v702 = vadd.f32 %v570, %v684
    %v703 = vadd.f32 %v571, %v698
    %v704 = vadd.f32 %v572, %v686
    %v705 = vadd.f32 %v573, %v700
    %v706 = vld [vmem:[#allocation2 + $0x4] sm:$0xff]
    %v707 = vld [vmem:[#allocation2 + $0xc] sm:$0xff]
    %v708 = vpack.c.bf16 %v707, %v706
    %s709 = scalar_lea.vmem [#allocation5], 512
    %v710 = vld [vmem:[%s709] sm:$0xff]
    %v711 = vld [vmem:[%s709 + $0x8] sm:$0xff]
    %v712 = vld [vmem:[%s709 + $0x10] sm:$0xff]
    %v713 = vld [vmem:[%s709 + $0x18] sm:$0xff]
    %v714 = vld [vmem:[%s709 + $0x20] sm:$0xff]
    %v715 = vld [vmem:[%s709 + $0x28] sm:$0xff]
    %v716 = vld [vmem:[%s709 + $0x30] sm:$0xff]
    %v717 = vld [vmem:[%s709 + $0x38] sm:$0xff]
    %v718 = vld [vmem:[%s709 + $0x40] sm:$0xff]
    %v719 = vld [vmem:[%s709 + $0x48] sm:$0xff]
    %v720 = vld [vmem:[%s709 + $0x50] sm:$0xff]
    %v721 = vld [vmem:[%s709 + $0x58] sm:$0xff]
    %v722 = vld [vmem:[%s709 + $0x60] sm:$0xff]
    %v723 = vld [vmem:[%s709 + $0x68] sm:$0xff]
    %v724 = vld [vmem:[%s709 + $0x70] sm:$0xff]
    %v725 = vld [vmem:[%s709 + $0x78] sm:$0xff]
    %v742 = vunpack.c.l.b16 %v710
    %v743 = vunpack.c.h.b16 %v710
    %v744 = vunpack.c.l.b16 %v711
    %v745 = vunpack.c.h.b16 %v711
    %v746 = vunpack.c.l.b16 %v712
    %v747 = vunpack.c.h.b16 %v712
    %v748 = vunpack.c.l.b16 %v713
    %v749 = vunpack.c.h.b16 %v713
    %v750 = vunpack.c.l.b16 %v714
    %v751 = vunpack.c.h.b16 %v714
    %v752 = vunpack.c.l.b16 %v715
    %v753 = vunpack.c.h.b16 %v715
    %v754 = vunpack.c.l.b16 %v716
    %v755 = vunpack.c.h.b16 %v716
    %v756 = vunpack.c.l.b16 %v717
    %v757 = vunpack.c.h.b16 %v717
    %v758 = vunpack.c.l.b16 %v718
    %v759 = vunpack.c.h.b16 %v718
    %v760 = vunpack.c.l.b16 %v719
    %v761 = vunpack.c.h.b16 %v719
    %v762 = vunpack.c.l.b16 %v720
    %v763 = vunpack.c.h.b16 %v720
    %v764 = vunpack.c.l.b16 %v721
    %v765 = vunpack.c.h.b16 %v721
    %v766 = vunpack.c.l.b16 %v722
    %v767 = vunpack.c.h.b16 %v722
    %v768 = vunpack.c.l.b16 %v723
    %v769 = vunpack.c.h.b16 %v723
    %v770 = vunpack.c.l.b16 %v724
    %v771 = vunpack.c.h.b16 %v724
    %v772 = vunpack.c.l.b16 %v725
    %v773 = vunpack.c.h.b16 %v725
    %v774 = vpack.c.b16 %v744, %v742
    %v775 = vpack.c.b16 %v745, %v743
    %v776 = vpack.c.b16 %v748, %v746
    %v777 = vpack.c.b16 %v749, %v747
    %v778 = vpack.c.b16 %v752, %v750
    %v779 = vpack.c.b16 %v753, %v751
    %v780 = vpack.c.b16 %v756, %v754
    %v781 = vpack.c.b16 %v757, %v755
    %v782 = vpack.c.b16 %v760, %v758
    %v783 = vpack.c.b16 %v761, %v759
    %v784 = vpack.c.b16 %v764, %v762
    %v785 = vpack.c.b16 %v765, %v763
    %v786 = vpack.c.b16 %v768, %v766
    %v787 = vpack.c.b16 %v769, %v767
    %v788 = vpack.c.b16 %v772, %v770
    %v789 = vpack.c.b16 %v773, %v771
    %806 = vmatpush.bf16.msra.mxu0 %v788
    %807 = vmatpush.bf16.msra.mxu0 %v786
    %808 = vmatpush.bf16.msra.mxu0 %v784
    %809 = vmatpush.bf16.msra.mxu0 %v782
    %810 = vmatpush.bf16.msra.mxu0 %v780
    %811 = vmatpush.bf16.msra.mxu0 %v778
    %812 = vmatpush.bf16.msra.mxu0 %v776
    %813 = vmatpush.bf16.msra.mxu0 %v774
    %814 = vmatmul.bf16.gmra.mxu0 %v708
    %v815 = vpop.f32.mrf.mxu0
    %v816 = vadd.f32 0.0, %v815
    %v817 = vpop.f32.mrf.mxu0
    %v818 = vadd.f32 0.0, %v817
    %819 = vdwg.mxu0
    %820 = vmatpush.bf16.msra.mxu0 %v789
    %821 = vmatpush.bf16.msra.mxu0 %v787
    %822 = vmatpush.bf16.msra.mxu0 %v785
    %823 = vmatpush.bf16.msra.mxu0 %v783
    %824 = vmatpush.bf16.msra.mxu0 %v781
    %825 = vmatpush.bf16.msra.mxu0 %v779
    %826 = vmatpush.bf16.msra.mxu0 %v777
    %827 = vmatpush.bf16.msra.mxu0 %v775
    %828 = vmatmul.bf16.gmra.mxu0 %v708
    %v829 = vpop.f32.mrf.mxu0
    %v830 = vadd.f32 0.0, %v829
    %v831 = vpop.f32.mrf.mxu0
    %v832 = vadd.f32 0.0, %v831
    %833 = vdwg.mxu0
    %v834 = vadd.f32 %v702, %v816
    %v835 = vadd.f32 %v703, %v830
    %v836 = vadd.f32 %v704, %v818
    %v837 = vadd.f32 %v705, %v832
    %v838 = vld [vmem:[%s6] sm:$0x3]
    %v840 = vperm.slane %v838, 0
    %v841 = vperm.slane %v838, 1
    %v844 = vadd.f32 %v834, %v840
    %v845 = vadd.f32 %v835, %v841
    %v846 = vadd.f32 %v836, %v840
    %v847 = vadd.f32 %v837, %v841
    %v848 = vld [vmem:[%s11] sm:$0xff]
    %v849 = vld [vmem:[%s11 + $0x8] sm:$0xff]
    %v850 = vld [vmem:[%s11 + $0x10] sm:$0xff]
    %v851 = vld [vmem:[%s11 + $0x18] sm:$0xff]
    %v852 = vmul.f32 %v844, %v848
    %v853 = vmul.f32 %v845, %v849
    %v854 = vmul.f32 %v846, %v850
    %v855 = vmul.f32 %v847, %v851
    %v856 = vlaneseq
    %vm857 = vcmp.ge.s32.totalorder %v856, 0
    %vm858 = vcmp.lt.s32.totalorder %v856, 256
    %vm859 = vmand %vm857, %vm858
    %860 = vst.msk [vmem:[#allocation3] ss:$8 sm:$0x3] %vm859, 0.0
    %861 = vst.msk [vmem:[#allocation3] ss:$8 sm:$0x0] %vm859, 0.0
    %s862 = scalar_lea.vmem [#allocation3], 7
    %863 = vst.msk [vmem:[%s862] ss:$8 sm:$0x3] %vm859, 0.0
    %864 = vst.msk [vmem:[%s862] ss:$8 sm:$0x0] %vm859, 0.0
    %v867 = vrot.slane %v852, 7
    %v868 = vrot.slane %v853, 7
    %871 = vst [vmem:[#allocation3] sm:$0x7e] %v867
    %872 = vst [vmem:[#allocation3 + $0x8] sm:$0x7e] %v868
    %s873 = scalar_lea.vmem [#allocation3], 16
    %874 = vst.msk [vmem:[%s873] ss:$8 sm:$0x3] %vm859, 0.0
    %875 = vst.msk [vmem:[%s873] ss:$8 sm:$0x0] %vm859, 0.0
    %s876 = scalar_lea.vmem [#allocation3], 23
    %877 = vst.msk [vmem:[%s876] ss:$8 sm:$0x3] %vm859, 0.0
    %878 = vst.msk [vmem:[%s876] ss:$8 sm:$0x0] %vm859, 0.0
    %v881 = vrot.slane %v854, 1
    %v882 = vrot.slane %v855, 1
    %885 = vst [vmem:[#allocation3 + $0x10] sm:$0x7e] %v881
    %886 = vst [vmem:[#allocation3 + $0x18] sm:$0x7e] %v882
    %v887 = vld [vmem:[#allocation3] sm:$0xff]
    %v888 = vld [vmem:[#allocation3 + $0x8] sm:$0xff]
    %v889 = vld [vmem:[#allocation3 + $0x10] sm:$0x3f]
    %v890 = vld [vmem:[#allocation3 + $0x18] sm:$0x3f]
    %v891 = vpack.c.bf16 %v889, %v887
    %v892 = vpack.c.bf16 %v890, %v888
    %v893 = vld [vmem:[#allocation7] sm:$0xff]
    %v894 = vld [vmem:[#allocation7 + $0x8] sm:$0xff]
    %v895 = vld [vmem:[#allocation7 + $0x10] sm:$0xff]
    %v896 = vld [vmem:[#allocation7 + $0x18] sm:$0xff]
    %v897 = vld [vmem:[#allocation7 + $0x20] sm:$0xff]
    %v898 = vld [vmem:[#allocation7 + $0x28] sm:$0xff]
    %v899 = vld [vmem:[#allocation7 + $0x30] sm:$0xff]
    %v900 = vld [vmem:[#allocation7 + $0x38] sm:$0xff]
    %v901 = vld [vmem:[#allocation7 + $0x40] sm:$0xff]
    %v902 = vld [vmem:[#allocation7 + $0x48] sm:$0xff]
    %v903 = vld [vmem:[#allocation7 + $0x50] sm:$0xff]
    %v904 = vld [vmem:[#allocation7 + $0x58] sm:$0xff]
    %v905 = vld [vmem:[#allocation7 + $0x60] sm:$0xff]
    %v906 = vld [vmem:[#allocation7 + $0x68] sm:$0xff]
    %v907 = vld [vmem:[#allocation7 + $0x70] sm:$0xff]
    %v908 = vld [vmem:[#allocation7 + $0x78] sm:$0xff]
    %v909 = vld [vmem:[#allocation7 + $0x80] sm:$0xff]
    %v910 = vld [vmem:[#allocation7 + $0x88] sm:$0xff]
    %v911 = vld [vmem:[#allocation7 + $0x90] sm:$0xff]
    %v912 = vld [vmem:[#allocation7 + $0x98] sm:$0xff]
    %v913 = vld [vmem:[#allocation7 + $0xa0] sm:$0xff]
    %v914 = vld [vmem:[#allocation7 + $0xa8] sm:$0xff]
    %v915 = vld [vmem:[#allocation7 + $0xb0] sm:$0xff]
    %v916 = vld [vmem:[#allocation7 + $0xb8] sm:$0xff]
    %v917 = vld [vmem:[#allocation7 + $0xc0] sm:$0xff]
    %v918 = vld [vmem:[#allocation7 + $0xc8] sm:$0xff]
    %v919 = vld [vmem:[#allocation7 + $0xd0] sm:$0xff]
    %v920 = vld [vmem:[#allocation7 + $0xd8] sm:$0xff]
    %v921 = vld [vmem:[#allocation7 + $0xe0] sm:$0xff]
    %v922 = vld [vmem:[#allocation7 + $0xe8] sm:$0xff]
    %v923 = vld [vmem:[#allocation7 + $0xf0] sm:$0xff]
    %v924 = vld [vmem:[#allocation7 + $0xf8] sm:$0xff]
    %v925 = vld [vmem:[#allocation3] sm:$0xfe]
    %v926 = vld [vmem:[#allocation3 + $0x8] sm:$0xfe]
    %v927 = vld [vmem:[#allocation3 + $0x10] sm:$0x7f]
    %v928 = vld [vmem:[#allocation3 + $0x18] sm:$0x7f]
    %v929 = vpack.c.bf16 %v927, %v925
    %v930 = vpack.c.bf16 %v928, %v926
    %s931 = scalar_lea.vmem [#allocation7], 256
    %v932 = vld [vmem:[%s931] sm:$0xff]
    %v933 = vld [vmem:[%s931 + $0x8] sm:$0xff]
    %v934 = vld [vmem:[%s931 + $0x10] sm:$0xff]
    %v935 = vld [vmem:[%s931 + $0x18] sm:$0xff]
    %v936 = vld [vmem:[%s931 + $0x20] sm:$0xff]
    %v937 = vld [vmem:[%s931 + $0x28] sm:$0xff]
    %v938 = vld [vmem:[%s931 + $0x30] sm:$0xff]
    %v939 = vld [vmem:[%s931 + $0x38] sm:$0xff]
    %v940 = vld [vmem:[%s931 + $0x40] sm:$0xff]
    %v941 = vld [vmem:[%s931 + $0x48] sm:$0xff]
    %v942 = vld [vmem:[%s931 + $0x50] sm:$0xff]
    %v943 = vld [vmem:[%s931 + $0x58] sm:$0xff]
    %v944 = vld [vmem:[%s931 + $0x60] sm:$0xff]
    %v945 = vld [vmem:[%s931 + $0x68] sm:$0xff]
    %v946 = vld [vmem:[%s931 + $0x70] sm:$0xff]
    %v947 = vld [vmem:[%s931 + $0x78] sm:$0xff]
    %v948 = vld [vmem:[%s931 + $0x80] sm:$0xff]
    %v949 = vld [vmem:[%s931 + $0x88] sm:$0xff]
    %v950 = vld [vmem:[%s931 + $0x90] sm:$0xff]
    %v951 = vld [vmem:[%s931 + $0x98] sm:$0xff]
    %v952 = vld [vmem:[%s931 + $0xa0] sm:$0xff]
    %v953 = vld [vmem:[%s931 + $0xa8] sm:$0xff]
    %v954 = vld [vmem:[%s931 + $0xb0] sm:$0xff]
    %v955 = vld [vmem:[%s931 + $0xb8] sm:$0xff]
    %v956 = vld [vmem:[%s931 + $0xc0] sm:$0xff]
    %v957 = vld [vmem:[%s931 + $0xc8] sm:$0xff]
    %v958 = vld [vmem:[%s931 + $0xd0] sm:$0xff]
    %v959 = vld [vmem:[%s931 + $0xd8] sm:$0xff]
    %v960 = vld [vmem:[%s931 + $0xe0] sm:$0xff]
    %v961 = vld [vmem:[%s931 + $0xe8] sm:$0xff]
    %v962 = vld [vmem:[%s931 + $0xf0] sm:$0xff]
    %v963 = vld [vmem:[%s931 + $0xf8] sm:$0xff]
    %v965 = vshrl.u32 %v929, 16
    %v967 = vshll.u32 %v929, 16
    %v969 = vrot.slane %v967, 1
    %v970 = vor.u32 %v965, %v969
    %v972 = vshrl.u32 %v930, 16
    %v974 = vshll.u32 %v930, 16
    %v976 = vrot.slane %v974, 1
    %v977 = vor.u32 %v972, %v976
    %v1012 = vunpack.c.l.b16 %v932
    %v1013 = vunpack.c.h.b16 %v932
    %v1014 = vunpack.c.l.b16 %v933
    %v1015 = vunpack.c.h.b16 %v933
    %v1016 = vunpack.c.l.b16 %v934
    %v1017 = vunpack.c.h.b16 %v934
    %v1018 = vunpack.c.l.b16 %v935
    %v1019 = vunpack.c.h.b16 %v935
    %v1020 = vunpack.c.l.b16 %v936
    %v1021 = vunpack.c.h.b16 %v936
    %v1022 = vunpack.c.l.b16 %v937
    %v1023 = vunpack.c.h.b16 %v937
    %v1024 = vunpack.c.l.b16 %v938
    %v1025 = vunpack.c.h.b16 %v938
    %v1026 = vunpack.c.l.b16 %v939
    %v1027 = vunpack.c.h.b16 %v939
    %v1028 = vunpack.c.l.b16 %v940
    %v1029 = vunpack.c.h.b16 %v940
    %v1030 = vunpack.c.l.b16 %v941
    %v1031 = vunpack.c.h.b16 %v941
    %v1032 = vunpack.c.l.b16 %v942
    %v1033 = vunpack.c.h.b16 %v942
    %v1034 = vunpack.c.l.b16 %v943
    %v1035 = vunpack.c.h.b16 %v943
    %v1036 = vunpack.c.l.b16 %v944
    %v1037 = vunpack.c.h.b16 %v944
    %v1038 = vunpack.c.l.b16 %v945
    %v1039 = vunpack.c.h.b16 %v945
    %v1040 = vunpack.c.l.b16 %v946
    %v1041 = vunpack.c.h.b16 %v946
    %v1042 = vunpack.c.l.b16 %v947
    %v1043 = vunpack.c.h.b16 %v947
    %v1044 = vunpack.c.l.b16 %v948
    %v1045 = vunpack.c.h.b16 %v948
    %v1046 = vunpack.c.l.b16 %v949
    %v1047 = vunpack.c.h.b16 %v949
    %v1048 = vunpack.c.l.b16 %v950
    %v1049 = vunpack.c.h.b16 %v950
    %v1050 = vunpack.c.l.b16 %v951
    %v1051 = vunpack.c.h.b16 %v951
    %v1052 = vunpack.c.l.b16 %v952
    %v1053 = vunpack.c.h.b16 %v952
    %v1054 = vunpack.c.l.b16 %v953
    %v1055 = vunpack.c.h.b16 %v953
    %v1056 = vunpack.c.l.b16 %v954
    %v1057 = vunpack.c.h.b16 %v954
    %v1058 = vunpack.c.l.b16 %v955
    %v1059 = vunpack.c.h.b16 %v955
    %v1060 = vunpack.c.l.b16 %v956
    %v1061 = vunpack.c.h.b16 %v956
    %v1062 = vunpack.c.l.b16 %v957
    %v1063 = vunpack.c.h.b16 %v957
    %v1064 = vunpack.c.l.b16 %v958
    %v1065 = vunpack.c.h.b16 %v958
    %v1066 = vunpack.c.l.b16 %v959
    %v1067 = vunpack.c.h.b16 %v959
    %v1068 = vunpack.c.l.b16 %v960
    %v1069 = vunpack.c.h.b16 %v960
    %v1070 = vunpack.c.l.b16 %v961
    %v1071 = vunpack.c.h.b16 %v961
    %v1072 = vunpack.c.l.b16 %v962
    %v1073 = vunpack.c.h.b16 %v962
    %v1074 = vunpack.c.l.b16 %v963
    %v1075 = vunpack.c.h.b16 %v963
    %v1076 = vpack.c.b16 %v1014, %v1012
    %v1077 = vpack.c.b16 %v1015, %v1013
    %v1078 = vpack.c.b16 %v1018, %v1016
    %v1079 = vpack.c.b16 %v1019, %v1017
    %v1080 = vpack.c.b16 %v1022, %v1020
    %v1081 = vpack.c.b16 %v1023, %v1021
    %v1082 = vpack.c.b16 %v1026, %v1024
    %v1083 = vpack.c.b16 %v1027, %v1025
    %v1084 = vpack.c.b16 %v1030, %v1028
    %v1085 = vpack.c.b16 %v1031, %v1029
    %v1086 = vpack.c.b16 %v1034, %v1032
    %v1087 = vpack.c.b16 %v1035, %v1033
    %v1088 = vpack.c.b16 %v1038, %v1036
    %v1089 = vpack.c.b16 %v1039, %v1037
    %v1090 = vpack.c.b16 %v1042, %v1040
    %v1091 = vpack.c.b16 %v1043, %v1041
    %v1092 = vpack.c.b16 %v1046, %v1044
    %v1093 = vpack.c.b16 %v1047, %v1045
    %v1094 = vpack.c.b16 %v1050, %v1048
    %v1095 = vpack.c.b16 %v1051, %v1049
    %v1096 = vpack.c.b16 %v1054, %v1052
    %v1097 = vpack.c.b16 %v1055, %v1053
    %v1098 = vpack.c.b16 %v1058, %v1056
    %v1099 = vpack.c.b16 %v1059, %v1057
    %v1100 = vpack.c.b16 %v1062, %v1060
    %v1101 = vpack.c.b16 %v1063, %v1061
    %v1102 = vpack.c.b16 %v1066, %v1064
    %v1103 = vpack.c.b16 %v1067, %v1065
    %v1104 = vpack.c.b16 %v1070, %v1068
    %v1105 = vpack.c.b16 %v1071, %v1069
    %v1106 = vpack.c.b16 %v1074, %v1072
    %v1107 = vpack.c.b16 %v1075, %v1073
    %1140 = vmatpush.bf16.msra.mxu0 %v1090
    %1141 = vmatpush.bf16.msra.mxu0 %v1088
    %1142 = vmatpush.bf16.msra.mxu0 %v1086
    %1143 = vmatpush.bf16.msra.mxu0 %v1084
    %1144 = vmatpush.bf16.msra.mxu0 %v1082
    %1145 = vmatpush.bf16.msra.mxu0 %v1080
    %1146 = vmatpush.bf16.msra.mxu0 %v1078
    %1147 = vmatpush.bf16.msra.mxu0 %v1076
    %1148 = vmatmul.bf16.gmra.mxu0 %v970
    %v1149 = vpop.f32.mrf.mxu0
    %v1150 = vadd.f32 0.0, %v1149
    %v1151 = vpop.f32.mrf.mxu0
    %v1152 = vadd.f32 0.0, %v1151
    %1153 = vdwg.mxu0
    %1154 = vmatpush.bf16.msra.mxu0 %v1106
    %1155 = vmatpush.bf16.msra.mxu0 %v1104
    %1156 = vmatpush.bf16.msra.mxu0 %v1102
    %1157 = vmatpush.bf16.msra.mxu0 %v1100
    %1158 = vmatpush.bf16.msra.mxu0 %v1098
    %1159 = vmatpush.bf16.msra.mxu0 %v1096
    %1160 = vmatpush.bf16.msra.mxu0 %v1094
    %1161 = vmatpush.bf16.msra.mxu0 %v1092
    %1162 = vmatmul.bf16.gmra.mxu0 %v977
    %v1163 = vpop.f32.mrf.mxu0
    %v1164 = vadd.f32 %v1150, %v1163
    %v1165 = vpop.f32.mrf.mxu0
    %v1166 = vadd.f32 %v1152, %v1165
    %1167 = vdwg.mxu0
    %1168 = vmatpush.bf16.msra.mxu0 %v1091
    %1169 = vmatpush.bf16.msra.mxu0 %v1089
    %1170 = vmatpush.bf16.msra.mxu0 %v1087
    %1171 = vmatpush.bf16.msra.mxu0 %v1085
    %1172 = vmatpush.bf16.msra.mxu0 %v1083
    %1173 = vmatpush.bf16.msra.mxu0 %v1081
    %1174 = vmatpush.bf16.msra.mxu0 %v1079
    %1175 = vmatpush.bf16.msra.mxu0 %v1077
    %1176 = vmatmul.bf16.gmra.mxu0 %v970
    %v1177 = vpop.f32.mrf.mxu0
    %v1178 = vadd.f32 0.0, %v1177
    %v1179 = vpop.f32.mrf.mxu0
    %v1180 = vadd.f32 0.0, %v1179
    %1181 = vdwg.mxu0
    %1182 = vmatpush.bf16.msra.mxu0 %v1107
    %1183 = vmatpush.bf16.msra.mxu0 %v1105
    %1184 = vmatpush.bf16.msra.mxu0 %v1103
    %1185 = vmatpush.bf16.msra.mxu0 %v1101
    %1186 = vmatpush.bf16.msra.mxu0 %v1099
    %1187 = vmatpush.bf16.msra.mxu0 %v1097
    %1188 = vmatpush.bf16.msra.mxu0 %v1095
    %1189 = vmatpush.bf16.msra.mxu0 %v1093
    %1190 = vmatmul.bf16.gmra.mxu0 %v977
    %v1191 = vpop.f32.mrf.mxu0
    %v1192 = vadd.f32 %v1178, %v1191
    %v1193 = vpop.f32.mrf.mxu0
    %v1194 = vadd.f32 %v1180, %v1193
    %1195 = vdwg.mxu0
    %v1228 = vunpack.c.l.b16 %v893
    %v1229 = vunpack.c.h.b16 %v893
    %v1230 = vunpack.c.l.b16 %v894
    %v1231 = vunpack.c.h.b16 %v894
    %v1232 = vunpack.c.l.b16 %v895
    %v1233 = vunpack.c.h.b16 %v895
    %v1234 = vunpack.c.l.b16 %v896
    %v1235 = vunpack.c.h.b16 %v896
    %v1236 = vunpack.c.l.b16 %v897
    %v1237 = vunpack.c.h.b16 %v897
    %v1238 = vunpack.c.l.b16 %v898
    %v1239 = vunpack.c.h.b16 %v898
    %v1240 = vunpack.c.l.b16 %v899
    %v1241 = vunpack.c.h.b16 %v899
    %v1242 = vunpack.c.l.b16 %v900
    %v1243 = vunpack.c.h.b16 %v900
    %v1244 = vunpack.c.l.b16 %v901
    %v1245 = vunpack.c.h.b16 %v901
    %v1246 = vunpack.c.l.b16 %v902
    %v1247 = vunpack.c.h.b16 %v902
    %v1248 = vunpack.c.l.b16 %v903
    %v1249 = vunpack.c.h.b16 %v903
    %v1250 = vunpack.c.l.b16 %v904
    %v1251 = vunpack.c.h.b16 %v904
    %v1252 = vunpack.c.l.b16 %v905
    %v1253 = vunpack.c.h.b16 %v905
    %v1254 = vunpack.c.l.b16 %v906
    %v1255 = vunpack.c.h.b16 %v906
    %v1256 = vunpack.c.l.b16 %v907
    %v1257 = vunpack.c.h.b16 %v907
    %v1258 = vunpack.c.l.b16 %v908
    %v1259 = vunpack.c.h.b16 %v908
    %v1260 = vunpack.c.l.b16 %v909
    %v1261 = vunpack.c.h.b16 %v909
    %v1262 = vunpack.c.l.b16 %v910
    %v1263 = vunpack.c.h.b16 %v910
    %v1264 = vunpack.c.l.b16 %v911
    %v1265 = vunpack.c.h.b16 %v911
    %v1266 = vunpack.c.l.b16 %v912
    %v1267 = vunpack.c.h.b16 %v912
    %v1268 = vunpack.c.l.b16 %v913
    %v1269 = vunpack.c.h.b16 %v913
    %v1270 = vunpack.c.l.b16 %v914
    %v1271 = vunpack.c.h.b16 %v914
    %v1272 = vunpack.c.l.b16 %v915
    %v1273 = vunpack.c.h.b16 %v915
    %v1274 = vunpack.c.l.b16 %v916
    %v1275 = vunpack.c.h.b16 %v916
    %v1276 = vunpack.c.l.b16 %v917
    %v1277 = vunpack.c.h.b16 %v917
    %v1278 = vunpack.c.l.b16 %v918
    %v1279 = vunpack.c.h.b16 %v918
    %v1280 = vunpack.c.l.b16 %v919
    %v1281 = vunpack.c.h.b16 %v919
    %v1282 = vunpack.c.l.b16 %v920
    %v1283 = vunpack.c.h.b16 %v920
    %v1284 = vunpack.c.l.b16 %v921
    %v1285 = vunpack.c.h.b16 %v921
    %v1286 = vunpack.c.l.b16 %v922
    %v1287 = vunpack.c.h.b16 %v922
    %v1288 = vunpack.c.l.b16 %v923
    %v1289 = vunpack.c.h.b16 %v923
    %v1290 = vunpack.c.l.b16 %v924
    %v1291 = vunpack.c.h.b16 %v924
    %v1292 = vpack.c.b16 %v1230, %v1228
    %v1293 = vpack.c.b16 %v1231, %v1229
    %v1294 = vpack.c.b16 %v1234, %v1232
    %v1295 = vpack.c.b16 %v1235, %v1233
    %v1296 = vpack.c.b16 %v1238, %v1236
    %v1297 = vpack.c.b16 %v1239, %v1237
    %v1298 = vpack.c.b16 %v1242, %v1240
    %v1299 = vpack.c.b16 %v1243, %v1241
    %v1300 = vpack.c.b16 %v1246, %v1244
    %v1301 = vpack.c.b16 %v1247, %v1245
    %v1302 = vpack.c.b16 %v1250, %v1248
    %v1303 = vpack.c.b16 %v1251, %v1249
    %v1304 = vpack.c.b16 %v1254, %v1252
    %v1305 = vpack.c.b16 %v1255, %v1253
    %v1306 = vpack.c.b16 %v1258, %v1256
    %v1307 = vpack.c.b16 %v1259, %v1257
    %v1308 = vpack.c.b16 %v1262, %v1260
    %v1309 = vpack.c.b16 %v1263, %v1261
    %v1310 = vpack.c.b16 %v1266, %v1264
    %v1311 = vpack.c.b16 %v1267, %v1265
    %v1312 = vpack.c.b16 %v1270, %v1268
    %v1313 = vpack.c.b16 %v1271, %v1269
    %v1314 = vpack.c.b16 %v1274, %v1272
    %v1315 = vpack.c.b16 %v1275, %v1273
    %v1316 = vpack.c.b16 %v1278, %v1276
    %v1317 = vpack.c.b16 %v1279, %v1277
    %v1318 = vpack.c.b16 %v1282, %v1280
    %v1319 = vpack.c.b16 %v1283, %v1281
    %v1320 = vpack.c.b16 %v1286, %v1284
    %v1321 = vpack.c.b16 %v1287, %v1285
    %v1322 = vpack.c.b16 %v1290, %v1288
    %v1323 = vpack.c.b16 %v1291, %v1289
    %1356 = vmatpush.bf16.msra.mxu0 %v1306
    %1357 = vmatpush.bf16.msra.mxu0 %v1304
    %1358 = vmatpush.bf16.msra.mxu0 %v1302
    %1359 = vmatpush.bf16.msra.mxu0 %v1300
    %1360 = vmatpush.bf16.msra.mxu0 %v1298
    %1361 = vmatpush.bf16.msra.mxu0 %v1296
    %1362 = vmatpush.bf16.msra.mxu0 %v1294
    %1363 = vmatpush.bf16.msra.mxu0 %v1292
    %1364 = vmatmul.bf16.gmra.mxu0 %v891
    %v1365 = vpop.f32.mrf.mxu0
    %v1366 = vadd.f32 %v1164, %v1365
    %v1367 = vpop.f32.mrf.mxu0
    %v1368 = vadd.f32 %v1166, %v1367
    %1369 = vdwg.mxu0
    %1370 = vmatpush.bf16.msra.mxu0 %v1322
    %1371 = vmatpush.bf16.msra.mxu0 %v1320
    %1372 = vmatpush.bf16.msra.mxu0 %v1318
    %1373 = vmatpush.bf16.msra.mxu0 %v1316
    %1374 = vmatpush.bf16.msra.mxu0 %v1314
    %1375 = vmatpush.bf16.msra.mxu0 %v1312
    %1376 = vmatpush.bf16.msra.mxu0 %v1310
    %1377 = vmatpush.bf16.msra.mxu0 %v1308
    %1378 = vmatmul.bf16.gmra.mxu0 %v892
    %v1379 = vpop.f32.mrf.mxu0
    %v1380 = vadd.f32 %v1366, %v1379
    %v1381 = vpop.f32.mrf.mxu0
    %v1382 = vadd.f32 %v1368, %v1381
    %1383 = vdwg.mxu0
    %1384 = vmatpush.bf16.msra.mxu0 %v1307
    %1385 = vmatpush.bf16.msra.mxu0 %v1305
    %1386 = vmatpush.bf16.msra.mxu0 %v1303
    %1387 = vmatpush.bf16.msra.mxu0 %v1301
    %1388 = vmatpush.bf16.msra.mxu0 %v1299
    %1389 = vmatpush.bf16.msra.mxu0 %v1297
    %1390 = vmatpush.bf16.msra.mxu0 %v1295
    %1391 = vmatpush.bf16.msra.mxu0 %v1293
    %1392 = vmatmul.bf16.gmra.mxu0 %v891
    %v1393 = vpop.f32.mrf.mxu0
    %v1394 = vadd.f32 %v1192, %v1393
    %v1395 = vpop.f32.mrf.mxu0
    %v1396 = vadd.f32 %v1194, %v1395
    %1397 = vdwg.mxu0
    %1398 = vmatpush.bf16.msra.mxu0 %v1323
    %1399 = vmatpush.bf16.msra.mxu0 %v1321
    %1400 = vmatpush.bf16.msra.mxu0 %v1319
    %1401 = vmatpush.bf16.msra.mxu0 %v1317
    %1402 = vmatpush.bf16.msra.mxu0 %v1315
    %1403 = vmatpush.bf16.msra.mxu0 %v1313
    %1404 = vmatpush.bf16.msra.mxu0 %v1311
    %1405 = vmatpush.bf16.msra.mxu0 %v1309
    %1406 = vmatmul.bf16.gmra.mxu0 %v892
    %v1407 = vpop.f32.mrf.mxu0
    %v1408 = vadd.f32 %v1394, %v1407
    %v1409 = vpop.f32.mrf.mxu0
    %v1410 = vadd.f32 %v1396, %v1409
    %1411 = vdwg.mxu0
    %v1412 = vld [vmem:[#allocation3] sm:$0xfc]
    %v1413 = vld [vmem:[#allocation3 + $0x8] sm:$0xfc]
    %v1414 = vld [vmem:[#allocation3 + $0x10] sm:$0xff]
    %v1415 = vld [vmem:[#allocation3 + $0x18] sm:$0xff]
    %v1416 = vpack.c.bf16 %v1414, %v1412
    %v1417 = vpack.c.bf16 %v1415, %v1413
    %s1418 = scalar_lea.vmem [#allocation7], 512
    %v1419 = vld [vmem:[%s1418] sm:$0xff]
    %v1420 = vld [vmem:[%s1418 + $0x8] sm:$0xff]
    %v1421 = vld [vmem:[%s1418 + $0x10] sm:$0xff]
    %v1422 = vld [vmem:[%s1418 + $0x18] sm:$0xff]
    %v1423 = vld [vmem:[%s1418 + $0x20] sm:$0xff]
    %v1424 = vld [vmem:[%s1418 + $0x28] sm:$0xff]
    %v1425 = vld [vmem:[%s1418 + $0x30] sm:$0xff]
    %v1426 = vld [vmem:[%s1418 + $0x38] sm:$0xff]
    %v1427 = vld [vmem:[%s1418 + $0x40] sm:$0xff]
    %v1428 = vld [vmem:[%s1418 + $0x48] sm:$0xff]
    %v1429 = vld [vmem:[%s1418 + $0x50] sm:$0xff]
    %v1430 = vld [vmem:[%s1418 + $0x58] sm:$0xff]
    %v1431 = vld [vmem:[%s1418 + $0x60] sm:$0xff]
    %v1432 = vld [vmem:[%s1418 + $0x68] sm:$0xff]
    %v1433 = vld [vmem:[%s1418 + $0x70] sm:$0xff]
    %v1434 = vld [vmem:[%s1418 + $0x78] sm:$0xff]
    %v1435 = vld [vmem:[%s1418 + $0x80] sm:$0xff]
    %v1436 = vld [vmem:[%s1418 + $0x88] sm:$0xff]
    %v1437 = vld [vmem:[%s1418 + $0x90] sm:$0xff]
    %v1438 = vld [vmem:[%s1418 + $0x98] sm:$0xff]
    %v1439 = vld [vmem:[%s1418 + $0xa0] sm:$0xff]
    %v1440 = vld [vmem:[%s1418 + $0xa8] sm:$0xff]
    %v1441 = vld [vmem:[%s1418 + $0xb0] sm:$0xff]
    %v1442 = vld [vmem:[%s1418 + $0xb8] sm:$0xff]
    %v1443 = vld [vmem:[%s1418 + $0xc0] sm:$0xff]
    %v1444 = vld [vmem:[%s1418 + $0xc8] sm:$0xff]
    %v1445 = vld [vmem:[%s1418 + $0xd0] sm:$0xff]
    %v1446 = vld [vmem:[%s1418 + $0xd8] sm:$0xff]
    %v1447 = vld [vmem:[%s1418 + $0xe0] sm:$0xff]
    %v1448 = vld [vmem:[%s1418 + $0xe8] sm:$0xff]
    %v1449 = vld [vmem:[%s1418 + $0xf0] sm:$0xff]
    %v1450 = vld [vmem:[%s1418 + $0xf8] sm:$0xff]
    %v1453 = vrot.slane %v1416, 1
    %v1454 = vrot.slane %v1417, 1
    %v1489 = vunpack.c.l.b16 %v1419
    %v1490 = vunpack.c.h.b16 %v1419
    %v1491 = vunpack.c.l.b16 %v1420
    %v1492 = vunpack.c.h.b16 %v1420
    %v1493 = vunpack.c.l.b16 %v1421
    %v1494 = vunpack.c.h.b16 %v1421
    %v1495 = vunpack.c.l.b16 %v1422
    %v1496 = vunpack.c.h.b16 %v1422
    %v1497 = vunpack.c.l.b16 %v1423
    %v1498 = vunpack.c.h.b16 %v1423
    %v1499 = vunpack.c.l.b16 %v1424
    %v1500 = vunpack.c.h.b16 %v1424
    %v1501 = vunpack.c.l.b16 %v1425
    %v1502 = vunpack.c.h.b16 %v1425
    %v1503 = vunpack.c.l.b16 %v1426
    %v1504 = vunpack.c.h.b16 %v1426
    %v1505 = vunpack.c.l.b16 %v1427
    %v1506 = vunpack.c.h.b16 %v1427
    %v1507 = vunpack.c.l.b16 %v1428
    %v1508 = vunpack.c.h.b16 %v1428
    %v1509 = vunpack.c.l.b16 %v1429
    %v1510 = vunpack.c.h.b16 %v1429
    %v1511 = vunpack.c.l.b16 %v1430
    %v1512 = vunpack.c.h.b16 %v1430
    %v1513 = vunpack.c.l.b16 %v1431
    %v1514 = vunpack.c.h.b16 %v1431
    %v1515 = vunpack.c.l.b16 %v1432
    %v1516 = vunpack.c.h.b16 %v1432
    %v1517 = vunpack.c.l.b16 %v1433
    %v1518 = vunpack.c.h.b16 %v1433
    %v1519 = vunpack.c.l.b16 %v1434
    %v1520 = vunpack.c.h.b16 %v1434
    %v1521 = vunpack.c.l.b16 %v1435
    %v1522 = vunpack.c.h.b16 %v1435
    %v1523 = vunpack.c.l.b16 %v1436
    %v1524 = vunpack.c.h.b16 %v1436
    %v1525 = vunpack.c.l.b16 %v1437
    %v1526 = vunpack.c.h.b16 %v1437
    %v1527 = vunpack.c.l.b16 %v1438
    %v1528 = vunpack.c.h.b16 %v1438
    %v1529 = vunpack.c.l.b16 %v1439
    %v1530 = vunpack.c.h.b16 %v1439
    %v1531 = vunpack.c.l.b16 %v1440
    %v1532 = vunpack.c.h.b16 %v1440
    %v1533 = vunpack.c.l.b16 %v1441
    %v1534 = vunpack.c.h.b16 %v1441
    %v1535 = vunpack.c.l.b16 %v1442
    %v1536 = vunpack.c.h.b16 %v1442
    %v1537 = vunpack.c.l.b16 %v1443
    %v1538 = vunpack.c.h.b16 %v1443
    %v1539 = vunpack.c.l.b16 %v1444
    %v1540 = vunpack.c.h.b16 %v1444
    %v1541 = vunpack.c.l.b16 %v1445
    %v1542 = vunpack.c.h.b16 %v1445
    %v1543 = vunpack.c.l.b16 %v1446
    %v1544 = vunpack.c.h.b16 %v1446
    %v1545 = vunpack.c.l.b16 %v1447
    %v1546 = vunpack.c.h.b16 %v1447
    %v1547 = vunpack.c.l.b16 %v1448
    %v1548 = vunpack.c.h.b16 %v1448
    %v1549 = vunpack.c.l.b16 %v1449
    %v1550 = vunpack.c.h.b16 %v1449
    %v1551 = vunpack.c.l.b16 %v1450
    %v1552 = vunpack.c.h.b16 %v1450
    %v1553 = vpack.c.b16 %v1491, %v1489
    %v1554 = vpack.c.b16 %v1492, %v1490
    %v1555 = vpack.c.b16 %v1495, %v1493
    %v1556 = vpack.c.b16 %v1496, %v1494
    %v1557 = vpack.c.b16 %v1499, %v1497
    %v1558 = vpack.c.b16 %v1500, %v1498
    %v1559 = vpack.c.b16 %v1503, %v1501
    %v1560 = vpack.c.b16 %v1504, %v1502
    %v1561 = vpack.c.b16 %v1507, %v1505
    %v1562 = vpack.c.b16 %v1508, %v1506
    %v1563 = vpack.c.b16 %v1511, %v1509
    %v1564 = vpack.c.b16 %v1512, %v1510
    %v1565 = vpack.c.b16 %v1515, %v1513
    %v1566 = vpack.c.b16 %v1516, %v1514
    %v1567 = vpack.c.b16 %v1519, %v1517
    %v1568 = vpack.c.b16 %v1520, %v1518
    %v1569 = vpack.c.b16 %v1523, %v1521
    %v1570 = vpack.c.b16 %v1524, %v1522
    %v1571 = vpack.c.b16 %v1527, %v1525
    %v1572 = vpack.c.b16 %v1528, %v1526
    %v1573 = vpack.c.b16 %v1531, %v1529
    %v1574 = vpack.c.b16 %v1532, %v1530
    %v1575 = vpack.c.b16 %v1535, %v1533
    %v1576 = vpack.c.b16 %v1536, %v1534
    %v1577 = vpack.c.b16 %v1539, %v1537
    %v1578 = vpack.c.b16 %v1540, %v1538
    %v1579 = vpack.c.b16 %v1543, %v1541
    %v1580 = vpack.c.b16 %v1544, %v1542
    %v1581 = vpack.c.b16 %v1547, %v1545
    %v1582 = vpack.c.b16 %v1548, %v1546
    %v1583 = vpack.c.b16 %v1551, %v1549
    %v1584 = vpack.c.b16 %v1552, %v1550
    %1617 = vmatpush.bf16.msra.mxu0 %v1567
    %1618 = vmatpush.bf16.msra.mxu0 %v1565
    %1619 = vmatpush.bf16.msra.mxu0 %v1563
    %1620 = vmatpush.bf16.msra.mxu0 %v1561
    %1621 = vmatpush.bf16.msra.mxu0 %v1559
    %1622 = vmatpush.bf16.msra.mxu0 %v1557
    %1623 = vmatpush.bf16.msra.mxu0 %v1555
    %1624 = vmatpush.bf16.msra.mxu0 %v1553
    %1625 = vmatmul.bf16.gmra.mxu0 %v1453
    %v1626 = vpop.f32.mrf.mxu0
    %v1627 = vadd.f32 0.0, %v1626
    %v1628 = vpop.f32.mrf.mxu0
    %v1629 = vadd.f32 0.0, %v1628
    %1630 = vdwg.mxu0
    %1631 = vmatpush.bf16.msra.mxu0 %v1583
    %1632 = vmatpush.bf16.msra.mxu0 %v1581
    %1633 = vmatpush.bf16.msra.mxu0 %v1579
    %1634 = vmatpush.bf16.msra.mxu0 %v1577
    %1635 = vmatpush.bf16.msra.mxu0 %v1575
    %1636 = vmatpush.bf16.msra.mxu0 %v1573
    %1637 = vmatpush.bf16.msra.mxu0 %v1571
    %1638 = vmatpush.bf16.msra.mxu0 %v1569
    %1639 = vmatmul.bf16.gmra.mxu0 %v1454
    %v1640 = vpop.f32.mrf.mxu0
    %v1641 = vadd.f32 %v1627, %v1640
    %v1642 = vpop.f32.mrf.mxu0
    %v1643 = vadd.f32 %v1629, %v1642
    %1644 = vdwg.mxu0
    %1645 = vmatpush.bf16.msra.mxu0 %v1568
    %1646 = vmatpush.bf16.msra.mxu0 %v1566
    %1647 = vmatpush.bf16.msra.mxu0 %v1564
    %1648 = vmatpush.bf16.msra.mxu0 %v1562
    %1649 = vmatpush.bf16.msra.mxu0 %v1560
    %1650 = vmatpush.bf16.msra.mxu0 %v1558
    %1651 = vmatpush.bf16.msra.mxu0 %v1556
    %1652 = vmatpush.bf16.msra.mxu0 %v1554
    %1653 = vmatmul.bf16.gmra.mxu0 %v1453
    %v1654 = vpop.f32.mrf.mxu0
    %v1655 = vadd.f32 0.0, %v1654
    %v1656 = vpop.f32.mrf.mxu0
    %v1657 = vadd.f32 0.0, %v1656
    %1658 = vdwg.mxu0
    %1659 = vmatpush.bf16.msra.mxu0 %v1584
    %1660 = vmatpush.bf16.msra.mxu0 %v1582
    %1661 = vmatpush.bf16.msra.mxu0 %v1580
    %1662 = vmatpush.bf16.msra.mxu0 %v1578
    %1663 = vmatpush.bf16.msra.mxu0 %v1576
    %1664 = vmatpush.bf16.msra.mxu0 %v1574
    %1665 = vmatpush.bf16.msra.mxu0 %v1572
    %1666 = vmatpush.bf16.msra.mxu0 %v1570
    %1667 = vmatmul.bf16.gmra.mxu0 %v1454
    %v1668 = vpop.f32.mrf.mxu0
    %v1669 = vadd.f32 %v1655, %v1668
    %v1670 = vpop.f32.mrf.mxu0
    %v1671 = vadd.f32 %v1657, %v1670
    %1672 = vdwg.mxu0
    %v1673 = vadd.f32 %v1380, %v1641
    %v1674 = vadd.f32 %v1408, %v1669
    %v1675 = vadd.f32 %v1382, %v1643
    %v1676 = vadd.f32 %v1410, %v1671
    %v1677 = vld [vmem:[%s7] sm:$0x3]
    %v1679 = vperm.slane %v1677, 0
    %v1680 = vperm.slane %v1677, 1
    %v1683 = vadd.f32 %v1673, %v1679
    %v1684 = vadd.f32 %v1674, %v1680
    %v1685 = vadd.f32 %v1675, %v1679
    %v1686 = vadd.f32 %v1676, %v1680
    %v1687 = vmul.f32 %v1683, %v183
    %v1688 = vmul.f32 %v1684, %v184
    %v1689 = vmul.f32 %v1685, %v185
    %v1690 = vmul.f32 %v1686, %v186
    %vm1691 = vcmask 1045504
    %v1692 = vsel %vm1691, %v1689, 0.0
    %v1693 = vadd.f32 %v1687, %v1692
    %v1694 = vrot.slane %v1693, 4
    %v1695 = vadd.f32 %v1693, %v1694
    %v1696 = vrot.slane %v1695, 2
    %v1697 = vadd.f32 %v1695, %v1696
    %v1698 = vrot.slane %v1697, 1
    %v1699 = vadd.f32 %v1697, %v1698
    %v1700 = vsel %vm1691, %v1690, 0.0
    %v1701 = vadd.f32 %v1688, %v1700
    %v1702 = vrot.slane %v1701, 4
    %v1703 = vadd.f32 %v1701, %v1702
    %v1704 = vrot.slane %v1703, 2
    %v1705 = vadd.f32 %v1703, %v1704
    %v1706 = vrot.slane %v1705, 1
    %v1707 = vadd.f32 %v1705, %v1706
    %v1708 = vld [vmem:[%s9] sm:$0xff]
    %v1709 = vld [vmem:[%s9 + $0x8] sm:$0xff]
    %v1710 = vld [vmem:[%s9 + $0x10] sm:$0xff]
    %v1711 = vld [vmem:[%s9 + $0x18] sm:$0xff]
    %v1712 = vld [vmem:[%s9 + $0x20] sm:$0xff]
    %v1713 = vld [vmem:[%s9 + $0x28] sm:$0xff]
    %v1714 = vld [vmem:[%s9 + $0x30] sm:$0xff]
    %v1715 = vld [vmem:[%s9 + $0x38] sm:$0xff]
    %v1716 = vld [vmem:[%s9 + $0x40] sm:$0xff]
    %v1717 = vld [vmem:[%s9 + $0x48] sm:$0xff]
    %v1718 = vld [vmem:[%s9 + $0x50] sm:$0xff]
    %v1719 = vld [vmem:[%s9 + $0x58] sm:$0xff]
    %v1720 = vld [vmem:[%s9 + $0x60] sm:$0xff]
    %v1721 = vld [vmem:[%s9 + $0x68] sm:$0xff]
    %v1722 = vld [vmem:[%s9 + $0x70] sm:$0xff]
    %v1723 = vld [vmem:[%s9 + $0x78] sm:$0xff]
    %v1724 = vld [vmem:[%s9 + $0x80] sm:$0xff]
    %v1725 = vld [vmem:[%s9 + $0x88] sm:$0xff]
    %v1726 = vld [vmem:[%s9 + $0x90] sm:$0xff]
    %v1727 = vld [vmem:[%s9 + $0x98] sm:$0xff]
    %v1728 = vld [vmem:[%s9 + $0xa0] sm:$0xff]
    %v1729 = vld [vmem:[%s9 + $0xa8] sm:$0xff]
    %v1730 = vld [vmem:[%s9 + $0xb0] sm:$0xff]
    %v1731 = vld [vmem:[%s9 + $0xb8] sm:$0xff]
    %v1732 = vld [vmem:[%s9 + $0xc0] sm:$0xff]
    %v1733 = vld [vmem:[%s9 + $0xc8] sm:$0xff]
    %v1734 = vld [vmem:[%s9 + $0xd0] sm:$0xff]
    %v1735 = vld [vmem:[%s9 + $0xd8] sm:$0xff]
    %v1736 = vld [vmem:[%s9 + $0xe0] sm:$0xff]
    %v1737 = vld [vmem:[%s9 + $0xe8] sm:$0xff]
    %v1738 = vld [vmem:[%s9 + $0xf0] sm:$0xff]
    %v1739 = vld [vmem:[%s9 + $0xf8] sm:$0xff]
    %1740 = vmatpush.msra.mxu0 %v1723
    %1741 = vmatpush.msra.mxu0 %v1722
    %1742 = vmatpush.msra.mxu0 %v1721
    %1743 = vmatpush.msra.mxu0 %v1720
    %1744 = vmatpush.msra.mxu0 %v1719
    %1745 = vmatpush.msra.mxu0 %v1718
    %1746 = vmatpush.msra.mxu0 %v1717
    %1747 = vmatpush.msra.mxu0 %v1716
    %1748 = vmatpush.msra.mxu0 %v1715
    %1749 = vmatpush.msra.mxu0 %v1714
    %1750 = vmatpush.msra.mxu0 %v1713
    %1751 = vmatpush.msra.mxu0 %v1712
    %1752 = vmatpush.msra.mxu0 %v1711
    %1753 = vmatpush.msra.mxu0 %v1710
    %1754 = vmatpush.msra.mxu0 %v1709
    %1755 = vmatpush.msra.mxu0 %v1708
    %1756 = vmatmul.f32.gmra.mxu0 %v1699
    %v1757 = vpop.f32.mrf.mxu0
    %v1758 = vadd.f32 0.0, %v1757
    %1759 = vdwg.mxu0
    %1760 = vmatpush.msra.mxu0 %v1739
    %1761 = vmatpush.msra.mxu0 %v1738
    %1762 = vmatpush.msra.mxu0 %v1737
    %1763 = vmatpush.msra.mxu0 %v1736
    %1764 = vmatpush.msra.mxu0 %v1735
    %1765 = vmatpush.msra.mxu0 %v1734
    %1766 = vmatpush.msra.mxu0 %v1733
    %1767 = vmatpush.msra.mxu0 %v1732
    %1768 = vmatpush.msra.mxu0 %v1731
    %1769 = vmatpush.msra.mxu0 %v1730
    %1770 = vmatpush.msra.mxu0 %v1729
    %1771 = vmatpush.msra.mxu0 %v1728
    %1772 = vmatpush.msra.mxu0 %v1727
    %1773 = vmatpush.msra.mxu0 %v1726
    %1774 = vmatpush.msra.mxu0 %v1725
    %1775 = vmatpush.msra.mxu0 %v1724
    %1776 = vmatmul.f32.gmra.mxu0 %v1707
    %v1777 = vpop.f32.mrf.mxu0
    %v1778 = vadd.f32 %v1758, %v1777
    %1779 = vdwg.mxu0
    %v1780 = vmul.f32 %v1778, 0.004132231
    %v1781 = vld [vmem:[#allocation10] sm:$0xff]
    %v1782 = vld [vmem:[#allocation10 + $0x8] sm:$0xff]
    %v1783 = vld [vmem:[#allocation10 + $0x10] sm:$0xff]
    %v1784 = vld [vmem:[#allocation10 + $0x18] sm:$0xff]
    %v1785 = vld [vmem:[#allocation10 + $0x20] sm:$0xff]
    %v1786 = vld [vmem:[#allocation10 + $0x28] sm:$0xff]
    %v1787 = vld [vmem:[#allocation10 + $0x30] sm:$0xff]
    %v1788 = vld [vmem:[#allocation10 + $0x38] sm:$0xff]
    %v1789 = vld [vmem:[#allocation10 + $0x40] sm:$0xff]
    %v1790 = vld [vmem:[#allocation10 + $0x48] sm:$0xff]
    %v1791 = vld [vmem:[#allocation10 + $0x50] sm:$0xff]
    %v1792 = vld [vmem:[#allocation10 + $0x58] sm:$0xff]
    %v1793 = vld [vmem:[#allocation10 + $0x60] sm:$0xff]
    %v1794 = vld [vmem:[#allocation10 + $0x68] sm:$0xff]
    %v1795 = vld [vmem:[#allocation10 + $0x70] sm:$0xff]
    %v1796 = vld [vmem:[#allocation10 + $0x78] sm:$0xff]
    %v1797 = vld [vmem:[#allocation10 + $0x80] sm:$0xff]
    %v1798 = vld [vmem:[#allocation10 + $0x88] sm:$0xff]
    %v1799 = vld [vmem:[#allocation10 + $0x90] sm:$0xff]
    %v1800 = vld [vmem:[#allocation10 + $0x98] sm:$0xff]
    %v1801 = vld [vmem:[#allocation10 + $0xa0] sm:$0xff]
    %v1802 = vld [vmem:[#allocation10 + $0xa8] sm:$0xff]
    %v1803 = vld [vmem:[#allocation10 + $0xb0] sm:$0xff]
    %v1804 = vld [vmem:[#allocation10 + $0xb8] sm:$0xff]
    %v1805 = vld [vmem:[#allocation10 + $0xc0] sm:$0xff]
    %v1806 = vld [vmem:[#allocation10 + $0xc8] sm:$0xff]
    %v1807 = vld [vmem:[#allocation10 + $0xd0] sm:$0xff]
    %v1808 = vld [vmem:[#allocation10 + $0xd8] sm:$0xff]
    %v1809 = vld [vmem:[#allocation10 + $0xe0] sm:$0xff]
    %v1810 = vld [vmem:[#allocation10 + $0xe8] sm:$0xff]
    %v1811 = vld [vmem:[#allocation10 + $0xf0] sm:$0xff]
    %v1812 = vld [vmem:[#allocation10 + $0xf8] sm:$0xff]
    %1813 = vmatpush.msra.mxu0 %v1811
    %1814 = vmatpush.msra.mxu0 %v1809
    %1815 = vmatpush.msra.mxu0 %v1807
    %1816 = vmatpush.msra.mxu0 %v1805
    %1817 = vmatpush.msra.mxu0 %v1803
    %1818 = vmatpush.msra.mxu0 %v1801
    %1819 = vmatpush.msra.mxu0 %v1799
    %1820 = vmatpush.msra.mxu0 %v1797
    %1821 = vmatpush.msra.mxu0 %v1795
    %1822 = vmatpush.msra.mxu0 %v1793
    %1823 = vmatpush.msra.mxu0 %v1791
    %1824 = vmatpush.msra.mxu0 %v1789
    %1825 = vmatpush.msra.mxu0 %v1787
    %1826 = vmatpush.msra.mxu0 %v1785
    %1827 = vmatpush.msra.mxu0 %v1783
    %1828 = vmatpush.msra.mxu0 %v1781
    %1829 = vmatmul.f32.gmra.mxu0 %v1780
    %v1830 = vpop.f32.mrf.mxu0
    %v1831 = vadd.f32 0.0, %v1830
    %1832 = vdwg.mxu0
    %1833 = vmatpush.msra.mxu0 %v1812
    %1834 = vmatpush.msra.mxu0 %v1810
    %1835 = vmatpush.msra.mxu0 %v1808
    %1836 = vmatpush.msra.mxu0 %v1806
    %1837 = vmatpush.msra.mxu0 %v1804
    %1838 = vmatpush.msra.mxu0 %v1802
    %1839 = vmatpush.msra.mxu0 %v1800
    %1840 = vmatpush.msra.mxu0 %v1798
    %1841 = vmatpush.msra.mxu0 %v1796
    %1842 = vmatpush.msra.mxu0 %v1794
    %1843 = vmatpush.msra.mxu0 %v1792
    %1844 = vmatpush.msra.mxu0 %v1790
    %1845 = vmatpush.msra.mxu0 %v1788
    %1846 = vmatpush.msra.mxu0 %v1786
    %1847 = vmatpush.msra.mxu0 %v1784
    %1848 = vmatpush.msra.mxu0 %v1782
    %1849 = vmatmul.f32.gmra.mxu0 %v1780
    %v1850 = vpop.f32.mrf.mxu0
    %v1851 = vadd.f32 0.0, %v1850
    %1852 = vdwg.mxu0
    %v1853 = vperm.slane %v1831, 0
    %v1854 = vperm.slane %v1851, 0
    %v1855 = vsub.f32 %v1687, %v1853
    %v1856 = vsub.f32 %v1688, %v1854
    %v1857 = vsub.f32 %v1689, %v1853
    %v1858 = vsub.f32 %v1690, %v1854
    %v1859 = vmul.f32 %v1855, %v1855
    %v1860 = vmul.f32 %v1856, %v1856
    %v1861 = vmul.f32 %v1857, %v1857
    %v1862 = vmul.f32 %v1858, %v1858
    %v1863 = vmul.f32 %v1859, %v183
    %v1864 = vmul.f32 %v1860, %v184
    %v1865 = vmul.f32 %v1861, %v185
    %v1866 = vmul.f32 %v1862, %v186
    %v1867 = vsel %vm1691, %v1865, 0.0
    %v1868 = vadd.f32 %v1863, %v1867
    %v1869 = vrot.slane %v1868, 4
    %v1870 = vadd.f32 %v1868, %v1869
    %v1871 = vrot.slane %v1870, 2
    %v1872 = vadd.f32 %v1870, %v1871
    %v1873 = vrot.slane %v1872, 1
    %v1874 = vadd.f32 %v1872, %v1873
    %v1875 = vsel %vm1691, %v1866, 0.0
    %v1876 = vadd.f32 %v1864, %v1875
    %v1877 = vrot.slane %v1876, 4
    %v1878 = vadd.f32 %v1876, %v1877
    %v1879 = vrot.slane %v1878, 2
    %v1880 = vadd.f32 %v1878, %v1879
    %v1881 = vrot.slane %v1880, 1
    %v1882 = vadd.f32 %v1880, %v1881
    %1883 = vmatpush.msra.mxu0 %v1723
    %1884 = vmatpush.msra.mxu0 %v1722
    %1885 = vmatpush.msra.mxu0 %v1721
    %1886 = vmatpush.msra.mxu0 %v1720
    %1887 = vmatpush.msra.mxu0 %v1719
    %1888 = vmatpush.msra.mxu0 %v1718
    %1889 = vmatpush.msra.mxu0 %v1717
    %1890 = vmatpush.msra.mxu0 %v1716
    %1891 = vmatpush.msra.mxu0 %v1715
    %1892 = vmatpush.msra.mxu0 %v1714
    %1893 = vmatpush.msra.mxu0 %v1713
    %1894 = vmatpush.msra.mxu0 %v1712
    %1895 = vmatpush.msra.mxu0 %v1711
    %1896 = vmatpush.msra.mxu0 %v1710
    %1897 = vmatpush.msra.mxu0 %v1709
    %1898 = vmatpush.msra.mxu0 %v1708
    %1899 = vmatmul.f32.gmra.mxu0 %v1874
    %v1900 = vpop.f32.mrf.mxu0
    %v1901 = vadd.f32 0.0, %v1900
    %1902 = vdwg.mxu0
    %1903 = vmatpush.msra.mxu0 %v1739
    %1904 = vmatpush.msra.mxu0 %v1738
    %1905 = vmatpush.msra.mxu0 %v1737
    %1906 = vmatpush.msra.mxu0 %v1736
    %1907 = vmatpush.msra.mxu0 %v1735
    %1908 = vmatpush.msra.mxu0 %v1734
    %1909 = vmatpush.msra.mxu0 %v1733
    %1910 = vmatpush.msra.mxu0 %v1732
    %1911 = vmatpush.msra.mxu0 %v1731
    %1912 = vmatpush.msra.mxu0 %v1730
    %1913 = vmatpush.msra.mxu0 %v1729
    %1914 = vmatpush.msra.mxu0 %v1728
    %1915 = vmatpush.msra.mxu0 %v1727
    %1916 = vmatpush.msra.mxu0 %v1726
    %1917 = vmatpush.msra.mxu0 %v1725
    %1918 = vmatpush.msra.mxu0 %v1724
    %1919 = vmatmul.f32.gmra.mxu0 %v1882
    %v1920 = vpop.f32.mrf.mxu0
    %v1921 = vadd.f32 %v1901, %v1920
    %1922 = vdwg.mxu0
    %v1923 = vmul.f32 %v1921, 0.004132231
    %v1924 = vld [vmem:[%s13] sm:$0x1]
    %v1925 = vadd.f32 %v1923, 1e-05
    %v1926 = vrsqrt.pop %v1925
    %v1927 = vmul.f32 %v1926, %v1925
    %v1928 = vmul.f32 %v1927, %v1926
    %v1929 = vmul.f32 0.5, %v1928
    %v1930 = vsub.f32 1.5, %v1929
    %v1931 = vmul.f32 %v1926, %v1930
    %vm1932 = vweird.f32 %v1925
    %vm1933 = vweird.f32 %v1926
    %vm1934 = vmor %vm1932, %vm1933
    %v1935 = vsel %vm1934, %v1926, %v1931
    %v1936 = vmul.f32 %v1924, %v1935
    %v1937 = vld [vmem:[%s14] sm:$0x1]
    %v1938 = vmul.f32 %v1780, %v1936
    %v1939 = vsub.f32 %v1937, %v1938
    %1940 = vmatpush.msra.mxu0 %v1811
    %1941 = vmatpush.msra.mxu0 %v1809
    %1942 = vmatpush.msra.mxu0 %v1807
    %1943 = vmatpush.msra.mxu0 %v1805
    %1944 = vmatpush.msra.mxu0 %v1803
    %1945 = vmatpush.msra.mxu0 %v1801
    %1946 = vmatpush.msra.mxu0 %v1799
    %1947 = vmatpush.msra.mxu0 %v1797
    %1948 = vmatpush.msra.mxu0 %v1795
    %1949 = vmatpush.msra.mxu0 %v1793
    %1950 = vmatpush.msra.mxu0 %v1791
    %1951 = vmatpush.msra.mxu0 %v1789
    %1952 = vmatpush.msra.mxu0 %v1787
    %1953 = vmatpush.msra.mxu0 %v1785
    %1954 = vmatpush.msra.mxu0 %v1783
    %1955 = vmatpush.msra.mxu0 %v1781
    %1956 = vmatmul.f32.gmra.mxu0 %v1936
    %v1957 = vpop.f32.mrf.mxu0
    %v1958 = vadd.f32 0.0, %v1957
    %1959 = vdwg.mxu0
    %1960 = vmatpush.msra.mxu0 %v1812
    %1961 = vmatpush.msra.mxu0 %v1810
    %1962 = vmatpush.msra.mxu0 %v1808
    %1963 = vmatpush.msra.mxu0 %v1806
    %1964 = vmatpush.msra.mxu0 %v1804
    %1965 = vmatpush.msra.mxu0 %v1802
    %1966 = vmatpush.msra.mxu0 %v1800
    %1967 = vmatpush.msra.mxu0 %v1798
    %1968 = vmatpush.msra.mxu0 %v1796
    %1969 = vmatpush.msra.mxu0 %v1794
    %1970 = vmatpush.msra.mxu0 %v1792
    %1971 = vmatpush.msra.mxu0 %v1790
    %1972 = vmatpush.msra.mxu0 %v1788
    %1973 = vmatpush.msra.mxu0 %v1786
    %1974 = vmatpush.msra.mxu0 %v1784
    %1975 = vmatpush.msra.mxu0 %v1782
    %1976 = vmatmul.f32.gmra.mxu0 %v1936
    %v1977 = vpop.f32.mrf.mxu0
    %v1978 = vadd.f32 0.0, %v1977
    %1979 = vdwg.mxu0
    %1980 = vmatpush.msra.mxu0 %v1811
    %1981 = vmatpush.msra.mxu0 %v1809
    %1982 = vmatpush.msra.mxu0 %v1807
    %1983 = vmatpush.msra.mxu0 %v1805
    %1984 = vmatpush.msra.mxu0 %v1803
    %1985 = vmatpush.msra.mxu0 %v1801
    %1986 = vmatpush.msra.mxu0 %v1799
    %1987 = vmatpush.msra.mxu0 %v1797
    %1988 = vmatpush.msra.mxu0 %v1795
    %1989 = vmatpush.msra.mxu0 %v1793
    %1990 = vmatpush.msra.mxu0 %v1791
    %1991 = vmatpush.msra.mxu0 %v1789
    %1992 = vmatpush.msra.mxu0 %v1787
    %1993 = vmatpush.msra.mxu0 %v1785
    %1994 = vmatpush.msra.mxu0 %v1783
    %1995 = vmatpush.msra.mxu0 %v1781
    %1996 = vmatmul.f32.gmra.mxu0 %v1939
    %v1997 = vpop.f32.mrf.mxu0
    %v1998 = vadd.f32 0.0, %v1997
    %1999 = vdwg.mxu0
    %2000 = vmatpush.msra.mxu0 %v1812
    %2001 = vmatpush.msra.mxu0 %v1810
    %2002 = vmatpush.msra.mxu0 %v1808
    %2003 = vmatpush.msra.mxu0 %v1806
    %2004 = vmatpush.msra.mxu0 %v1804
    %2005 = vmatpush.msra.mxu0 %v1802
    %2006 = vmatpush.msra.mxu0 %v1800
    %2007 = vmatpush.msra.mxu0 %v1798
    %2008 = vmatpush.msra.mxu0 %v1796
    %2009 = vmatpush.msra.mxu0 %v1794
    %2010 = vmatpush.msra.mxu0 %v1792
    %2011 = vmatpush.msra.mxu0 %v1790
    %2012 = vmatpush.msra.mxu0 %v1788
    %2013 = vmatpush.msra.mxu0 %v1786
    %2014 = vmatpush.msra.mxu0 %v1784
    %2015 = vmatpush.msra.mxu0 %v1782
    %2016 = vmatmul.f32.gmra.mxu0 %v1939
    %v2017 = vpop.f32.mrf.mxu0
    %v2018 = vadd.f32 0.0, %v2017
    %2019 = vdwg.mxu0
    %v2020 = vperm.slane %v1958, 0
    %v2021 = vperm.slane %v1978, 0
    %v2022 = vmul.f32 %v1687, %v2020
    %v2023 = vmul.f32 %v1688, %v2021
    %v2024 = vmul.f32 %v1689, %v2020
    %v2025 = vmul.f32 %v1690, %v2021
    %v2026 = vperm.slane %v1998, 0
    %v2027 = vperm.slane %v2018, 0
    %v2028 = vadd.f32 %v2022, %v2026
    %v2029 = vadd.f32 %v2023, %v2027
    %v2030 = vadd.f32 %v2024, %v2026
    %v2031 = vadd.f32 %v2025, %v2027
    %v2032 = vmax.f32 %v2028, 0.0
    %v2033 = vmax.f32 %v2029, 0.0
    %v2034 = vmax.f32 %v2030, 0.0
    %v2035 = vmax.f32 %v2031, 0.0
    %v2036 = vmul.f32 %v2032, %v183
    %v2037 = vmul.f32 %v2033, %v184
    %v2038 = vmul.f32 %v2034, %v185
    %v2039 = vmul.f32 %v2035, %v186
    %2040 = vst.msk [vmem:[#allocation4] ss:$8 sm:$0x3] %vm859, 0.0
    %2041 = vst.msk [vmem:[#allocation4] ss:$8 sm:$0x0] %vm859, 0.0
    %s2042 = scalar_lea.vmem [#allocation4], 7
    %2043 = vst.msk [vmem:[%s2042] ss:$8 sm:$0x3] %vm859, 0.0
    %2044 = vst.msk [vmem:[%s2042] ss:$8 sm:$0x0] %vm859, 0.0
    %v2047 = vrot.slane %v2036, 7
    %v2048 = vrot.slane %v2037, 7
    %2051 = vst [vmem:[#allocation4] sm:$0x7e] %v2047
    %2052 = vst [vmem:[#allocation4 + $0x8] sm:$0x7e] %v2048
    %s2053 = scalar_lea.vmem [#allocation4], 16
    %2054 = vst.msk [vmem:[%s2053] ss:$8 sm:$0x3] %vm859, 0.0
    %2055 = vst.msk [vmem:[%s2053] ss:$8 sm:$0x0] %vm859, 0.0
    %s2056 = scalar_lea.vmem [#allocation4], 23
    %2057 = vst.msk [vmem:[%s2056] ss:$8 sm:$0x3] %vm859, 0.0
    %2058 = vst.msk [vmem:[%s2056] ss:$8 sm:$0x0] %vm859, 0.0
    %v2061 = vrot.slane %v2038, 7
    %v2062 = vrot.slane %v2039, 7
    %2065 = vst [vmem:[#allocation4 + $0x10] sm:$0x7e] %v2061
    %2066 = vst [vmem:[#allocation4 + $0x18] sm:$0x7e] %v2062
    %v2067 = vld [vmem:[#allocation4] sm:$0xff]
    %v2068 = vld [vmem:[#allocation4 + $0x8] sm:$0xff]
    %v2069 = vld [vmem:[#allocation4 + $0x10] sm:$0x3f]
    %v2070 = vld [vmem:[#allocation4 + $0x18] sm:$0x3f]
    %v2071 = vpack.c.bf16 %v2069, %v2067
    %v2072 = vpack.c.bf16 %v2070, %v2068
    %v2073 = vld [vmem:[#allocation9] sm:$0xff]
    %v2074 = vld [vmem:[#allocation9 + $0x8] sm:$0xff]
    %v2075 = vld [vmem:[#allocation9 + $0x10] sm:$0xff]
    %v2076 = vld [vmem:[#allocation9 + $0x18] sm:$0xff]
    %v2077 = vld [vmem:[#allocation9 + $0x20] sm:$0xff]
    %v2078 = vld [vmem:[#allocation9 + $0x28] sm:$0xff]
    %v2079 = vld [vmem:[#allocation9 + $0x30] sm:$0xff]
    %v2080 = vld [vmem:[#allocation9 + $0x38] sm:$0xff]
    %v2081 = vld [vmem:[#allocation9 + $0x40] sm:$0xff]
    %v2082 = vld [vmem:[#allocation9 + $0x48] sm:$0xff]
    %v2083 = vld [vmem:[#allocation9 + $0x50] sm:$0xff]
    %v2084 = vld [vmem:[#allocation9 + $0x58] sm:$0xff]
    %v2085 = vld [vmem:[#allocation9 + $0x60] sm:$0xff]
    %v2086 = vld [vmem:[#allocation9 + $0x68] sm:$0xff]
    %v2087 = vld [vmem:[#allocation9 + $0x70] sm:$0xff]
    %v2088 = vld [vmem:[#allocation9 + $0x78] sm:$0xff]
    %v2089 = vld [vmem:[#allocation9 + $0x80] sm:$0xff]
    %v2090 = vld [vmem:[#allocation9 + $0x88] sm:$0xff]
    %v2091 = vld [vmem:[#allocation9 + $0x90] sm:$0xff]
    %v2092 = vld [vmem:[#allocation9 + $0x98] sm:$0xff]
    %v2093 = vld [vmem:[#allocation9 + $0xa0] sm:$0xff]
    %v2094 = vld [vmem:[#allocation9 + $0xa8] sm:$0xff]
    %v2095 = vld [vmem:[#allocation9 + $0xb0] sm:$0xff]
    %v2096 = vld [vmem:[#allocation9 + $0xb8] sm:$0xff]
    %v2097 = vld [vmem:[#allocation9 + $0xc0] sm:$0xff]
    %v2098 = vld [vmem:[#allocation9 + $0xc8] sm:$0xff]
    %v2099 = vld [vmem:[#allocation9 + $0xd0] sm:$0xff]
    %v2100 = vld [vmem:[#allocation9 + $0xd8] sm:$0xff]
    %v2101 = vld [vmem:[#allocation9 + $0xe0] sm:$0xff]
    %v2102 = vld [vmem:[#allocation9 + $0xe8] sm:$0xff]
    %v2103 = vld [vmem:[#allocation9 + $0xf0] sm:$0xff]
    %v2104 = vld [vmem:[#allocation9 + $0xf8] sm:$0xff]
    %v2105 = vld [vmem:[#allocation4] sm:$0xfe]
    %v2106 = vld [vmem:[#allocation4 + $0x8] sm:$0xfe]
    %v2107 = vld [vmem:[#allocation4 + $0x10] sm:$0x7f]
    %v2108 = vld [vmem:[#allocation4 + $0x18] sm:$0x7f]
    %v2109 = vpack.c.bf16 %v2107, %v2105
    %v2110 = vpack.c.bf16 %v2108, %v2106
    %s2111 = scalar_lea.vmem [#allocation9], 256
    %v2112 = vld [vmem:[%s2111] sm:$0xff]
    %v2113 = vld [vmem:[%s2111 + $0x8] sm:$0xff]
    %v2114 = vld [vmem:[%s2111 + $0x10] sm:$0xff]
    %v2115 = vld [vmem:[%s2111 + $0x18] sm:$0xff]
    %v2116 = vld [vmem:[%s2111 + $0x20] sm:$0xff]
    %v2117 = vld [vmem:[%s2111 + $0x28] sm:$0xff]
    %v2118 = vld [vmem:[%s2111 + $0x30] sm:$0xff]
    %v2119 = vld [vmem:[%s2111 + $0x38] sm:$0xff]
    %v2120 = vld [vmem:[%s2111 + $0x40] sm:$0xff]
    %v2121 = vld [vmem:[%s2111 + $0x48] sm:$0xff]
    %v2122 = vld [vmem:[%s2111 + $0x50] sm:$0xff]
    %v2123 = vld [vmem:[%s2111 + $0x58] sm:$0xff]
    %v2124 = vld [vmem:[%s2111 + $0x60] sm:$0xff]
    %v2125 = vld [vmem:[%s2111 + $0x68] sm:$0xff]
    %v2126 = vld [vmem:[%s2111 + $0x70] sm:$0xff]
    %v2127 = vld [vmem:[%s2111 + $0x78] sm:$0xff]
    %v2128 = vld [vmem:[%s2111 + $0x80] sm:$0xff]
    %v2129 = vld [vmem:[%s2111 + $0x88] sm:$0xff]
    %v2130 = vld [vmem:[%s2111 + $0x90] sm:$0xff]
    %v2131 = vld [vmem:[%s2111 + $0x98] sm:$0xff]
    %v2132 = vld [vmem:[%s2111 + $0xa0] sm:$0xff]
    %v2133 = vld [vmem:[%s2111 + $0xa8] sm:$0xff]
    %v2134 = vld [vmem:[%s2111 + $0xb0] sm:$0xff]
    %v2135 = vld [vmem:[%s2111 + $0xb8] sm:$0xff]
    %v2136 = vld [vmem:[%s2111 + $0xc0] sm:$0xff]
    %v2137 = vld [vmem:[%s2111 + $0xc8] sm:$0xff]
    %v2138 = vld [vmem:[%s2111 + $0xd0] sm:$0xff]
    %v2139 = vld [vmem:[%s2111 + $0xd8] sm:$0xff]
    %v2140 = vld [vmem:[%s2111 + $0xe0] sm:$0xff]
    %v2141 = vld [vmem:[%s2111 + $0xe8] sm:$0xff]
    %v2142 = vld [vmem:[%s2111 + $0xf0] sm:$0xff]
    %v2143 = vld [vmem:[%s2111 + $0xf8] sm:$0xff]
    %v2145 = vshrl.u32 %v2109, 16
    %v2147 = vshll.u32 %v2109, 16
    %v2149 = vrot.slane %v2147, 1
    %v2150 = vor.u32 %v2145, %v2149
    %v2152 = vshrl.u32 %v2110, 16
    %v2154 = vshll.u32 %v2110, 16
    %v2156 = vrot.slane %v2154, 1
    %v2157 = vor.u32 %v2152, %v2156
    %v2192 = vunpack.c.l.b16 %v2112
    %v2193 = vunpack.c.h.b16 %v2112
    %v2194 = vunpack.c.l.b16 %v2113
    %v2195 = vunpack.c.h.b16 %v2113
    %v2196 = vunpack.c.l.b16 %v2114
    %v2197 = vunpack.c.h.b16 %v2114
    %v2198 = vunpack.c.l.b16 %v2115
    %v2199 = vunpack.c.h.b16 %v2115
    %v2200 = vunpack.c.l.b16 %v2116
    %v2201 = vunpack.c.h.b16 %v2116
    %v2202 = vunpack.c.l.b16 %v2117
    %v2203 = vunpack.c.h.b16 %v2117
    %v2204 = vunpack.c.l.b16 %v2118
    %v2205 = vunpack.c.h.b16 %v2118
    %v2206 = vunpack.c.l.b16 %v2119
    %v2207 = vunpack.c.h.b16 %v2119
    %v2208 = vunpack.c.l.b16 %v2120
    %v2209 = vunpack.c.h.b16 %v2120
    %v2210 = vunpack.c.l.b16 %v2121
    %v2211 = vunpack.c.h.b16 %v2121
    %v2212 = vunpack.c.l.b16 %v2122
    %v2213 = vunpack.c.h.b16 %v2122
    %v2214 = vunpack.c.l.b16 %v2123
    %v2215 = vunpack.c.h.b16 %v2123
    %v2216 = vunpack.c.l.b16 %v2124
    %v2217 = vunpack.c.h.b16 %v2124
    %v2218 = vunpack.c.l.b16 %v2125
    %v2219 = vunpack.c.h.b16 %v2125
    %v2220 = vunpack.c.l.b16 %v2126
    %v2221 = vunpack.c.h.b16 %v2126
    %v2222 = vunpack.c.l.b16 %v2127
    %v2223 = vunpack.c.h.b16 %v2127
    %v2224 = vunpack.c.l.b16 %v2128
    %v2225 = vunpack.c.h.b16 %v2128
    %v2226 = vunpack.c.l.b16 %v2129
    %v2227 = vunpack.c.h.b16 %v2129
    %v2228 = vunpack.c.l.b16 %v2130
    %v2229 = vunpack.c.h.b16 %v2130
    %v2230 = vunpack.c.l.b16 %v2131
    %v2231 = vunpack.c.h.b16 %v2131
    %v2232 = vunpack.c.l.b16 %v2132
    %v2233 = vunpack.c.h.b16 %v2132
    %v2234 = vunpack.c.l.b16 %v2133
    %v2235 = vunpack.c.h.b16 %v2133
    %v2236 = vunpack.c.l.b16 %v2134
    %v2237 = vunpack.c.h.b16 %v2134
    %v2238 = vunpack.c.l.b16 %v2135
    %v2239 = vunpack.c.h.b16 %v2135
    %v2240 = vunpack.c.l.b16 %v2136
    %v2241 = vunpack.c.h.b16 %v2136
    %v2242 = vunpack.c.l.b16 %v2137
    %v2243 = vunpack.c.h.b16 %v2137
    %v2244 = vunpack.c.l.b16 %v2138
    %v2245 = vunpack.c.h.b16 %v2138
    %v2246 = vunpack.c.l.b16 %v2139
    %v2247 = vunpack.c.h.b16 %v2139
    %v2248 = vunpack.c.l.b16 %v2140
    %v2249 = vunpack.c.h.b16 %v2140
    %v2250 = vunpack.c.l.b16 %v2141
    %v2251 = vunpack.c.h.b16 %v2141
    %v2252 = vunpack.c.l.b16 %v2142
    %v2253 = vunpack.c.h.b16 %v2142
    %v2254 = vunpack.c.l.b16 %v2143
    %v2255 = vunpack.c.h.b16 %v2143
    %v2256 = vpack.c.b16 %v2194, %v2192
    %v2257 = vpack.c.b16 %v2195, %v2193
    %v2258 = vpack.c.b16 %v2198, %v2196
    %v2259 = vpack.c.b16 %v2199, %v2197
    %v2260 = vpack.c.b16 %v2202, %v2200
    %v2261 = vpack.c.b16 %v2203, %v2201
    %v2262 = vpack.c.b16 %v2206, %v2204
    %v2263 = vpack.c.b16 %v2207, %v2205
    %v2264 = vpack.c.b16 %v2210, %v2208
    %v2265 = vpack.c.b16 %v2211, %v2209
    %v2266 = vpack.c.b16 %v2214, %v2212
    %v2267 = vpack.c.b16 %v2215, %v2213
    %v2268 = vpack.c.b16 %v2218, %v2216
    %v2269 = vpack.c.b16 %v2219, %v2217
    %v2270 = vpack.c.b16 %v2222, %v2220
    %v2271 = vpack.c.b16 %v2223, %v2221
    %v2272 = vpack.c.b16 %v2226, %v2224
    %v2273 = vpack.c.b16 %v2227, %v2225
    %v2274 = vpack.c.b16 %v2230, %v2228
    %v2275 = vpack.c.b16 %v2231, %v2229
    %v2276 = vpack.c.b16 %v2234, %v2232
    %v2277 = vpack.c.b16 %v2235, %v2233
    %v2278 = vpack.c.b16 %v2238, %v2236
    %v2279 = vpack.c.b16 %v2239, %v2237
    %v2280 = vpack.c.b16 %v2242, %v2240
    %v2281 = vpack.c.b16 %v2243, %v2241
    %v2282 = vpack.c.b16 %v2246, %v2244
    %v2283 = vpack.c.b16 %v2247, %v2245
    %v2284 = vpack.c.b16 %v2250, %v2248
    %v2285 = vpack.c.b16 %v2251, %v2249
    %v2286 = vpack.c.b16 %v2254, %v2252
    %v2287 = vpack.c.b16 %v2255, %v2253
    %2320 = vmatpush.bf16.msra.mxu0 %v2270
    %2321 = vmatpush.bf16.msra.mxu0 %v2268
    %2322 = vmatpush.bf16.msra.mxu0 %v2266
    %2323 = vmatpush.bf16.msra.mxu0 %v2264
    %2324 = vmatpush.bf16.msra.mxu0 %v2262
    %2325 = vmatpush.bf16.msra.mxu0 %v2260
    %2326 = vmatpush.bf16.msra.mxu0 %v2258
    %2327 = vmatpush.bf16.msra.mxu0 %v2256
    %2328 = vmatmul.bf16.gmra.mxu0 %v2150
    %v2329 = vpop.f32.mrf.mxu0
    %v2330 = vadd.f32 0.0, %v2329
    %v2331 = vpop.f32.mrf.mxu0
    %v2332 = vadd.f32 0.0, %v2331
    %2333 = vdwg.mxu0
    %2334 = vmatpush.bf16.msra.mxu0 %v2286
    %2335 = vmatpush.bf16.msra.mxu0 %v2284
    %2336 = vmatpush.bf16.msra.mxu0 %v2282
    %2337 = vmatpush.bf16.msra.mxu0 %v2280
    %2338 = vmatpush.bf16.msra.mxu0 %v2278
    %2339 = vmatpush.bf16.msra.mxu0 %v2276
    %2340 = vmatpush.bf16.msra.mxu0 %v2274
    %2341 = vmatpush.bf16.msra.mxu0 %v2272
    %2342 = vmatmul.bf16.gmra.mxu0 %v2157
    %v2343 = vpop.f32.mrf.mxu0
    %v2344 = vadd.f32 %v2330, %v2343
    %v2345 = vpop.f32.mrf.mxu0
    %v2346 = vadd.f32 %v2332, %v2345
    %2347 = vdwg.mxu0
    %2348 = vmatpush.bf16.msra.mxu0 %v2271
    %2349 = vmatpush.bf16.msra.mxu0 %v2269
    %2350 = vmatpush.bf16.msra.mxu0 %v2267
    %2351 = vmatpush.bf16.msra.mxu0 %v2265
    %2352 = vmatpush.bf16.msra.mxu0 %v2263
    %2353 = vmatpush.bf16.msra.mxu0 %v2261
    %2354 = vmatpush.bf16.msra.mxu0 %v2259
    %2355 = vmatpush.bf16.msra.mxu0 %v2257
    %2356 = vmatmul.bf16.gmra.mxu0 %v2150
    %v2357 = vpop.f32.mrf.mxu0
    %v2358 = vadd.f32 0.0, %v2357
    %v2359 = vpop.f32.mrf.mxu0
    %v2360 = vadd.f32 0.0, %v2359
    %2361 = vdwg.mxu0
    %2362 = vmatpush.bf16.msra.mxu0 %v2287
    %2363 = vmatpush.bf16.msra.mxu0 %v2285
    %2364 = vmatpush.bf16.msra.mxu0 %v2283
    %2365 = vmatpush.bf16.msra.mxu0 %v2281
    %2366 = vmatpush.bf16.msra.mxu0 %v2279
    %2367 = vmatpush.bf16.msra.mxu0 %v2277
    %2368 = vmatpush.bf16.msra.mxu0 %v2275
    %2369 = vmatpush.bf16.msra.mxu0 %v2273
    %2370 = vmatmul.bf16.gmra.mxu0 %v2157
    %v2371 = vpop.f32.mrf.mxu0
    %v2372 = vadd.f32 %v2358, %v2371
    %v2373 = vpop.f32.mrf.mxu0
    %v2374 = vadd.f32 %v2360, %v2373
    %2375 = vdwg.mxu0
    %v2408 = vunpack.c.l.b16 %v2073
    %v2409 = vunpack.c.h.b16 %v2073
    %v2410 = vunpack.c.l.b16 %v2074
    %v2411 = vunpack.c.h.b16 %v2074
    %v2412 = vunpack.c.l.b16 %v2075
    %v2413 = vunpack.c.h.b16 %v2075
    %v2414 = vunpack.c.l.b16 %v2076
    %v2415 = vunpack.c.h.b16 %v2076
    %v2416 = vunpack.c.l.b16 %v2077
    %v2417 = vunpack.c.h.b16 %v2077
    %v2418 = vunpack.c.l.b16 %v2078
    %v2419 = vunpack.c.h.b16 %v2078
    %v2420 = vunpack.c.l.b16 %v2079
    %v2421 = vunpack.c.h.b16 %v2079
    %v2422 = vunpack.c.l.b16 %v2080
    %v2423 = vunpack.c.h.b16 %v2080
    %v2424 = vunpack.c.l.b16 %v2081
    %v2425 = vunpack.c.h.b16 %v2081
    %v2426 = vunpack.c.l.b16 %v2082
    %v2427 = vunpack.c.h.b16 %v2082
    %v2428 = vunpack.c.l.b16 %v2083
    %v2429 = vunpack.c.h.b16 %v2083
    %v2430 = vunpack.c.l.b16 %v2084
    %v2431 = vunpack.c.h.b16 %v2084
    %v2432 = vunpack.c.l.b16 %v2085
    %v2433 = vunpack.c.h.b16 %v2085
    %v2434 = vunpack.c.l.b16 %v2086
    %v2435 = vunpack.c.h.b16 %v2086
    %v2436 = vunpack.c.l.b16 %v2087
    %v2437 = vunpack.c.h.b16 %v2087
    %v2438 = vunpack.c.l.b16 %v2088
    %v2439 = vunpack.c.h.b16 %v2088
    %v2440 = vunpack.c.l.b16 %v2089
    %v2441 = vunpack.c.h.b16 %v2089
    %v2442 = vunpack.c.l.b16 %v2090
    %v2443 = vunpack.c.h.b16 %v2090
    %v2444 = vunpack.c.l.b16 %v2091
    %v2445 = vunpack.c.h.b16 %v2091
    %v2446 = vunpack.c.l.b16 %v2092
    %v2447 = vunpack.c.h.b16 %v2092
    %v2448 = vunpack.c.l.b16 %v2093
    %v2449 = vunpack.c.h.b16 %v2093
    %v2450 = vunpack.c.l.b16 %v2094
    %v2451 = vunpack.c.h.b16 %v2094
    %v2452 = vunpack.c.l.b16 %v2095
    %v2453 = vunpack.c.h.b16 %v2095
    %v2454 = vunpack.c.l.b16 %v2096
    %v2455 = vunpack.c.h.b16 %v2096
    %v2456 = vunpack.c.l.b16 %v2097
    %v2457 = vunpack.c.h.b16 %v2097
    %v2458 = vunpack.c.l.b16 %v2098
    %v2459 = vunpack.c.h.b16 %v2098
    %v2460 = vunpack.c.l.b16 %v2099
    %v2461 = vunpack.c.h.b16 %v2099
    %v2462 = vunpack.c.l.b16 %v2100
    %v2463 = vunpack.c.h.b16 %v2100
    %v2464 = vunpack.c.l.b16 %v2101
    %v2465 = vunpack.c.h.b16 %v2101
    %v2466 = vunpack.c.l.b16 %v2102
    %v2467 = vunpack.c.h.b16 %v2102
    %v2468 = vunpack.c.l.b16 %v2103
    %v2469 = vunpack.c.h.b16 %v2103
    %v2470 = vunpack.c.l.b16 %v2104
    %v2471 = vunpack.c.h.b16 %v2104
    %v2472 = vpack.c.b16 %v2410, %v2408
    %v2473 = vpack.c.b16 %v2411, %v2409
    %v2474 = vpack.c.b16 %v2414, %v2412
    %v2475 = vpack.c.b16 %v2415, %v2413
    %v2476 = vpack.c.b16 %v2418, %v2416
    %v2477 = vpack.c.b16 %v2419, %v2417
    %v2478 = vpack.c.b16 %v2422, %v2420
    %v2479 = vpack.c.b16 %v2423, %v2421
    %v2480 = vpack.c.b16 %v2426, %v2424
    %v2481 = vpack.c.b16 %v2427, %v2425
    %v2482 = vpack.c.b16 %v2430, %v2428
    %v2483 = vpack.c.b16 %v2431, %v2429
    %v2484 = vpack.c.b16 %v2434, %v2432
    %v2485 = vpack.c.b16 %v2435, %v2433
    %v2486 = vpack.c.b16 %v2438, %v2436
    %v2487 = vpack.c.b16 %v2439, %v2437
    %v2488 = vpack.c.b16 %v2442, %v2440
    %v2489 = vpack.c.b16 %v2443, %v2441
    %v2490 = vpack.c.b16 %v2446, %v2444
    %v2491 = vpack.c.b16 %v2447, %v2445
    %v2492 = vpack.c.b16 %v2450, %v2448
    %v2493 = vpack.c.b16 %v2451, %v2449
    %v2494 = vpack.c.b16 %v2454, %v2452
    %v2495 = vpack.c.b16 %v2455, %v2453
    %v2496 = vpack.c.b16 %v2458, %v2456
    %v2497 = vpack.c.b16 %v2459, %v2457
    %v2498 = vpack.c.b16 %v2462, %v2460
    %v2499 = vpack.c.b16 %v2463, %v2461
    %v2500 = vpack.c.b16 %v2466, %v2464
    %v2501 = vpack.c.b16 %v2467, %v2465
    %v2502 = vpack.c.b16 %v2470, %v2468
    %v2503 = vpack.c.b16 %v2471, %v2469
    %2536 = vmatpush.bf16.msra.mxu0 %v2486
    %2537 = vmatpush.bf16.msra.mxu0 %v2484
    %2538 = vmatpush.bf16.msra.mxu0 %v2482
    %2539 = vmatpush.bf16.msra.mxu0 %v2480
    %2540 = vmatpush.bf16.msra.mxu0 %v2478
    %2541 = vmatpush.bf16.msra.mxu0 %v2476
    %2542 = vmatpush.bf16.msra.mxu0 %v2474
    %2543 = vmatpush.bf16.msra.mxu0 %v2472
    %2544 = vmatmul.bf16.gmra.mxu0 %v2071
    %v2545 = vpop.f32.mrf.mxu0
    %v2546 = vadd.f32 %v2344, %v2545
    %v2547 = vpop.f32.mrf.mxu0
    %v2548 = vadd.f32 %v2346, %v2547
    %2549 = vdwg.mxu0
    %2550 = vmatpush.bf16.msra.mxu0 %v2502
    %2551 = vmatpush.bf16.msra.mxu0 %v2500
    %2552 = vmatpush.bf16.msra.mxu0 %v2498
    %2553 = vmatpush.bf16.msra.mxu0 %v2496
    %2554 = vmatpush.bf16.msra.mxu0 %v2494
    %2555 = vmatpush.bf16.msra.mxu0 %v2492
    %2556 = vmatpush.bf16.msra.mxu0 %v2490
    %2557 = vmatpush.bf16.msra.mxu0 %v2488
    %2558 = vmatmul.bf16.gmra.mxu0 %v2072
    %v2559 = vpop.f32.mrf.mxu0
    %v2560 = vadd.f32 %v2546, %v2559
    %v2561 = vpop.f32.mrf.mxu0
    %v2562 = vadd.f32 %v2548, %v2561
    %2563 = vdwg.mxu0
    %2564 = vmatpush.bf16.msra.mxu0 %v2487
    %2565 = vmatpush.bf16.msra.mxu0 %v2485
    %2566 = vmatpush.bf16.msra.mxu0 %v2483
    %2567 = vmatpush.bf16.msra.mxu0 %v2481
    %2568 = vmatpush.bf16.msra.mxu0 %v2479
    %2569 = vmatpush.bf16.msra.mxu0 %v2477
    %2570 = vmatpush.bf16.msra.mxu0 %v2475
    %2571 = vmatpush.bf16.msra.mxu0 %v2473
    %2572 = vmatmul.bf16.gmra.mxu0 %v2071
    %v2573 = vpop.f32.mrf.mxu0
    %v2574 = vadd.f32 %v2372, %v2573
    %v2575 = vpop.f32.mrf.mxu0
    %v2576 = vadd.f32 %v2374, %v2575
    %2577 = vdwg.mxu0
    %2578 = vmatpush.bf16.msra.mxu0 %v2503
    %2579 = vmatpush.bf16.msra.mxu0 %v2501
    %2580 = vmatpush.bf16.msra.mxu0 %v2499
    %2581 = vmatpush.bf16.msra.mxu0 %v2497
    %2582 = vmatpush.bf16.msra.mxu0 %v2495
    %2583 = vmatpush.bf16.msra.mxu0 %v2493
    %2584 = vmatpush.bf16.msra.mxu0 %v2491
    %2585 = vmatpush.bf16.msra.mxu0 %v2489
    %2586 = vmatmul.bf16.gmra.mxu0 %v2072
    %v2587 = vpop.f32.mrf.mxu0
    %v2588 = vadd.f32 %v2574, %v2587
    %v2589 = vpop.f32.mrf.mxu0
    %v2590 = vadd.f32 %v2576, %v2589
    %2591 = vdwg.mxu0
    %v2592 = vld [vmem:[#allocation4] sm:$0xfc]
    %v2593 = vld [vmem:[#allocation4 + $0x8] sm:$0xfc]
    %v2594 = vld [vmem:[#allocation4 + $0x10] sm:$0xff]
    %v2595 = vld [vmem:[#allocation4 + $0x18] sm:$0xff]
    %v2596 = vpack.c.bf16 %v2594, %v2592
    %v2597 = vpack.c.bf16 %v2595, %v2593
    %s2598 = scalar_lea.vmem [#allocation9], 512
    %v2599 = vld [vmem:[%s2598] sm:$0xff]
    %v2600 = vld [vmem:[%s2598 + $0x8] sm:$0xff]
    %v2601 = vld [vmem:[%s2598 + $0x10] sm:$0xff]
    %v2602 = vld [vmem:[%s2598 + $0x18] sm:$0xff]
    %v2603 = vld [vmem:[%s2598 + $0x20] sm:$0xff]
    %v2604 = vld [vmem:[%s2598 + $0x28] sm:$0xff]
    %v2605 = vld [vmem:[%s2598 + $0x30] sm:$0xff]
    %v2606 = vld [vmem:[%s2598 + $0x38] sm:$0xff]
    %v2607 = vld [vmem:[%s2598 + $0x40] sm:$0xff]
    %v2608 = vld [vmem:[%s2598 + $0x48] sm:$0xff]
    %v2609 = vld [vmem:[%s2598 + $0x50] sm:$0xff]
    %v2610 = vld [vmem:[%s2598 + $0x58] sm:$0xff]
    %v2611 = vld [vmem:[%s2598 + $0x60] sm:$0xff]
    %v2612 = vld [vmem:[%s2598 + $0x68] sm:$0xff]
    %v2613 = vld [vmem:[%s2598 + $0x70] sm:$0xff]
    %v2614 = vld [vmem:[%s2598 + $0x78] sm:$0xff]
    %v2615 = vld [vmem:[%s2598 + $0x80] sm:$0xff]
    %v2616 = vld [vmem:[%s2598 + $0x88] sm:$0xff]
    %v2617 = vld [vmem:[%s2598 + $0x90] sm:$0xff]
    %v2618 = vld [vmem:[%s2598 + $0x98] sm:$0xff]
    %v2619 = vld [vmem:[%s2598 + $0xa0] sm:$0xff]
    %v2620 = vld [vmem:[%s2598 + $0xa8] sm:$0xff]
    %v2621 = vld [vmem:[%s2598 + $0xb0] sm:$0xff]
    %v2622 = vld [vmem:[%s2598 + $0xb8] sm:$0xff]
    %v2623 = vld [vmem:[%s2598 + $0xc0] sm:$0xff]
    %v2624 = vld [vmem:[%s2598 + $0xc8] sm:$0xff]
    %v2625 = vld [vmem:[%s2598 + $0xd0] sm:$0xff]
    %v2626 = vld [vmem:[%s2598 + $0xd8] sm:$0xff]
    %v2627 = vld [vmem:[%s2598 + $0xe0] sm:$0xff]
    %v2628 = vld [vmem:[%s2598 + $0xe8] sm:$0xff]
    %v2629 = vld [vmem:[%s2598 + $0xf0] sm:$0xff]
    %v2630 = vld [vmem:[%s2598 + $0xf8] sm:$0xff]
    %v2633 = vrot.slane %v2596, 1
    %v2634 = vrot.slane %v2597, 1
    %v2669 = vunpack.c.l.b16 %v2599
    %v2670 = vunpack.c.h.b16 %v2599
    %v2671 = vunpack.c.l.b16 %v2600
    %v2672 = vunpack.c.h.b16 %v2600
    %v2673 = vunpack.c.l.b16 %v2601
    %v2674 = vunpack.c.h.b16 %v2601
    %v2675 = vunpack.c.l.b16 %v2602
    %v2676 = vunpack.c.h.b16 %v2602
    %v2677 = vunpack.c.l.b16 %v2603
    %v2678 = vunpack.c.h.b16 %v2603
    %v2679 = vunpack.c.l.b16 %v2604
    %v2680 = vunpack.c.h.b16 %v2604
    %v2681 = vunpack.c.l.b16 %v2605
    %v2682 = vunpack.c.h.b16 %v2605
    %v2683 = vunpack.c.l.b16 %v2606
    %v2684 = vunpack.c.h.b16 %v2606
    %v2685 = vunpack.c.l.b16 %v2607
    %v2686 = vunpack.c.h.b16 %v2607
    %v2687 = vunpack.c.l.b16 %v2608
    %v2688 = vunpack.c.h.b16 %v2608
    %v2689 = vunpack.c.l.b16 %v2609
    %v2690 = vunpack.c.h.b16 %v2609
    %v2691 = vunpack.c.l.b16 %v2610
    %v2692 = vunpack.c.h.b16 %v2610
    %v2693 = vunpack.c.l.b16 %v2611
    %v2694 = vunpack.c.h.b16 %v2611
    %v2695 = vunpack.c.l.b16 %v2612
    %v2696 = vunpack.c.h.b16 %v2612
    %v2697 = vunpack.c.l.b16 %v2613
    %v2698 = vunpack.c.h.b16 %v2613
    %v2699 = vunpack.c.l.b16 %v2614
    %v2700 = vunpack.c.h.b16 %v2614
    %v2701 = vunpack.c.l.b16 %v2615
    %v2702 = vunpack.c.h.b16 %v2615
    %v2703 = vunpack.c.l.b16 %v2616
    %v2704 = vunpack.c.h.b16 %v2616
    %v2705 = vunpack.c.l.b16 %v2617
    %v2706 = vunpack.c.h.b16 %v2617
    %v2707 = vunpack.c.l.b16 %v2618
    %v2708 = vunpack.c.h.b16 %v2618
    %v2709 = vunpack.c.l.b16 %v2619
    %v2710 = vunpack.c.h.b16 %v2619
    %v2711 = vunpack.c.l.b16 %v2620
    %v2712 = vunpack.c.h.b16 %v2620
    %v2713 = vunpack.c.l.b16 %v2621
    %v2714 = vunpack.c.h.b16 %v2621
    %v2715 = vunpack.c.l.b16 %v2622
    %v2716 = vunpack.c.h.b16 %v2622
    %v2717 = vunpack.c.l.b16 %v2623
    %v2718 = vunpack.c.h.b16 %v2623
    %v2719 = vunpack.c.l.b16 %v2624
    %v2720 = vunpack.c.h.b16 %v2624
    %v2721 = vunpack.c.l.b16 %v2625
    %v2722 = vunpack.c.h.b16 %v2625
    %v2723 = vunpack.c.l.b16 %v2626
    %v2724 = vunpack.c.h.b16 %v2626
    %v2725 = vunpack.c.l.b16 %v2627
    %v2726 = vunpack.c.h.b16 %v2627
    %v2727 = vunpack.c.l.b16 %v2628
    %v2728 = vunpack.c.h.b16 %v2628
    %v2729 = vunpack.c.l.b16 %v2629
    %v2730 = vunpack.c.h.b16 %v2629
    %v2731 = vunpack.c.l.b16 %v2630
    %v2732 = vunpack.c.h.b16 %v2630
    %v2733 = vpack.c.b16 %v2671, %v2669
    %v2734 = vpack.c.b16 %v2672, %v2670
    %v2735 = vpack.c.b16 %v2675, %v2673
    %v2736 = vpack.c.b16 %v2676, %v2674
    %v2737 = vpack.c.b16 %v2679, %v2677
    %v2738 = vpack.c.b16 %v2680, %v2678
    %v2739 = vpack.c.b16 %v2683, %v2681
    %v2740 = vpack.c.b16 %v2684, %v2682
    %v2741 = vpack.c.b16 %v2687, %v2685
    %v2742 = vpack.c.b16 %v2688, %v2686
    %v2743 = vpack.c.b16 %v2691, %v2689
    %v2744 = vpack.c.b16 %v2692, %v2690
    %v2745 = vpack.c.b16 %v2695, %v2693
    %v2746 = vpack.c.b16 %v2696, %v2694
    %v2747 = vpack.c.b16 %v2699, %v2697
    %v2748 = vpack.c.b16 %v2700, %v2698
    %v2749 = vpack.c.b16 %v2703, %v2701
    %v2750 = vpack.c.b16 %v2704, %v2702
    %v2751 = vpack.c.b16 %v2707, %v2705
    %v2752 = vpack.c.b16 %v2708, %v2706
    %v2753 = vpack.c.b16 %v2711, %v2709
    %v2754 = vpack.c.b16 %v2712, %v2710
    %v2755 = vpack.c.b16 %v2715, %v2713
    %v2756 = vpack.c.b16 %v2716, %v2714
    %v2757 = vpack.c.b16 %v2719, %v2717
    %v2758 = vpack.c.b16 %v2720, %v2718
    %v2759 = vpack.c.b16 %v2723, %v2721
    %v2760 = vpack.c.b16 %v2724, %v2722
    %v2761 = vpack.c.b16 %v2727, %v2725
    %v2762 = vpack.c.b16 %v2728, %v2726
    %v2763 = vpack.c.b16 %v2731, %v2729
    %v2764 = vpack.c.b16 %v2732, %v2730
    %2797 = vmatpush.bf16.msra.mxu0 %v2747
    %2798 = vmatpush.bf16.msra.mxu0 %v2745
    %2799 = vmatpush.bf16.msra.mxu0 %v2743
    %2800 = vmatpush.bf16.msra.mxu0 %v2741
    %2801 = vmatpush.bf16.msra.mxu0 %v2739
    %2802 = vmatpush.bf16.msra.mxu0 %v2737
    %2803 = vmatpush.bf16.msra.mxu0 %v2735
    %2804 = vmatpush.bf16.msra.mxu0 %v2733
    %2805 = vmatmul.bf16.gmra.mxu0 %v2633
    %v2806 = vpop.f32.mrf.mxu0
    %v2807 = vadd.f32 0.0, %v2806
    %v2808 = vpop.f32.mrf.mxu0
    %v2809 = vadd.f32 0.0, %v2808
    %2810 = vdwg.mxu0
    %2811 = vmatpush.bf16.msra.mxu0 %v2763
    %2812 = vmatpush.bf16.msra.mxu0 %v2761
    %2813 = vmatpush.bf16.msra.mxu0 %v2759
    %2814 = vmatpush.bf16.msra.mxu0 %v2757
    %2815 = vmatpush.bf16.msra.mxu0 %v2755
    %2816 = vmatpush.bf16.msra.mxu0 %v2753
    %2817 = vmatpush.bf16.msra.mxu0 %v2751
    %2818 = vmatpush.bf16.msra.mxu0 %v2749
    %2819 = vmatmul.bf16.gmra.mxu0 %v2634
    %v2820 = vpop.f32.mrf.mxu0
    %v2821 = vadd.f32 %v2807, %v2820
    %v2822 = vpop.f32.mrf.mxu0
    %v2823 = vadd.f32 %v2809, %v2822
    %2824 = vdwg.mxu0
    %2825 = vmatpush.bf16.msra.mxu0 %v2748
    %2826 = vmatpush.bf16.msra.mxu0 %v2746
    %2827 = vmatpush.bf16.msra.mxu0 %v2744
    %2828 = vmatpush.bf16.msra.mxu0 %v2742
    %2829 = vmatpush.bf16.msra.mxu0 %v2740
    %2830 = vmatpush.bf16.msra.mxu0 %v2738
    %2831 = vmatpush.bf16.msra.mxu0 %v2736
    %2832 = vmatpush.bf16.msra.mxu0 %v2734
    %2833 = vmatmul.bf16.gmra.mxu0 %v2633
    %v2834 = vpop.f32.mrf.mxu0
    %v2835 = vadd.f32 0.0, %v2834
    %v2836 = vpop.f32.mrf.mxu0
    %v2837 = vadd.f32 0.0, %v2836
    %2838 = vdwg.mxu0
    %2839 = vmatpush.bf16.msra.mxu0 %v2764
    %2840 = vmatpush.bf16.msra.mxu0 %v2762
    %2841 = vmatpush.bf16.msra.mxu0 %v2760
    %2842 = vmatpush.bf16.msra.mxu0 %v2758
    %2843 = vmatpush.bf16.msra.mxu0 %v2756
    %2844 = vmatpush.bf16.msra.mxu0 %v2754
    %2845 = vmatpush.bf16.msra.mxu0 %v2752
    %2846 = vmatpush.bf16.msra.mxu0 %v2750
    %2847 = vmatmul.bf16.gmra.mxu0 %v2634
    %v2848 = vpop.f32.mrf.mxu0
    %v2849 = vadd.f32 %v2835, %v2848
    %v2850 = vpop.f32.mrf.mxu0
    %v2851 = vadd.f32 %v2837, %v2850
    %2852 = vdwg.mxu0
    %v2853 = vadd.f32 %v2560, %v2821
    %v2854 = vadd.f32 %v2588, %v2849
    %v2855 = vadd.f32 %v2562, %v2823
    %v2856 = vadd.f32 %v2590, %v2851
    %v2857 = vld [vmem:[%s8] sm:$0x3]
    %v2859 = vperm.slane %v2857, 0
    %v2860 = vperm.slane %v2857, 1
    %v2863 = vadd.f32 %v2853, %v2859
    %v2864 = vadd.f32 %v2854, %v2860
    %v2865 = vadd.f32 %v2855, %v2859
    %v2866 = vadd.f32 %v2856, %v2860
    %v2867 = vmul.f32 %v2863, %v183
    %v2868 = vmul.f32 %v2864, %v184
    %v2869 = vmul.f32 %v2865, %v185
    %v2870 = vmul.f32 %v2866, %v186
    %v2871 = vsel %vm1691, %v2869, 0.0
    %v2872 = vadd.f32 %v2867, %v2871
    %v2873 = vrot.slane %v2872, 4
    %v2874 = vadd.f32 %v2872, %v2873
    %v2875 = vrot.slane %v2874, 2
    %v2876 = vadd.f32 %v2874, %v2875
    %v2877 = vrot.slane %v2876, 1
    %v2878 = vadd.f32 %v2876, %v2877
    %v2879 = vsel %vm1691, %v2870, 0.0
    %v2880 = vadd.f32 %v2868, %v2879
    %v2881 = vrot.slane %v2880, 4
    %v2882 = vadd.f32 %v2880, %v2881
    %v2883 = vrot.slane %v2882, 2
    %v2884 = vadd.f32 %v2882, %v2883
    %v2885 = vrot.slane %v2884, 1
    %v2886 = vadd.f32 %v2884, %v2885
    %v2887 = vld [vmem:[%s9] sm:$0xff]
    %v2888 = vld [vmem:[%s9 + $0x8] sm:$0xff]
    %v2889 = vld [vmem:[%s9 + $0x10] sm:$0xff]
    %v2890 = vld [vmem:[%s9 + $0x18] sm:$0xff]
    %v2891 = vld [vmem:[%s9 + $0x20] sm:$0xff]
    %v2892 = vld [vmem:[%s9 + $0x28] sm:$0xff]
    %v2893 = vld [vmem:[%s9 + $0x30] sm:$0xff]
    %v2894 = vld [vmem:[%s9 + $0x38] sm:$0xff]
    %v2895 = vld [vmem:[%s9 + $0x40] sm:$0xff]
    %v2896 = vld [vmem:[%s9 + $0x48] sm:$0xff]
    %v2897 = vld [vmem:[%s9 + $0x50] sm:$0xff]
    %v2898 = vld [vmem:[%s9 + $0x58] sm:$0xff]
    %v2899 = vld [vmem:[%s9 + $0x60] sm:$0xff]
    %v2900 = vld [vmem:[%s9 + $0x68] sm:$0xff]
    %v2901 = vld [vmem:[%s9 + $0x70] sm:$0xff]
    %v2902 = vld [vmem:[%s9 + $0x78] sm:$0xff]
    %v2903 = vld [vmem:[%s9 + $0x80] sm:$0xff]
    %v2904 = vld [vmem:[%s9 + $0x88] sm:$0xff]
    %v2905 = vld [vmem:[%s9 + $0x90] sm:$0xff]
    %v2906 = vld [vmem:[%s9 + $0x98] sm:$0xff]
    %v2907 = vld [vmem:[%s9 + $0xa0] sm:$0xff]
    %v2908 = vld [vmem:[%s9 + $0xa8] sm:$0xff]
    %v2909 = vld [vmem:[%s9 + $0xb0] sm:$0xff]
    %v2910 = vld [vmem:[%s9 + $0xb8] sm:$0xff]
    %v2911 = vld [vmem:[%s9 + $0xc0] sm:$0xff]
    %v2912 = vld [vmem:[%s9 + $0xc8] sm:$0xff]
    %v2913 = vld [vmem:[%s9 + $0xd0] sm:$0xff]
    %v2914 = vld [vmem:[%s9 + $0xd8] sm:$0xff]
    %v2915 = vld [vmem:[%s9 + $0xe0] sm:$0xff]
    %v2916 = vld [vmem:[%s9 + $0xe8] sm:$0xff]
    %v2917 = vld [vmem:[%s9 + $0xf0] sm:$0xff]
    %v2918 = vld [vmem:[%s9 + $0xf8] sm:$0xff]
    %2919 = vmatpush.msra.mxu0 %v2902
    %2920 = vmatpush.msra.mxu0 %v2901
    %2921 = vmatpush.msra.mxu0 %v2900
    %2922 = vmatpush.msra.mxu0 %v2899
    %2923 = vmatpush.msra.mxu0 %v2898
    %2924 = vmatpush.msra.mxu0 %v2897
    %2925 = vmatpush.msra.mxu0 %v2896
    %2926 = vmatpush.msra.mxu0 %v2895
    %2927 = vmatpush.msra.mxu0 %v2894
    %2928 = vmatpush.msra.mxu0 %v2893
    %2929 = vmatpush.msra.mxu0 %v2892
    %2930 = vmatpush.msra.mxu0 %v2891
    %2931 = vmatpush.msra.mxu0 %v2890
    %2932 = vmatpush.msra.mxu0 %v2889
    %2933 = vmatpush.msra.mxu0 %v2888
    %2934 = vmatpush.msra.mxu0 %v2887
    %2935 = vmatmul.f32.gmra.mxu0 %v2878
    %v2936 = vpop.f32.mrf.mxu0
    %v2937 = vadd.f32 0.0, %v2936
    %2938 = vdwg.mxu0
    %2939 = vmatpush.msra.mxu0 %v2918
    %2940 = vmatpush.msra.mxu0 %v2917
    %2941 = vmatpush.msra.mxu0 %v2916
    %2942 = vmatpush.msra.mxu0 %v2915
    %2943 = vmatpush.msra.mxu0 %v2914
    %2944 = vmatpush.msra.mxu0 %v2913
    %2945 = vmatpush.msra.mxu0 %v2912
    %2946 = vmatpush.msra.mxu0 %v2911
    %2947 = vmatpush.msra.mxu0 %v2910
    %2948 = vmatpush.msra.mxu0 %v2909
    %2949 = vmatpush.msra.mxu0 %v2908
    %2950 = vmatpush.msra.mxu0 %v2907
    %2951 = vmatpush.msra.mxu0 %v2906
    %2952 = vmatpush.msra.mxu0 %v2905
    %2953 = vmatpush.msra.mxu0 %v2904
    %2954 = vmatpush.msra.mxu0 %v2903
    %2955 = vmatmul.f32.gmra.mxu0 %v2886
    %v2956 = vpop.f32.mrf.mxu0
    %v2957 = vadd.f32 %v2937, %v2956
    %2958 = vdwg.mxu0
    %v2959 = vmul.f32 %v2957, 0.004132231
    %v2960 = vld [vmem:[#allocation10] sm:$0xff]
    %v2961 = vld [vmem:[#allocation10 + $0x8] sm:$0xff]
    %v2962 = vld [vmem:[#allocation10 + $0x10] sm:$0xff]
    %v2963 = vld [vmem:[#allocation10 + $0x18] sm:$0xff]
    %v2964 = vld [vmem:[#allocation10 + $0x20] sm:$0xff]
    %v2965 = vld [vmem:[#allocation10 + $0x28] sm:$0xff]
    %v2966 = vld [vmem:[#allocation10 + $0x30] sm:$0xff]
    %v2967 = vld [vmem:[#allocation10 + $0x38] sm:$0xff]
    %v2968 = vld [vmem:[#allocation10 + $0x40] sm:$0xff]
    %v2969 = vld [vmem:[#allocation10 + $0x48] sm:$0xff]
    %v2970 = vld [vmem:[#allocation10 + $0x50] sm:$0xff]
    %v2971 = vld [vmem:[#allocation10 + $0x58] sm:$0xff]
    %v2972 = vld [vmem:[#allocation10 + $0x60] sm:$0xff]
    %v2973 = vld [vmem:[#allocation10 + $0x68] sm:$0xff]
    %v2974 = vld [vmem:[#allocation10 + $0x70] sm:$0xff]
    %v2975 = vld [vmem:[#allocation10 + $0x78] sm:$0xff]
    %v2976 = vld [vmem:[#allocation10 + $0x80] sm:$0xff]
    %v2977 = vld [vmem:[#allocation10 + $0x88] sm:$0xff]
    %v2978 = vld [vmem:[#allocation10 + $0x90] sm:$0xff]
    %v2979 = vld [vmem:[#allocation10 + $0x98] sm:$0xff]
    %v2980 = vld [vmem:[#allocation10 + $0xa0] sm:$0xff]
    %v2981 = vld [vmem:[#allocation10 + $0xa8] sm:$0xff]
    %v2982 = vld [vmem:[#allocation10 + $0xb0] sm:$0xff]
    %v2983 = vld [vmem:[#allocation10 + $0xb8] sm:$0xff]
    %v2984 = vld [vmem:[#allocation10 + $0xc0] sm:$0xff]
    %v2985 = vld [vmem:[#allocation10 + $0xc8] sm:$0xff]
    %v2986 = vld [vmem:[#allocation10 + $0xd0] sm:$0xff]
    %v2987 = vld [vmem:[#allocation10 + $0xd8] sm:$0xff]
    %v2988 = vld [vmem:[#allocation10 + $0xe0] sm:$0xff]
    %v2989 = vld [vmem:[#allocation10 + $0xe8] sm:$0xff]
    %v2990 = vld [vmem:[#allocation10 + $0xf0] sm:$0xff]
    %v2991 = vld [vmem:[#allocation10 + $0xf8] sm:$0xff]
    %2992 = vmatpush.msra.mxu0 %v2990
    %2993 = vmatpush.msra.mxu0 %v2988
    %2994 = vmatpush.msra.mxu0 %v2986
    %2995 = vmatpush.msra.mxu0 %v2984
    %2996 = vmatpush.msra.mxu0 %v2982
    %2997 = vmatpush.msra.mxu0 %v2980
    %2998 = vmatpush.msra.mxu0 %v2978
    %2999 = vmatpush.msra.mxu0 %v2976
    %3000 = vmatpush.msra.mxu0 %v2974
    %3001 = vmatpush.msra.mxu0 %v2972
    %3002 = vmatpush.msra.mxu0 %v2970
    %3003 = vmatpush.msra.mxu0 %v2968
    %3004 = vmatpush.msra.mxu0 %v2966
    %3005 = vmatpush.msra.mxu0 %v2964
    %3006 = vmatpush.msra.mxu0 %v2962
    %3007 = vmatpush.msra.mxu0 %v2960
    %3008 = vmatmul.f32.gmra.mxu0 %v2959
    %v3009 = vpop.f32.mrf.mxu0
    %v3010 = vadd.f32 0.0, %v3009
    %3011 = vdwg.mxu0
    %3012 = vmatpush.msra.mxu0 %v2991
    %3013 = vmatpush.msra.mxu0 %v2989
    %3014 = vmatpush.msra.mxu0 %v2987
    %3015 = vmatpush.msra.mxu0 %v2985
    %3016 = vmatpush.msra.mxu0 %v2983
    %3017 = vmatpush.msra.mxu0 %v2981
    %3018 = vmatpush.msra.mxu0 %v2979
    %3019 = vmatpush.msra.mxu0 %v2977
    %3020 = vmatpush.msra.mxu0 %v2975
    %3021 = vmatpush.msra.mxu0 %v2973
    %3022 = vmatpush.msra.mxu0 %v2971
    %3023 = vmatpush.msra.mxu0 %v2969
    %3024 = vmatpush.msra.mxu0 %v2967
    %3025 = vmatpush.msra.mxu0 %v2965
    %3026 = vmatpush.msra.mxu0 %v2963
    %3027 = vmatpush.msra.mxu0 %v2961
    %3028 = vmatmul.f32.gmra.mxu0 %v2959
    %v3029 = vpop.f32.mrf.mxu0
    %v3030 = vadd.f32 0.0, %v3029
    %3031 = vdwg.mxu0
    %v3032 = vperm.slane %v3010, 0
    %v3033 = vperm.slane %v3030, 0
    %v3034 = vsub.f32 %v2867, %v3032
    %v3035 = vsub.f32 %v2868, %v3033
    %v3036 = vsub.f32 %v2869, %v3032
    %v3037 = vsub.f32 %v2870, %v3033
    %v3038 = vmul.f32 %v3034, %v3034
    %v3039 = vmul.f32 %v3035, %v3035
    %v3040 = vmul.f32 %v3036, %v3036
    %v3041 = vmul.f32 %v3037, %v3037
    %v3042 = vmul.f32 %v3038, %v183
    %v3043 = vmul.f32 %v3039, %v184
    %v3044 = vmul.f32 %v3040, %v185
    %v3045 = vmul.f32 %v3041, %v186
    %v3046 = vsel %vm1691, %v3044, 0.0
    %v3047 = vadd.f32 %v3042, %v3046
    %v3048 = vrot.slane %v3047, 4
    %v3049 = vadd.f32 %v3047, %v3048
    %v3050 = vrot.slane %v3049, 2
    %v3051 = vadd.f32 %v3049, %v3050
    %v3052 = vrot.slane %v3051, 1
    %v3053 = vadd.f32 %v3051, %v3052
    %v3054 = vsel %vm1691, %v3045, 0.0
    %v3055 = vadd.f32 %v3043, %v3054
    %v3056 = vrot.slane %v3055, 4
    %v3057 = vadd.f32 %v3055, %v3056
    %v3058 = vrot.slane %v3057, 2
    %v3059 = vadd.f32 %v3057, %v3058
    %v3060 = vrot.slane %v3059, 1
    %v3061 = vadd.f32 %v3059, %v3060
    %3062 = vmatpush.msra.mxu0 %v2902
    %3063 = vmatpush.msra.mxu0 %v2901
    %3064 = vmatpush.msra.mxu0 %v2900
    %3065 = vmatpush.msra.mxu0 %v2899
    %3066 = vmatpush.msra.mxu0 %v2898
    %3067 = vmatpush.msra.mxu0 %v2897
    %3068 = vmatpush.msra.mxu0 %v2896
    %3069 = vmatpush.msra.mxu0 %v2895
    %3070 = vmatpush.msra.mxu0 %v2894
    %3071 = vmatpush.msra.mxu0 %v2893
    %3072 = vmatpush.msra.mxu0 %v2892
    %3073 = vmatpush.msra.mxu0 %v2891
    %3074 = vmatpush.msra.mxu0 %v2890
    %3075 = vmatpush.msra.mxu0 %v2889
    %3076 = vmatpush.msra.mxu0 %v2888
    %3077 = vmatpush.msra.mxu0 %v2887
    %3078 = vmatmul.f32.gmra.mxu0 %v3053
    %v3079 = vpop.f32.mrf.mxu0
    %v3080 = vadd.f32 0.0, %v3079
    %3081 = vdwg.mxu0
    %3082 = vmatpush.msra.mxu0 %v2918
    %3083 = vmatpush.msra.mxu0 %v2917
    %3084 = vmatpush.msra.mxu0 %v2916
    %3085 = vmatpush.msra.mxu0 %v2915
    %3086 = vmatpush.msra.mxu0 %v2914
    %3087 = vmatpush.msra.mxu0 %v2913
    %3088 = vmatpush.msra.mxu0 %v2912
    %3089 = vmatpush.msra.mxu0 %v2911
    %3090 = vmatpush.msra.mxu0 %v2910
    %3091 = vmatpush.msra.mxu0 %v2909
    %3092 = vmatpush.msra.mxu0 %v2908
    %3093 = vmatpush.msra.mxu0 %v2907
    %3094 = vmatpush.msra.mxu0 %v2906
    %3095 = vmatpush.msra.mxu0 %v2905
    %3096 = vmatpush.msra.mxu0 %v2904
    %3097 = vmatpush.msra.mxu0 %v2903
    %3098 = vmatmul.f32.gmra.mxu0 %v3061
    %v3099 = vpop.f32.mrf.mxu0
    %v3100 = vadd.f32 %v3080, %v3099
    %3101 = vdwg.mxu0
    %v3102 = vmul.f32 %v3100, 0.004132231
    %v3103 = vld [vmem:[%s13] sm:$0x1]
    %v3104 = vadd.f32 %v3102, 1e-05
    %v3105 = vrsqrt.pop %v3104
    %v3106 = vmul.f32 %v3105, %v3104
    %v3107 = vmul.f32 %v3106, %v3105
    %v3108 = vmul.f32 0.5, %v3107
    %v3109 = vsub.f32 1.5, %v3108
    %v3110 = vmul.f32 %v3105, %v3109
    %vm3111 = vweird.f32 %v3104
    %vm3112 = vweird.f32 %v3105
    %vm3113 = vmor %vm3111, %vm3112
    %v3114 = vsel %vm3113, %v3105, %v3110
    %v3115 = vmul.f32 %v3103, %v3114
    %v3116 = vld [vmem:[%s14] sm:$0x1]
    %v3117 = vmul.f32 %v2959, %v3115
    %v3118 = vsub.f32 %v3116, %v3117
    %3119 = vmatpush.msra.mxu0 %v2990
    %3120 = vmatpush.msra.mxu0 %v2988
    %3121 = vmatpush.msra.mxu0 %v2986
    %3122 = vmatpush.msra.mxu0 %v2984
    %3123 = vmatpush.msra.mxu0 %v2982
    %3124 = vmatpush.msra.mxu0 %v2980
    %3125 = vmatpush.msra.mxu0 %v2978
    %3126 = vmatpush.msra.mxu0 %v2976
    %3127 = vmatpush.msra.mxu0 %v2974
    %3128 = vmatpush.msra.mxu0 %v2972
    %3129 = vmatpush.msra.mxu0 %v2970
    %3130 = vmatpush.msra.mxu0 %v2968
    %3131 = vmatpush.msra.mxu0 %v2966
    %3132 = vmatpush.msra.mxu0 %v2964
    %3133 = vmatpush.msra.mxu0 %v2962
    %3134 = vmatpush.msra.mxu0 %v2960
    %3135 = vmatmul.f32.gmra.mxu0 %v3115
    %v3136 = vpop.f32.mrf.mxu0
    %v3137 = vadd.f32 0.0, %v3136
    %3138 = vdwg.mxu0
    %3139 = vmatpush.msra.mxu0 %v2991
    %3140 = vmatpush.msra.mxu0 %v2989
    %3141 = vmatpush.msra.mxu0 %v2987
    %3142 = vmatpush.msra.mxu0 %v2985
    %3143 = vmatpush.msra.mxu0 %v2983
    %3144 = vmatpush.msra.mxu0 %v2981
    %3145 = vmatpush.msra.mxu0 %v2979
    %3146 = vmatpush.msra.mxu0 %v2977
    %3147 = vmatpush.msra.mxu0 %v2975
    %3148 = vmatpush.msra.mxu0 %v2973
    %3149 = vmatpush.msra.mxu0 %v2971
    %3150 = vmatpush.msra.mxu0 %v2969
    %3151 = vmatpush.msra.mxu0 %v2967
    %3152 = vmatpush.msra.mxu0 %v2965
    %3153 = vmatpush.msra.mxu0 %v2963
    %3154 = vmatpush.msra.mxu0 %v2961
    %3155 = vmatmul.f32.gmra.mxu0 %v3115
    %v3156 = vpop.f32.mrf.mxu0
    %v3157 = vadd.f32 0.0, %v3156
    %3158 = vdwg.mxu0
    %3159 = vmatpush.msra.mxu0 %v2990
    %3160 = vmatpush.msra.mxu0 %v2988
    %3161 = vmatpush.msra.mxu0 %v2986
    %3162 = vmatpush.msra.mxu0 %v2984
    %3163 = vmatpush.msra.mxu0 %v2982
    %3164 = vmatpush.msra.mxu0 %v2980
    %3165 = vmatpush.msra.mxu0 %v2978
    %3166 = vmatpush.msra.mxu0 %v2976
    %3167 = vmatpush.msra.mxu0 %v2974
    %3168 = vmatpush.msra.mxu0 %v2972
    %3169 = vmatpush.msra.mxu0 %v2970
    %3170 = vmatpush.msra.mxu0 %v2968
    %3171 = vmatpush.msra.mxu0 %v2966
    %3172 = vmatpush.msra.mxu0 %v2964
    %3173 = vmatpush.msra.mxu0 %v2962
    %3174 = vmatpush.msra.mxu0 %v2960
    %3175 = vmatmul.f32.gmra.mxu0 %v3118
    %v3176 = vpop.f32.mrf.mxu0
    %v3177 = vadd.f32 0.0, %v3176
    %3178 = vdwg.mxu0
    %3179 = vmatpush.msra.mxu0 %v2991
    %3180 = vmatpush.msra.mxu0 %v2989
    %3181 = vmatpush.msra.mxu0 %v2987
    %3182 = vmatpush.msra.mxu0 %v2985
    %3183 = vmatpush.msra.mxu0 %v2983
    %3184 = vmatpush.msra.mxu0 %v2981
    %3185 = vmatpush.msra.mxu0 %v2979
    %3186 = vmatpush.msra.mxu0 %v2977
    %3187 = vmatpush.msra.mxu0 %v2975
    %3188 = vmatpush.msra.mxu0 %v2973
    %3189 = vmatpush.msra.mxu0 %v2971
    %3190 = vmatpush.msra.mxu0 %v2969
    %3191 = vmatpush.msra.mxu0 %v2967
    %3192 = vmatpush.msra.mxu0 %v2965
    %3193 = vmatpush.msra.mxu0 %v2963
    %3194 = vmatpush.msra.mxu0 %v2961
    %3195 = vmatmul.f32.gmra.mxu0 %v3118
    %v3196 = vpop.f32.mrf.mxu0
    %v3197 = vadd.f32 0.0, %v3196
    %3198 = vdwg.mxu0
    %v3199 = vperm.slane %v3137, 0
    %v3200 = vperm.slane %v3157, 0
    %v3201 = vmul.f32 %v2867, %v3199
    %v3202 = vmul.f32 %v2868, %v3200
    %v3203 = vmul.f32 %v2869, %v3199
    %v3204 = vmul.f32 %v2870, %v3200
    %v3205 = vperm.slane %v3177, 0
    %v3206 = vperm.slane %v3197, 0
    %v3207 = vadd.f32 %v3201, %v3205
    %v3208 = vadd.f32 %v3202, %v3206
    %v3209 = vadd.f32 %v3203, %v3205
    %v3210 = vadd.f32 %v3204, %v3206
    %v3211 = vmax.f32 %v3207, 0.0
    %v3212 = vmax.f32 %v3208, 0.0
    %v3213 = vmax.f32 %v3209, 0.0
    %v3214 = vmax.f32 %v3210, 0.0
    %3215 = vst [vmem:[%s15] sm:$0x3f] %v3211
    %3216 = vst [vmem:[%s15 + $0x8] sm:$0x3f] %v3212
    %v3219 = vrot.slane %v3213, 2
    %v3220 = vrot.slane %v3214, 2
    %3223 = vst [vmem:[%s15] sm:$0xc0] %v3219
    %3224 = vst [vmem:[%s15 + $0x8] sm:$0xc0] %v3220
    %3225 = vst [vmem:[%s15 + $0x10] sm:$0xf] %v3219
    %3226 = vst [vmem:[%s15 + $0x18] sm:$0xf] %v3220
    // Predicated region
    $region78: #{_lambda_.1} parent=1 // pred_check
      _
    $region79: #{_lambda_.1} parent=1 // pred_check_branch
      %3228 = sbr.rel (0) target = $region81
    $region80: #{_lambda_.1} parent=1 // pred_region
      _
    $region81: #{_lambda_.1} parent=1 // pred_fallthru
      _
    // Predicated region
    $region82: #{_lambda_.1} parent=1 // pred_check
      _
    $region83: #{_lambda_.1} parent=1 // pred_check_branch
      %3230 = sbr.rel (0) target = $region85
    $region84: #{_lambda_.1} parent=1 // pred_region
      _
    $region85: #{_lambda_.1} parent=1 // pred_fallthru
      _
    %3231 = vsyncpa [#allocation6], 1
    %3232 = vsyncpa [#allocation8], 1
    %3233 = vsyncpa [#allocation11], 1

</llo_original>
